<compile_context>
chip_gen: v5e
topology: v5e:2x2
jax: 0.10.0
libtpu: 0.0.40
codegen_flags: <defaults>
</compile_context>

<pallas_src>
import functools
import math

import jax
import jax.numpy as jnp
from jax.experimental import pallas as pl
from jax.experimental.pallas import tpu as pltpu

_KPAD = 128    # lane-padded im2col feature width
_EPS = 1e-5


# --------------------------------------------------------------------------- #
# Fused forward kernel: Bt batch elements per grid step
# --------------------------------------------------------------------------- #
def _fused_forward_kernel(cols_ref, pe_ref,
                          wc_ref, bc_ref,
                          wqkv_ref, bqkv_ref,
                          wo_ref, bo_ref,
                          ln1g_ref, ln1b_ref,
                          w1_ref, b1_ref,
                          w2_ref, b2_ref,
                          ln2g_ref, ln2b_ref,
                          wl_ref, bl_ref,
                          o_ref, *, heads):
    f32, bf16 = jnp.float32, jnp.bfloat16
    Bt, S, _ = cols_ref.shape
    E = pe_ref.shape[-1]
    dh = E // heads
    R = Bt * S                      # flattened row count for all dense matmuls

    def mm(x, w_ref):
        # bf16 operands, f32 accumulation on the MXU
        return jnp.dot(x.astype(bf16), w_ref[...], preferred_element_type=f32)

    def layernorm(x, g_ref, b_ref):
        mu = jnp.mean(x, axis=-1, keepdims=True)
        var = jnp.mean(jnp.square(x - mu), axis=-1, keepdims=True)
        return (x - mu) * jax.lax.rsqrt(var + _EPS) * g_ref[...] + b_ref[...]

    # ---- CNN: im2col matmul (K padded to 128 lanes, cols already bf16) + bias + ReLU
    feat = jnp.dot(cols_ref[...].reshape(R, -1), wc_ref[...],
                   preferred_element_type=f32) + bc_ref[...]          # (R, E)
    feat = jnp.maximum(feat, 0.0)

    # ---- additive sinusoidal positional encoding (broadcast over the Bt block)
    seq = feat.reshape(Bt, S, E) + pe_ref[...][None]                  # (Bt, S, E)
    seq_flat = seq.reshape(R, E)

    # ---- fused Q|K|V projection; 1/sqrt(dh) is pre-folded into the Q columns
    qkv = (mm(seq_flat, wqkv_ref) + bqkv_ref[...]).reshape(Bt, S, 3 * E)

    # ---- multi-head self-attention; per-head output projection accumulated
    #      (no lane concat of head outputs, no score-matrix scaling)
    attn_flat = jnp.zeros((R, E), f32)
    for h in range(heads):
        q = qkv[:, :, h * dh:(h + 1) * dh].astype(bf16)
        k = qkv[:, :, E + h * dh:E + (h + 1) * dh].astype(bf16)
        v = qkv[:, :, 2 * E + h * dh:2 * E + (h + 1) * dh].astype(bf16)
        s = jnp.einsum('bqd,bkd->bqk', q, k, preferred_element_type=f32)
        s = s - jnp.max(s, axis=-1, keepdims=True)
        p = jnp.exp(s)
        p = p * pl.reciprocal(jnp.sum(p, axis=-1, keepdims=True), approx=True)
        hout = jnp.einsum('bqk,bkd->bqd', p.astype(bf16), v,
                          preferred_element_type=f32)                 # (Bt, S, dh)
        attn_flat = attn_flat + jnp.dot(hout.astype(bf16).reshape(R, dh),
                                        wo_ref[h],
                                        preferred_element_type=f32)
    attn_flat = attn_flat + bo_ref[...]

    # ---- residual + post-LN, feed-forward + residual + post-LN
    x1 = layernorm(attn_flat + seq_flat, ln1g_ref, ln1b_ref)
    ff = jnp.maximum(mm(x1, w1_ref) + b1_ref[...], 0.0)               # (R, 4E)
    ff = mm(ff, w2_ref) + b2_ref[...]                                 # (R, E)
    x2 = layernorm(ff + x1, ln2g_ref, ln2b_ref)

    # ---- final linear + softmax over the sequence axis (dim=1 of (B, S, O))
    logits = (mm(x2, wl_ref) + bl_ref[...]).reshape(Bt, S, -1)
    m = jnp.max(logits, axis=1, keepdims=True)
    e = jnp.exp(logits - m)
    o_ref[...] = e * pl.reciprocal(jnp.sum(e, axis=1, keepdims=True))


# --------------------------------------------------------------------------- #
# One-time host-side weight packing (bf16 casts, concats, padding) - NOT in the
# per-call jitted path.
# --------------------------------------------------------------------------- #
def pack_params(params, *, heads, seq_len):
    E, C = params["conv_w"].shape[0], params["conv_w"].shape[1]
    K9 = C * 9
    assert K9 <= _KPAD
    dh = E // heads
    scale = 1.0 / math.sqrt(dh)

    bf = lambda a: a.astype(jnp.bfloat16)
    row = lambda v: v.reshape(1, -1).astype(jnp.float32)

    wc = params["conv_w"].reshape(E, K9).T                       # (K9, E)
    wc_pad = jnp.zeros((_KPAD, E), jnp.float32).at[:K9].set(wc)  # zero-pad K to 128

    wqkv = jnp.concatenate(
        [params["wq"] * scale, params["wk"], params["wv"]], axis=1)     # (E, 3E)
    bqkv = jnp.concatenate(
        [params["bq"] * scale, params["bk"], params["bv"]]).reshape(1, -1)

    return dict(
        wc=bf(wc_pad), bc=row(params["conv_b"]),
        pe=params["pe"][:seq_len].astype(jnp.float32),
        wqkv=bf(wqkv), bqkv=bqkv.astype(jnp.float32),
        wo=bf(params["wo"].reshape(heads, dh, E)), bo=row(params["bo"]),
        ln1_g=row(params["ln1_g"]), ln1_b=row(params["ln1_b"]),
        w1=bf(params["w1"]), b1=row(params["b1"]),
        w2=bf(params["w2"]), b2=row(params["b2"]),
        ln2_g=row(params["ln2_g"]), ln2_b=row(params["ln2_b"]),
        wl=bf(params["wl"]), bl=row(params["bl"]),
    )


# --------------------------------------------------------------------------- #
# Model forward (single fused pallas_call; Bt batch elements per grid step)
# --------------------------------------------------------------------------- #
def model_forward(packed, x, *, heads, block_batch=4):
    B, C, H, W = x.shape
    S = H * W
    K9 = C * 9
    E = packed["wc"].shape[1]
    hidden = packed["w1"].shape[1]
    O = packed["wl"].shape[1]
    assert packed["pe"].shape[0] == S

    # largest divisor of B not exceeding block_batch (Bt=2 demo; 4 on v6e/v7x for bigger B)
    bt = max(d for d in range(1, min(block_batch, B) + 1) if B % d == 0)

    # im2col for 3x3 / stride 1 / pad 1: feature index ordering c*9 + ky*3 + kx
    # (matches conv_w.reshape(E, C*9)); padded to 128 lanes, shipped bf16.
    patches = jax.lax.conv_general_dilated_patches(
        x, filter_shape=(3, 3), window_strides=(1, 1),
        padding=((1, 1), (1, 1)))                                    # (B, C*9, H, W)
    cols = patches.transpose(0, 2, 3, 1).reshape(B, S, K9)
    cols = jnp.pad(cols, ((0, 0), (0, 0), (0, _KPAD - K9))).astype(jnp.bfloat16)

    rep2 = lambda b: (0, 0)
    rep3 = lambda b: (0, 0, 0)
    kern = functools.partial(_fused_forward_kernel, heads=heads)

    return pl.pallas_call(
        kern,
        out_shape=jax.ShapeDtypeStruct((B, S, O), jnp.float32),
        grid=(B // bt,),
        in_specs=[
            pl.BlockSpec((bt, S, _KPAD), lambda b: (b, 0, 0)),       # im2col patches
            pl.BlockSpec((S, E), rep2),                              # positional encoding
            pl.BlockSpec((_KPAD, E), rep2),                          # conv weight (padded)
            pl.BlockSpec((1, E), rep2),                              # conv bias
            pl.BlockSpec((E, 3 * E), rep2),                          # fused QKV weight (Q pre-scaled)
            pl.BlockSpec((1, 3 * E), rep2),                          # fused QKV bias
            pl.BlockSpec((heads, E // heads, E), rep3),              # attn out-proj, split per head
            pl.BlockSpec((1, E), rep2),                              # attn out-proj bias
            pl.BlockSpec((1, E), rep2),                              # ln1 gamma
            pl.BlockSpec((1, E), rep2),                              # ln1 beta
            pl.BlockSpec((E, hidden), rep2),                         # ffn w1
            pl.BlockSpec((1, hidden), rep2),                         # ffn b1
            pl.BlockSpec((hidden, E), rep2),                         # ffn w2
            pl.BlockSpec((1, E), rep2),                              # ffn b2
            pl.BlockSpec((1, E), rep2),                              # ln2 gamma
            pl.BlockSpec((1, E), rep2),                              # ln2 beta
            pl.BlockSpec((E, O), rep2),                              # final linear w
            pl.BlockSpec((1, O), rep2),                              # final linear b
        ],
        out_specs=pl.BlockSpec((bt, S, O), lambda b: (b, 0, 0)),
        compiler_params=pltpu.CompilerParams(
            dimension_semantics=("parallel",)),
    )(cols, packed["pe"], packed["wc"], packed["bc"],
      packed["wqkv"], packed["bqkv"], packed["wo"], packed["bo"],
      packed["ln1_g"], packed["ln1_b"], packed["w1"], packed["b1"],
      packed["w2"], packed["b2"], packed["ln2_g"], packed["ln2_b"],
      packed["wl"], packed["bl"])


# --------------------------------------------------------------------------- #
# Pure-JAX f32 reference (same math, uses lax.conv directly) for verification
# --------------------------------------------------------------------------- #
def reference_forward(params, x, *, heads):
    feat = jax.lax.conv_general_dilated(
        x, params["conv_w"], window_strides=(1, 1), padding=((1, 1), (1, 1)),
        dimension_numbers=("NCHW", "OIHW", "NCHW"))
    feat = jnp.maximum(feat + params["conv_b"][None, :, None, None], 0.0)
    B, E, H, W = feat.shape
    S = H * W
    seq = feat.reshape(B, E, S).transpose(0, 2, 1) + params["pe"][:S][None]

    dh = E // heads
    split = lambda t: t.reshape(B, S, heads, dh).transpose(0, 2, 1, 3)
    q = split(seq @ params["wq"] + params["bq"])
    k = split(seq @ params["wk"] + params["bk"])
    v = split(seq @ params["wv"] + params["bv"])
    s = jnp.einsum("bhqd,bhkd->bhqk", q, k) / math.sqrt(dh)
    p = jax.nn.softmax(s, axis=-1)
    attn = jnp.einsum("bhqk,bhkd->bhqd", p, v).transpose(0, 2, 1, 3).reshape(B, S, E)
    attn = attn @ params["wo"] + params["bo"]

    def ln(t, g, b):
        mu = jnp.mean(t, -1, keepdims=True)
        var = jnp.mean(jnp.square(t - mu), -1, keepdims=True)
        return (t - mu) * jax.lax.rsqrt(var + _EPS) * g + b

    x1 = ln(attn + seq, params["ln1_g"], params["ln1_b"])
    ff = jnp.maximum(x1 @ params["w1"] + params["b1"], 0.0) @ params["w2"] + params["b2"]
    x2 = ln(ff + x1, params["ln2_g"], params["ln2_b"])
    logits = x2 @ params["wl"] + params["bl"]
    return jax.nn.softmax(logits, axis=1)


# --------------------------------------------------------------------------- #
# Parameters (deterministic, synthetic)
# --------------------------------------------------------------------------- #
def sinusoidal_pe(max_len, embed):
    pos = jnp.arange(max_len, dtype=jnp.float32)[:, None]
    div = jnp.exp(jnp.arange(0, embed, 2, dtype=jnp.float32)
                  * (-math.log(10000.0) / embed))
    pe = jnp.zeros((max_len, embed), dtype=jnp.float32)
    pe = pe.at[:, 0::2].set(jnp.sin(pos * div))
    pe = pe.at[:, 1::2].set(jnp.cos(pos * div))
    return pe


def init_params(key, in_ch, embed, out_size, max_len):
    ks = jax.random.split(key, 8)
    hidden = 4 * embed

    def w(k, shape, scale=0.05):
        return (scale * jax.random.normal(k, shape)).astype(jnp.float32)

    zeros = lambda n: jnp.zeros((n,), jnp.float32)
    return {
        "conv_w": w(ks[0], (embed, in_ch, 3, 3)), "conv_b": zeros(embed),
        "pe": sinusoidal_pe(max_len, embed),
        "wq": w(ks[1], (embed, embed)), "bq": zeros(embed),
        "wk": w(ks[2], (embed, embed)), "bk": zeros(embed),
        "wv": w(ks[3], (embed, embed)), "bv": zeros(embed),
        "wo": w(ks[4], (embed, embed)), "bo": zeros(embed),
        "ln1_g": jnp.ones((embed,), jnp.float32), "ln1_b": zeros(embed),
        "ln2_g": jnp.ones((embed,), jnp.float32), "ln2_b": zeros(embed),
        "w1": w(ks[5], (embed, hidden)), "b1": zeros(hidden),
        "w2": w(ks[6], (hidden, embed)), "b2": zeros(embed),
        "wl": w(ks[7], (embed, out_size)), "bl": zeros(out_size),
    }


# --------------------------------------------------------------------------- #
if __name__ == "__main__":
    B, C, Himg, Wimg = 2, 4, 8, 8
    embed_size, heads, output_size = 32, 4, 4
    S = Himg * Wimg

    key = jax.random.PRNGKey(0)
    pkey, xkey = jax.random.split(key)
    params = init_params(pkey, C, embed_size, output_size, max_len=S)
    x = jax.random.normal(xkey, (B, C, Himg, Wimg), dtype=jnp.float32)

    # one-time weight packing (outside the hot path)
    packed = jax.tree_util.tree_map(jax.block_until_ready,
                                    pack_params(params, heads=heads, seq_len=S))

    fwd = jax.jit(functools.partial(model_forward, heads=heads, block_batch=4))
    out = jax.block_until_ready(fwd(packed, x))

    assert out.shape == (B, S, output_size)
    # softmax over dim=1 -> each (batch, output) column sums to 1 across sequence
    colsum = jnp.sum(out, axis=1)
    assert bool(jnp.all(jnp.abs(colsum - 1.0) < 1e-3))

    # verify against a pure-JAX f32 reference (checks im2col ordering + whole pipeline);
    # tolerance covers bf16 MXU accumulation and the approx attention reciprocal.
    ref = reference_forward(params, x, heads=heads)
    assert bool(jnp.max(jnp.abs(out - ref)) < 5e-3)

    print("KERNEL_OK")
</pallas_src>

<mosaic_0001>
module attributes {stable_mosaic.version = 11 : i64} {
  func.func @_fused_forward_kernel(%arg0: i32, %arg1: memref<2x64x128xbf16, #tpu.memory_space<vmem>>, %arg2: memref<64x32xf32, #tpu.memory_space<vmem>>, %arg3: memref<128x32xbf16, #tpu.memory_space<vmem>>, %arg4: memref<1x32xf32, #tpu.memory_space<vmem>>, %arg5: memref<32x96xbf16, #tpu.memory_space<vmem>>, %arg6: memref<1x96xf32, #tpu.memory_space<vmem>>, %arg7: memref<4x8x32xbf16, #tpu.memory_space<vmem>>, %arg8: memref<1x32xf32, #tpu.memory_space<vmem>>, %arg9: memref<1x32xf32, #tpu.memory_space<vmem>>, %arg10: memref<1x32xf32, #tpu.memory_space<vmem>>, %arg11: memref<32x128xbf16, #tpu.memory_space<vmem>>, %arg12: memref<1x128xf32, #tpu.memory_space<vmem>>, %arg13: memref<128x32xbf16, #tpu.memory_space<vmem>>, %arg14: memref<1x32xf32, #tpu.memory_space<vmem>>, %arg15: memref<1x32xf32, #tpu.memory_space<vmem>>, %arg16: memref<1x32xf32, #tpu.memory_space<vmem>>, %arg17: memref<32x4xbf16, #tpu.memory_space<vmem>>, %arg18: memref<1x4xf32, #tpu.memory_space<vmem>>, %arg19: memref<2x64x4xf32, #tpu.memory_space<vmem>>) attributes {dimension_semantics = [#tpu.dimension_semantics<parallel>], iteration_bounds = array<i64: 1>, scalar_prefetch = 0 : i64, scratch_operands = 0 : i64, tpu.core_type = #tpu.core_type<tc>, window_params = [{transform_indices = @transform_0, window_bounds = array<i64: 2, 64, 128>}, {pipeline_mode = #tpu.pipeline_mode<synchronous>, transform_indices = @transform_1, window_bounds = array<i64: 64, 32>}, {pipeline_mode = #tpu.pipeline_mode<synchronous>, transform_indices = @transform_2, window_bounds = array<i64: 128, 32>}, {pipeline_mode = #tpu.pipeline_mode<synchronous>, transform_indices = @transform_3, window_bounds = array<i64: 1, 32>}, {pipeline_mode = #tpu.pipeline_mode<synchronous>, transform_indices = @transform_4, window_bounds = array<i64: 32, 96>}, {pipeline_mode = #tpu.pipeline_mode<synchronous>, transform_indices = @transform_5, window_bounds = array<i64: 1, 96>}, {pipeline_mode = #tpu.pipeline_mode<synchronous>, transform_indices = @transform_6, window_bounds = array<i64: 4, 8, 32>}, {pipeline_mode = #tpu.pipeline_mode<synchronous>, transform_indices = @transform_7, window_bounds = array<i64: 1, 32>}, {pipeline_mode = #tpu.pipeline_mode<synchronous>, transform_indices = @transform_8, window_bounds = array<i64: 1, 32>}, {pipeline_mode = #tpu.pipeline_mode<synchronous>, transform_indices = @transform_9, window_bounds = array<i64: 1, 32>}, {pipeline_mode = #tpu.pipeline_mode<synchronous>, transform_indices = @transform_10, window_bounds = array<i64: 32, 128>}, {pipeline_mode = #tpu.pipeline_mode<synchronous>, transform_indices = @transform_11, window_bounds = array<i64: 1, 128>}, {pipeline_mode = #tpu.pipeline_mode<synchronous>, transform_indices = @transform_12, window_bounds = array<i64: 128, 32>}, {pipeline_mode = #tpu.pipeline_mode<synchronous>, transform_indices = @transform_13, window_bounds = array<i64: 1, 32>}, {pipeline_mode = #tpu.pipeline_mode<synchronous>, transform_indices = @transform_14, window_bounds = array<i64: 1, 32>}, {pipeline_mode = #tpu.pipeline_mode<synchronous>, transform_indices = @transform_15, window_bounds = array<i64: 1, 32>}, {pipeline_mode = #tpu.pipeline_mode<synchronous>, transform_indices = @transform_16, window_bounds = array<i64: 32, 4>}, {pipeline_mode = #tpu.pipeline_mode<synchronous>, transform_indices = @transform_17, window_bounds = array<i64: 1, 4>}, {transform_indices = @transform_18, window_bounds = array<i64: 2, 64, 4>}]} {
    %c0 = arith.constant 0 : index
    %c0_0 = arith.constant 0 : index
    %c0_1 = arith.constant 0 : index
    %0 = vector.load %arg1[%c0, %c0_0, %c0_1] : memref<2x64x128xbf16, #tpu.memory_space<vmem>>, vector<2x64x128xbf16>
    %1 = vector.shape_cast %0 : vector<2x64x128xbf16> to vector<128x128xbf16>
    %c0_2 = arith.constant 0 : index
    %c0_3 = arith.constant 0 : index
    %2 = vector.load %arg3[%c0_2, %c0_3] : memref<128x32xbf16, #tpu.memory_space<vmem>>, vector<128x32xbf16>
    %cst = arith.constant dense<0.000000e+00> : vector<128x32xf32>
    %3 = tpu.matmul %1, %2, %cst {dimension_numbers = #tpu.dot_dimension_numbers<[1], [0], [0], [1], [0, 0, 1, 1], [], []>} : vector<128x128xbf16>, vector<128x32xbf16>, vector<128x32xf32> -> vector<128x32xf32>
    %c0_4 = arith.constant 0 : index
    %c0_5 = arith.constant 0 : index
    %4 = vector.load %arg4[%c0_4, %c0_5] : memref<1x32xf32, #tpu.memory_space<vmem>>, vector<1x32xf32>
    %5 = vector.broadcast %4 : vector<1x32xf32> to vector<128x32xf32>
    %6 = arith.addf %3, %5 : vector<128x32xf32>
    %cst_6 = arith.constant 0.000000e+00 : f32
    %7 = vector.broadcast %cst_6 : f32 to vector<128x32xf32>
    %8 = arith.maximumf %6, %7 : vector<128x32xf32>
    %9 = vector.shape_cast %8 : vector<128x32xf32> to vector<2x64x32xf32>
    %c0_7 = arith.constant 0 : index
    %c0_8 = arith.constant 0 : index
    %10 = vector.load %arg2[%c0_7, %c0_8] : memref<64x32xf32, #tpu.memory_space<vmem>>, vector<64x32xf32>
    %11 = vector.shape_cast %10 : vector<64x32xf32> to vector<1x64x32xf32>
    %12 = vector.broadcast %11 : vector<1x64x32xf32> to vector<2x64x32xf32>
    %13 = arith.addf %9, %12 : vector<2x64x32xf32>
    %14 = vector.shape_cast %13 : vector<2x64x32xf32> to vector<128x32xf32>
    %15 = arith.truncf %14 : vector<128x32xf32> to vector<128x32xbf16>
    %c0_9 = arith.constant 0 : index
    %c0_10 = arith.constant 0 : index
    %16 = vector.load %arg5[%c0_9, %c0_10] : memref<32x96xbf16, #tpu.memory_space<vmem>>, vector<32x96xbf16>
    %cst_11 = arith.constant dense<0.000000e+00> : vector<128x96xf32>
    %17 = tpu.matmul %15, %16, %cst_11 {dimension_numbers = #tpu.dot_dimension_numbers<[1], [0], [0], [1], [0, 0, 1, 1], [], []>} : vector<128x32xbf16>, vector<32x96xbf16>, vector<128x96xf32> -> vector<128x96xf32>
    %c0_12 = arith.constant 0 : index
    %c0_13 = arith.constant 0 : index
    %18 = vector.load %arg6[%c0_12, %c0_13] : memref<1x96xf32, #tpu.memory_space<vmem>>, vector<1x96xf32>
    %19 = vector.broadcast %18 : vector<1x96xf32> to vector<128x96xf32>
    %20 = arith.addf %17, %19 : vector<128x96xf32>
    %21 = vector.shape_cast %20 : vector<128x96xf32> to vector<2x64x96xf32>
    %cst_14 = arith.constant 0.000000e+00 : f32
    %22 = vector.broadcast %cst_14 : f32 to vector<128x32xf32>
    %23 = vector.extract_strided_slice %21 {offsets = [0, 0, 0], sizes = [2, 64, 8], strides = [1, 1, 1]} : vector<2x64x96xf32> to vector<2x64x8xf32>
    %24 = arith.truncf %23 : vector<2x64x8xf32> to vector<2x64x8xbf16>
    %25 = vector.extract_strided_slice %21 {offsets = [0, 0, 32], sizes = [2, 64, 8], strides = [1, 1, 1]} : vector<2x64x96xf32> to vector<2x64x8xf32>
    %26 = arith.truncf %25 : vector<2x64x8xf32> to vector<2x64x8xbf16>
    %27 = vector.extract_strided_slice %21 {offsets = [0, 0, 64], sizes = [2, 64, 8], strides = [1, 1, 1]} : vector<2x64x96xf32> to vector<2x64x8xf32>
    %28 = arith.truncf %27 : vector<2x64x8xf32> to vector<2x64x8xbf16>
    "tpu.trace_start"() <{level = 10 : i32, message = "bqd,bkd->bqk"}> : () -> ()
    %cst_15 = arith.constant dense<0.000000e+00> : vector<2x64x64xf32>
    %29 = tpu.matmul %24, %26, %cst_15 {dimension_numbers = #tpu.dot_dimension_numbers<[2], [2], [1], [1], [0, 0, 0, 1, 1, 1], [0], [0]>} : vector<2x64x8xbf16>, vector<2x64x8xbf16>, vector<2x64x64xf32> -> vector<2x64x64xf32>
    "tpu.trace_stop"() : () -> ()
    %cst_16 = arith.constant dense<0xFF800000> : vector<2x64xf32>
    %30 = vector.multi_reduction <maximumf>, %29, %cst_16 [2] : vector<2x64x64xf32> to vector<2x64xf32>
    %31 = vector.shape_cast %30 : vector<2x64xf32> to vector<2x64x1xf32>
    %32 = vector.broadcast %31 : vector<2x64x1xf32> to vector<2x64x64xf32>
    %33 = arith.subf %29, %32 : vector<2x64x64xf32>
    %34 = math.exp %33 : vector<2x64x64xf32>
    %cst_17 = arith.constant dense<0.000000e+00> : vector<2x64xf32>
    %35 = vector.multi_reduction <add>, %34, %cst_17 [2] : vector<2x64x64xf32> to vector<2x64xf32>
    %36 = vector.shape_cast %35 : vector<2x64xf32> to vector<2x64x1xf32>
    %37 = tpu.reciprocal %36 {approx = true} : vector<2x64x1xf32> -> vector<2x64x1xf32>
    %38 = vector.broadcast %37 : vector<2x64x1xf32> to vector<2x64x64xf32>
    %39 = arith.mulf %34, %38 : vector<2x64x64xf32>
    %40 = arith.truncf %39 : vector<2x64x64xf32> to vector<2x64x64xbf16>
    "tpu.trace_start"() <{level = 10 : i32, message = "bqk,bkd->bqd"}> : () -> ()
    %cst_18 = arith.constant dense<0.000000e+00> : vector<2x64x8xf32>
    %41 = tpu.matmul %40, %28, %cst_18 {dimension_numbers = #tpu.dot_dimension_numbers<[2], [1], [1], [2], [0, 0, 0, 1, 1, 2], [0], [0]>} : vector<2x64x64xbf16>, vector<2x64x8xbf16>, vector<2x64x8xf32> -> vector<2x64x8xf32>
    "tpu.trace_stop"() : () -> ()
    %42 = arith.truncf %41 : vector<2x64x8xf32> to vector<2x64x8xbf16>
    %43 = vector.shape_cast %42 : vector<2x64x8xbf16> to vector<128x8xbf16>
    %c0_19 = arith.constant 0 : index
    %c0_20 = arith.constant 0 : index
    %c0_21 = arith.constant 0 : index
    %44 = vector.load %arg7[%c0_19, %c0_20, %c0_21] : memref<4x8x32xbf16, #tpu.memory_space<vmem>>, vector<1x8x32xbf16>
    %45 = vector.shape_cast %44 : vector<1x8x32xbf16> to vector<8x32xbf16>
    %cst_22 = arith.constant dense<0.000000e+00> : vector<128x32xf32>
    %46 = tpu.matmul %43, %45, %cst_22 {dimension_numbers = #tpu.dot_dimension_numbers<[1], [0], [0], [1], [0, 0, 1, 1], [], []>} : vector<128x8xbf16>, vector<8x32xbf16>, vector<128x32xf32> -> vector<128x32xf32>
    %47 = arith.addf %22, %46 : vector<128x32xf32>
    %48 = vector.extract_strided_slice %21 {offsets = [0, 0, 8], sizes = [2, 64, 8], strides = [1, 1, 1]} : vector<2x64x96xf32> to vector<2x64x8xf32>
    %49 = arith.truncf %48 : vector<2x64x8xf32> to vector<2x64x8xbf16>
    %50 = vector.extract_strided_slice %21 {offsets = [0, 0, 40], sizes = [2, 64, 8], strides = [1, 1, 1]} : vector<2x64x96xf32> to vector<2x64x8xf32>
    %51 = arith.truncf %50 : vector<2x64x8xf32> to vector<2x64x8xbf16>
    %52 = vector.extract_strided_slice %21 {offsets = [0, 0, 72], sizes = [2, 64, 8], strides = [1, 1, 1]} : vector<2x64x96xf32> to vector<2x64x8xf32>
    %53 = arith.truncf %52 : vector<2x64x8xf32> to vector<2x64x8xbf16>
    "tpu.trace_start"() <{level = 10 : i32, message = "bqd,bkd->bqk"}> : () -> ()
    %cst_23 = arith.constant dense<0.000000e+00> : vector<2x64x64xf32>
    %54 = tpu.matmul %49, %51, %cst_23 {dimension_numbers = #tpu.dot_dimension_numbers<[2], [2], [1], [1], [0, 0, 0, 1, 1, 1], [0], [0]>} : vector<2x64x8xbf16>, vector<2x64x8xbf16>, vector<2x64x64xf32> -> vector<2x64x64xf32>
    "tpu.trace_stop"() : () -> ()
    %cst_24 = arith.constant dense<0xFF800000> : vector<2x64xf32>
    %55 = vector.multi_reduction <maximumf>, %54, %cst_24 [2] : vector<2x64x64xf32> to vector<2x64xf32>
    %56 = vector.shape_cast %55 : vector<2x64xf32> to vector<2x64x1xf32>
    %57 = vector.broadcast %56 : vector<2x64x1xf32> to vector<2x64x64xf32>
    %58 = arith.subf %54, %57 : vector<2x64x64xf32>
    %59 = math.exp %58 : vector<2x64x64xf32>
    %cst_25 = arith.constant dense<0.000000e+00> : vector<2x64xf32>
    %60 = vector.multi_reduction <add>, %59, %cst_25 [2] : vector<2x64x64xf32> to vector<2x64xf32>
    %61 = vector.shape_cast %60 : vector<2x64xf32> to vector<2x64x1xf32>
    %62 = tpu.reciprocal %61 {approx = true} : vector<2x64x1xf32> -> vector<2x64x1xf32>
    %63 = vector.broadcast %62 : vector<2x64x1xf32> to vector<2x64x64xf32>
    %64 = arith.mulf %59, %63 : vector<2x64x64xf32>
    %65 = arith.truncf %64 : vector<2x64x64xf32> to vector<2x64x64xbf16>
    "tpu.trace_start"() <{level = 10 : i32, message = "bqk,bkd->bqd"}> : () -> ()
    %cst_26 = arith.constant dense<0.000000e+00> : vector<2x64x8xf32>
    %66 = tpu.matmul %65, %53, %cst_26 {dimension_numbers = #tpu.dot_dimension_numbers<[2], [1], [1], [2], [0, 0, 0, 1, 1, 2], [0], [0]>} : vector<2x64x64xbf16>, vector<2x64x8xbf16>, vector<2x64x8xf32> -> vector<2x64x8xf32>
    "tpu.trace_stop"() : () -> ()
    %67 = arith.truncf %66 : vector<2x64x8xf32> to vector<2x64x8xbf16>
    %68 = vector.shape_cast %67 : vector<2x64x8xbf16> to vector<128x8xbf16>
    %c1 = arith.constant 1 : index
    %c0_27 = arith.constant 0 : index
    %c0_28 = arith.constant 0 : index
    %69 = vector.load %arg7[%c1, %c0_27, %c0_28] : memref<4x8x32xbf16, #tpu.memory_space<vmem>>, vector<1x8x32xbf16>
    %70 = vector.shape_cast %69 : vector<1x8x32xbf16> to vector<8x32xbf16>
    %cst_29 = arith.constant dense<0.000000e+00> : vector<128x32xf32>
    %71 = tpu.matmul %68, %70, %cst_29 {dimension_numbers = #tpu.dot_dimension_numbers<[1], [0], [0], [1], [0, 0, 1, 1], [], []>} : vector<128x8xbf16>, vector<8x32xbf16>, vector<128x32xf32> -> vector<128x32xf32>
    %72 = arith.addf %47, %71 : vector<128x32xf32>
    %73 = vector.extract_strided_slice %21 {offsets = [0, 0, 16], sizes = [2, 64, 8], strides = [1, 1, 1]} : vector<2x64x96xf32> to vector<2x64x8xf32>
    %74 = arith.truncf %73 : vector<2x64x8xf32> to vector<2x64x8xbf16>
    %75 = vector.extract_strided_slice %21 {offsets = [0, 0, 48], sizes = [2, 64, 8], strides = [1, 1, 1]} : vector<2x64x96xf32> to vector<2x64x8xf32>
    %76 = arith.truncf %75 : vector<2x64x8xf32> to vector<2x64x8xbf16>
    %77 = vector.extract_strided_slice %21 {offsets = [0, 0, 80], sizes = [2, 64, 8], strides = [1, 1, 1]} : vector<2x64x96xf32> to vector<2x64x8xf32>
    %78 = arith.truncf %77 : vector<2x64x8xf32> to vector<2x64x8xbf16>
    "tpu.trace_start"() <{level = 10 : i32, message = "bqd,bkd->bqk"}> : () -> ()
    %cst_30 = arith.constant dense<0.000000e+00> : vector<2x64x64xf32>
    %79 = tpu.matmul %74, %76, %cst_30 {dimension_numbers = #tpu.dot_dimension_numbers<[2], [2], [1], [1], [0, 0, 0, 1, 1, 1], [0], [0]>} : vector<2x64x8xbf16>, vector<2x64x8xbf16>, vector<2x64x64xf32> -> vector<2x64x64xf32>
    "tpu.trace_stop"() : () -> ()
    %cst_31 = arith.constant dense<0xFF800000> : vector<2x64xf32>
    %80 = vector.multi_reduction <maximumf>, %79, %cst_31 [2] : vector<2x64x64xf32> to vector<2x64xf32>
    %81 = vector.shape_cast %80 : vector<2x64xf32> to vector<2x64x1xf32>
    %82 = vector.broadcast %81 : vector<2x64x1xf32> to vector<2x64x64xf32>
    %83 = arith.subf %79, %82 : vector<2x64x64xf32>
    %84 = math.exp %83 : vector<2x64x64xf32>
    %cst_32 = arith.constant dense<0.000000e+00> : vector<2x64xf32>
    %85 = vector.multi_reduction <add>, %84, %cst_32 [2] : vector<2x64x64xf32> to vector<2x64xf32>
    %86 = vector.shape_cast %85 : vector<2x64xf32> to vector<2x64x1xf32>
    %87 = tpu.reciprocal %86 {approx = true} : vector<2x64x1xf32> -> vector<2x64x1xf32>
    %88 = vector.broadcast %87 : vector<2x64x1xf32> to vector<2x64x64xf32>
    %89 = arith.mulf %84, %88 : vector<2x64x64xf32>
    %90 = arith.truncf %89 : vector<2x64x64xf32> to vector<2x64x64xbf16>
    "tpu.trace_start"() <{level = 10 : i32, message = "bqk,bkd->bqd"}> : () -> ()
    %cst_33 = arith.constant dense<0.000000e+00> : vector<2x64x8xf32>
    %91 = tpu.matmul %90, %78, %cst_33 {dimension_numbers = #tpu.dot_dimension_numbers<[2], [1], [1], [2], [0, 0, 0, 1, 1, 2], [0], [0]>} : vector<2x64x64xbf16>, vector<2x64x8xbf16>, vector<2x64x8xf32> -> vector<2x64x8xf32>
    "tpu.trace_stop"() : () -> ()
    %92 = arith.truncf %91 : vector<2x64x8xf32> to vector<2x64x8xbf16>
    %93 = vector.shape_cast %92 : vector<2x64x8xbf16> to vector<128x8xbf16>
    %c2 = arith.constant 2 : index
    %c0_34 = arith.constant 0 : index
    %c0_35 = arith.constant 0 : index
    %94 = vector.load %arg7[%c2, %c0_34, %c0_35] : memref<4x8x32xbf16, #tpu.memory_space<vmem>>, vector<1x8x32xbf16>
    %95 = vector.shape_cast %94 : vector<1x8x32xbf16> to vector<8x32xbf16>
    %cst_36 = arith.constant dense<0.000000e+00> : vector<128x32xf32>
    %96 = tpu.matmul %93, %95, %cst_36 {dimension_numbers = #tpu.dot_dimension_numbers<[1], [0], [0], [1], [0, 0, 1, 1], [], []>} : vector<128x8xbf16>, vector<8x32xbf16>, vector<128x32xf32> -> vector<128x32xf32>
    %97 = arith.addf %72, %96 : vector<128x32xf32>
    %98 = vector.extract_strided_slice %21 {offsets = [0, 0, 24], sizes = [2, 64, 8], strides = [1, 1, 1]} : vector<2x64x96xf32> to vector<2x64x8xf32>
    %99 = arith.truncf %98 : vector<2x64x8xf32> to vector<2x64x8xbf16>
    %100 = vector.extract_strided_slice %21 {offsets = [0, 0, 56], sizes = [2, 64, 8], strides = [1, 1, 1]} : vector<2x64x96xf32> to vector<2x64x8xf32>
    %101 = arith.truncf %100 : vector<2x64x8xf32> to vector<2x64x8xbf16>
    %102 = vector.extract_strided_slice %21 {offsets = [0, 0, 88], sizes = [2, 64, 8], strides = [1, 1, 1]} : vector<2x64x96xf32> to vector<2x64x8xf32>
    %103 = arith.truncf %102 : vector<2x64x8xf32> to vector<2x64x8xbf16>
    "tpu.trace_start"() <{level = 10 : i32, message = "bqd,bkd->bqk"}> : () -> ()
    %cst_37 = arith.constant dense<0.000000e+00> : vector<2x64x64xf32>
    %104 = tpu.matmul %99, %101, %cst_37 {dimension_numbers = #tpu.dot_dimension_numbers<[2], [2], [1], [1], [0, 0, 0, 1, 1, 1], [0], [0]>} : vector<2x64x8xbf16>, vector<2x64x8xbf16>, vector<2x64x64xf32> -> vector<2x64x64xf32>
    "tpu.trace_stop"() : () -> ()
    %cst_38 = arith.constant dense<0xFF800000> : vector<2x64xf32>
    %105 = vector.multi_reduction <maximumf>, %104, %cst_38 [2] : vector<2x64x64xf32> to vector<2x64xf32>
    %106 = vector.shape_cast %105 : vector<2x64xf32> to vector<2x64x1xf32>
    %107 = vector.broadcast %106 : vector<2x64x1xf32> to vector<2x64x64xf32>
    %108 = arith.subf %104, %107 : vector<2x64x64xf32>
    %109 = math.exp %108 : vector<2x64x64xf32>
    %cst_39 = arith.constant dense<0.000000e+00> : vector<2x64xf32>
    %110 = vector.multi_reduction <add>, %109, %cst_39 [2] : vector<2x64x64xf32> to vector<2x64xf32>
    %111 = vector.shape_cast %110 : vector<2x64xf32> to vector<2x64x1xf32>
    %112 = tpu.reciprocal %111 {approx = true} : vector<2x64x1xf32> -> vector<2x64x1xf32>
    %113 = vector.broadcast %112 : vector<2x64x1xf32> to vector<2x64x64xf32>
    %114 = arith.mulf %109, %113 : vector<2x64x64xf32>
    %115 = arith.truncf %114 : vector<2x64x64xf32> to vector<2x64x64xbf16>
    "tpu.trace_start"() <{level = 10 : i32, message = "bqk,bkd->bqd"}> : () -> ()
    %cst_40 = arith.constant dense<0.000000e+00> : vector<2x64x8xf32>
    %116 = tpu.matmul %115, %103, %cst_40 {dimension_numbers = #tpu.dot_dimension_numbers<[2], [1], [1], [2], [0, 0, 0, 1, 1, 2], [0], [0]>} : vector<2x64x64xbf16>, vector<2x64x8xbf16>, vector<2x64x8xf32> -> vector<2x64x8xf32>
    "tpu.trace_stop"() : () -> ()
    %117 = arith.truncf %116 : vector<2x64x8xf32> to vector<2x64x8xbf16>
    %118 = vector.shape_cast %117 : vector<2x64x8xbf16> to vector<128x8xbf16>
    %c3 = arith.constant 3 : index
    %c0_41 = arith.constant 0 : index
    %c0_42 = arith.constant 0 : index
    %119 = vector.load %arg7[%c3, %c0_41, %c0_42] : memref<4x8x32xbf16, #tpu.memory_space<vmem>>, vector<1x8x32xbf16>
    %120 = vector.shape_cast %119 : vector<1x8x32xbf16> to vector<8x32xbf16>
    %cst_43 = arith.constant dense<0.000000e+00> : vector<128x32xf32>
    %121 = tpu.matmul %118, %120, %cst_43 {dimension_numbers = #tpu.dot_dimension_numbers<[1], [0], [0], [1], [0, 0, 1, 1], [], []>} : vector<128x8xbf16>, vector<8x32xbf16>, vector<128x32xf32> -> vector<128x32xf32>
    %122 = arith.addf %97, %121 : vector<128x32xf32>
    %c0_44 = arith.constant 0 : index
    %c0_45 = arith.constant 0 : index
    %123 = vector.load %arg8[%c0_44, %c0_45] : memref<1x32xf32, #tpu.memory_space<vmem>>, vector<1x32xf32>
    %124 = vector.broadcast %123 : vector<1x32xf32> to vector<128x32xf32>
    %125 = arith.addf %122, %124 : vector<128x32xf32>
    %126 = arith.addf %125, %14 : vector<128x32xf32>
    %cst_46 = arith.constant dense<0.000000e+00> : vector<128xf32>
    %127 = vector.multi_reduction <add>, %126, %cst_46 [1] : vector<128x32xf32> to vector<128xf32>
    %128 = vector.shape_cast %127 : vector<128xf32> to vector<128x1xf32>
    %cst_47 = arith.constant 3.200000e+01 : f32
    %129 = vector.broadcast %cst_47 : f32 to vector<128x1xf32>
    %130 = arith.divf %128, %129 : vector<128x1xf32>
    %131 = vector.broadcast %130 : vector<128x1xf32> to vector<128x32xf32>
    %132 = arith.subf %126, %131 : vector<128x32xf32>
    %133 = arith.mulf %132, %132 : vector<128x32xf32>
    %cst_48 = arith.constant dense<0.000000e+00> : vector<128xf32>
    %134 = vector.multi_reduction <add>, %133, %cst_48 [1] : vector<128x32xf32> to vector<128xf32>
    %135 = vector.shape_cast %134 : vector<128xf32> to vector<128x1xf32>
    %cst_49 = arith.constant 3.200000e+01 : f32
    %136 = vector.broadcast %cst_49 : f32 to vector<128x1xf32>
    %137 = arith.divf %135, %136 : vector<128x1xf32>
    %138 = vector.broadcast %130 : vector<128x1xf32> to vector<128x32xf32>
    %139 = arith.subf %126, %138 : vector<128x32xf32>
    %cst_50 = arith.constant 9.99999974E-6 : f32
    %140 = vector.broadcast %cst_50 : f32 to vector<128x1xf32>
    %141 = arith.addf %137, %140 : vector<128x1xf32>
    %142 = math.rsqrt %141 : vector<128x1xf32>
    %143 = vector.broadcast %142 : vector<128x1xf32> to vector<128x32xf32>
    %144 = arith.mulf %139, %143 : vector<128x32xf32>
    %c0_51 = arith.constant 0 : index
    %c0_52 = arith.constant 0 : index
    %145 = vector.load %arg9[%c0_51, %c0_52] : memref<1x32xf32, #tpu.memory_space<vmem>>, vector<1x32xf32>
    %146 = vector.broadcast %145 : vector<1x32xf32> to vector<128x32xf32>
    %147 = arith.mulf %144, %146 : vector<128x32xf32>
    %c0_53 = arith.constant 0 : index
    %c0_54 = arith.constant 0 : index
    %148 = vector.load %arg10[%c0_53, %c0_54] : memref<1x32xf32, #tpu.memory_space<vmem>>, vector<1x32xf32>
    %149 = vector.broadcast %148 : vector<1x32xf32> to vector<128x32xf32>
    %150 = arith.addf %147, %149 : vector<128x32xf32>
    %151 = arith.truncf %150 : vector<128x32xf32> to vector<128x32xbf16>
    %c0_55 = arith.constant 0 : index
    %c0_56 = arith.constant 0 : index
    %152 = vector.load %arg11[%c0_55, %c0_56] : memref<32x128xbf16, #tpu.memory_space<vmem>>, vector<32x128xbf16>
    %cst_57 = arith.constant dense<0.000000e+00> : vector<128x128xf32>
    %153 = tpu.matmul %151, %152, %cst_57 {dimension_numbers = #tpu.dot_dimension_numbers<[1], [0], [0], [1], [0, 0, 1, 1], [], []>} : vector<128x32xbf16>, vector<32x128xbf16>, vector<128x128xf32> -> vector<128x128xf32>
    %c0_58 = arith.constant 0 : index
    %c0_59 = arith.constant 0 : index
    %154 = vector.load %arg12[%c0_58, %c0_59] : memref<1x128xf32, #tpu.memory_space<vmem>>, vector<1x128xf32>
    %155 = vector.broadcast %154 : vector<1x128xf32> to vector<128x128xf32>
    %156 = arith.addf %153, %155 : vector<128x128xf32>
    %cst_60 = arith.constant 0.000000e+00 : f32
    %157 = vector.broadcast %cst_60 : f32 to vector<128x128xf32>
    %158 = arith.maximumf %156, %157 : vector<128x128xf32>
    %159 = arith.truncf %158 : vector<128x128xf32> to vector<128x128xbf16>
    %c0_61 = arith.constant 0 : index
    %c0_62 = arith.constant 0 : index
    %160 = vector.load %arg13[%c0_61, %c0_62] : memref<128x32xbf16, #tpu.memory_space<vmem>>, vector<128x32xbf16>
    %cst_63 = arith.constant dense<0.000000e+00> : vector<128x32xf32>
    %161 = tpu.matmul %159, %160, %cst_63 {dimension_numbers = #tpu.dot_dimension_numbers<[1], [0], [0], [1], [0, 0, 1, 1], [], []>} : vector<128x128xbf16>, vector<128x32xbf16>, vector<128x32xf32> -> vector<128x32xf32>
    %c0_64 = arith.constant 0 : index
    %c0_65 = arith.constant 0 : index
    %162 = vector.load %arg14[%c0_64, %c0_65] : memref<1x32xf32, #tpu.memory_space<vmem>>, vector<1x32xf32>
    %163 = vector.broadcast %162 : vector<1x32xf32> to vector<128x32xf32>
    %164 = arith.addf %161, %163 : vector<128x32xf32>
    %165 = arith.addf %164, %150 : vector<128x32xf32>
    %cst_66 = arith.constant dense<0.000000e+00> : vector<128xf32>
    %166 = vector.multi_reduction <add>, %165, %cst_66 [1] : vector<128x32xf32> to vector<128xf32>
    %167 = vector.shape_cast %166 : vector<128xf32> to vector<128x1xf32>
    %cst_67 = arith.constant 3.200000e+01 : f32
    %168 = vector.broadcast %cst_67 : f32 to vector<128x1xf32>
    %169 = arith.divf %167, %168 : vector<128x1xf32>
    %170 = vector.broadcast %169 : vector<128x1xf32> to vector<128x32xf32>
    %171 = arith.subf %165, %170 : vector<128x32xf32>
    %172 = arith.mulf %171, %171 : vector<128x32xf32>
    %cst_68 = arith.constant dense<0.000000e+00> : vector<128xf32>
    %173 = vector.multi_reduction <add>, %172, %cst_68 [1] : vector<128x32xf32> to vector<128xf32>
    %174 = vector.shape_cast %173 : vector<128xf32> to vector<128x1xf32>
    %cst_69 = arith.constant 3.200000e+01 : f32
    %175 = vector.broadcast %cst_69 : f32 to vector<128x1xf32>
    %176 = arith.divf %174, %175 : vector<128x1xf32>
    %177 = vector.broadcast %169 : vector<128x1xf32> to vector<128x32xf32>
    %178 = arith.subf %165, %177 : vector<128x32xf32>
    %cst_70 = arith.constant 9.99999974E-6 : f32
    %179 = vector.broadcast %cst_70 : f32 to vector<128x1xf32>
    %180 = arith.addf %176, %179 : vector<128x1xf32>
    %181 = math.rsqrt %180 : vector<128x1xf32>
    %182 = vector.broadcast %181 : vector<128x1xf32> to vector<128x32xf32>
    %183 = arith.mulf %178, %182 : vector<128x32xf32>
    %c0_71 = arith.constant 0 : index
    %c0_72 = arith.constant 0 : index
    %184 = vector.load %arg15[%c0_71, %c0_72] : memref<1x32xf32, #tpu.memory_space<vmem>>, vector<1x32xf32>
    %185 = vector.broadcast %184 : vector<1x32xf32> to vector<128x32xf32>
    %186 = arith.mulf %183, %185 : vector<128x32xf32>
    %c0_73 = arith.constant 0 : index
    %c0_74 = arith.constant 0 : index
    %187 = vector.load %arg16[%c0_73, %c0_74] : memref<1x32xf32, #tpu.memory_space<vmem>>, vector<1x32xf32>
    %188 = vector.broadcast %187 : vector<1x32xf32> to vector<128x32xf32>
    %189 = arith.addf %186, %188 : vector<128x32xf32>
    %190 = arith.truncf %189 : vector<128x32xf32> to vector<128x32xbf16>
    %c0_75 = arith.constant 0 : index
    %c0_76 = arith.constant 0 : index
    %191 = vector.load %arg17[%c0_75, %c0_76] : memref<32x4xbf16, #tpu.memory_space<vmem>>, vector<32x4xbf16>
    %cst_77 = arith.constant dense<0.000000e+00> : vector<128x4xf32>
    %192 = tpu.matmul %190, %191, %cst_77 {dimension_numbers = #tpu.dot_dimension_numbers<[1], [0], [0], [1], [0, 0, 1, 1], [], []>} : vector<128x32xbf16>, vector<32x4xbf16>, vector<128x4xf32> -> vector<128x4xf32>
    %c0_78 = arith.constant 0 : index
    %c0_79 = arith.constant 0 : index
    %193 = vector.load %arg18[%c0_78, %c0_79] : memref<1x4xf32, #tpu.memory_space<vmem>>, vector<1x4xf32>
    %194 = vector.broadcast %193 : vector<1x4xf32> to vector<128x4xf32>
    %195 = arith.addf %192, %194 : vector<128x4xf32>
    %196 = vector.shape_cast %195 : vector<128x4xf32> to vector<2x64x4xf32>
    %cst_80 = arith.constant dense<0xFF800000> : vector<2x4xf32>
    %197 = vector.multi_reduction <maximumf>, %196, %cst_80 [1] : vector<2x64x4xf32> to vector<2x4xf32>
    %198 = vector.shape_cast %197 : vector<2x4xf32> to vector<2x1x4xf32>
    %199 = vector.broadcast %198 : vector<2x1x4xf32> to vector<2x64x4xf32>
    %200 = arith.subf %196, %199 : vector<2x64x4xf32>
    %201 = math.exp %200 : vector<2x64x4xf32>
    %cst_81 = arith.constant dense<0.000000e+00> : vector<2x4xf32>
    %202 = vector.multi_reduction <add>, %201, %cst_81 [1] : vector<2x64x4xf32> to vector<2x4xf32>
    %203 = vector.shape_cast %202 : vector<2x4xf32> to vector<2x1x4xf32>
    %204 = tpu.reciprocal %203 : vector<2x1x4xf32> -> vector<2x1x4xf32>
    %205 = vector.broadcast %204 : vector<2x1x4xf32> to vector<2x64x4xf32>
    %206 = arith.mulf %201, %205 : vector<2x64x4xf32>
    %c0_82 = arith.constant 0 : index
    %c0_83 = arith.constant 0 : index
    %c0_84 = arith.constant 0 : index
    %207 = vector.load %arg19[%c0_82, %c0_83, %c0_84] : memref<2x64x4xf32, #tpu.memory_space<vmem>>, vector<2x64x4xf32>
    tpu.vector_store %arg19[%c0_82, %c0_83, %c0_84], %206 {strides = array<i32>} : memref<2x64x4xf32, #tpu.memory_space<vmem>>, vector<2x64x4xf32>,
    return
  }
  func.func @transform_0(%arg0: i32) -> (i32, i32, i32) {
    %c0_i32 = arith.constant 0 : i32
    %c0_i32_0 = arith.constant 0 : i32
    %c0_i32_1 = arith.constant 0 : i32
    return %arg0, %c0_i32, %c0_i32_0 : i32, i32, i32
  }
  func.func @transform_1(%arg0: i32) -> (i32, i32) {
    %c0_i32 = arith.constant 0 : i32
    %c0_i32_0 = arith.constant 0 : i32
    %c0_i32_1 = arith.constant 0 : i32
    return %c0_i32, %c0_i32_0 : i32, i32
  }
  func.func @transform_2(%arg0: i32) -> (i32, i32) {
    %c0_i32 = arith.constant 0 : i32
    %c0_i32_0 = arith.constant 0 : i32
    %c0_i32_1 = arith.constant 0 : i32
    return %c0_i32, %c0_i32_0 : i32, i32
  }
  func.func @transform_3(%arg0: i32) -> (i32, i32) {
    %c0_i32 = arith.constant 0 : i32
    %c0_i32_0 = arith.constant 0 : i32
    %c0_i32_1 = arith.constant 0 : i32
    return %c0_i32, %c0_i32_0 : i32, i32
  }
  func.func @transform_4(%arg0: i32) -> (i32, i32) {
    %c0_i32 = arith.constant 0 : i32
    %c0_i32_0 = arith.constant 0 : i32
    %c0_i32_1 = arith.constant 0 : i32
    return %c0_i32, %c0_i32_0 : i32, i32
  }
  func.func @transform_5(%arg0: i32) -> (i32, i32) {
    %c0_i32 = arith.constant 0 : i32
    %c0_i32_0 = arith.constant 0 : i32
    %c0_i32_1 = arith.constant 0 : i32
    return %c0_i32, %c0_i32_0 : i32, i32
  }
  func.func @transform_6(%arg0: i32) -> (i32, i32, i32) {
    %c0_i32 = arith.constant 0 : i32
    %c0_i32_0 = arith.constant 0 : i32
    %c0_i32_1 = arith.constant 0 : i32
    %c0_i32_2 = arith.constant 0 : i32
    return %c0_i32, %c0_i32_0, %c0_i32_1 : i32, i32, i32
  }
  func.func @transform_7(%arg0: i32) -> (i32, i32) {
    %c0_i32 = arith.constant 0 : i32
    %c0_i32_0 = arith.constant 0 : i32
    %c0_i32_1 = arith.constant 0 : i32
    return %c0_i32, %c0_i32_0 : i32, i32
  }
  func.func @transform_8(%arg0: i32) -> (i32, i32) {
    %c0_i32 = arith.constant 0 : i32
    %c0_i32_0 = arith.constant 0 : i32
    %c0_i32_1 = arith.constant 0 : i32
    return %c0_i32, %c0_i32_0 : i32, i32
  }
  func.func @transform_9(%arg0: i32) -> (i32, i32) {
    %c0_i32 = arith.constant 0 : i32
    %c0_i32_0 = arith.constant 0 : i32
    %c0_i32_1 = arith.constant 0 : i32
    return %c0_i32, %c0_i32_0 : i32, i32
  }
  func.func @transform_10(%arg0: i32) -> (i32, i32) {
    %c0_i32 = arith.constant 0 : i32
    %c0_i32_0 = arith.constant 0 : i32
    %c0_i32_1 = arith.constant 0 : i32
    return %c0_i32, %c0_i32_0 : i32, i32
  }
  func.func @transform_11(%arg0: i32) -> (i32, i32) {
    %c0_i32 = arith.constant 0 : i32
    %c0_i32_0 = arith.constant 0 : i32
    %c0_i32_1 = arith.constant 0 : i32
    return %c0_i32, %c0_i32_0 : i32, i32
  }
  func.func @transform_12(%arg0: i32) -> (i32, i32) {
    %c0_i32 = arith.constant 0 : i32
    %c0_i32_0 = arith.constant 0 : i32
    %c0_i32_1 = arith.constant 0 : i32
    return %c0_i32, %c0_i32_0 : i32, i32
  }
  func.func @transform_13(%arg0: i32) -> (i32, i32) {
    %c0_i32 = arith.constant 0 : i32
    %c0_i32_0 = arith.constant 0 : i32
    %c0_i32_1 = arith.constant 0 : i32
    return %c0_i32, %c0_i32_0 : i32, i32
  }
  func.func @transform_14(%arg0: i32) -> (i32, i32) {
    %c0_i32 = arith.constant 0 : i32
    %c0_i32_0 = arith.constant 0 : i32
    %c0_i32_1 = arith.constant 0 : i32
    return %c0_i32, %c0_i32_0 : i32, i32
  }
  func.func @transform_15(%arg0: i32) -> (i32, i32) {
    %c0_i32 = arith.constant 0 : i32
    %c0_i32_0 = arith.constant 0 : i32
    %c0_i32_1 = arith.constant 0 : i32
    return %c0_i32, %c0_i32_0 : i32, i32
  }
  func.func @transform_16(%arg0: i32) -> (i32, i32) {
    %c0_i32 = arith.constant 0 : i32
    %c0_i32_0 = arith.constant 0 : i32
    %c0_i32_1 = arith.constant 0 : i32
    return %c0_i32, %c0_i32_0 : i32, i32
  }
  func.func @transform_17(%arg0: i32) -> (i32, i32) {
    %c0_i32 = arith.constant 0 : i32
    %c0_i32_0 = arith.constant 0 : i32
    %c0_i32_1 = arith.constant 0 : i32
    return %c0_i32, %c0_i32_0 : i32, i32
  }
  func.func @transform_18(%arg0: i32) -> (i32, i32, i32) {
    %c0_i32 = arith.constant 0 : i32
    %c0_i32_0 = arith.constant 0 : i32
    %c0_i32_1 = arith.constant 0 : i32
    return %arg0, %c0_i32, %c0_i32_0 : i32, i32, i32
  }
}

</mosaic_0001>

<llo_original>
// kernel: model_forward.1
$region0: #{model_forward.1}
  #allocation0 [shape = 'u32[]', space=smem, size = 0x4, offset = 0x4, fixed_abs, tag = 'smem constant byte address 0x4 - core index']
  #allocation1 [shape = 'u32[72,128]{1,0:T(1,128)}', space=vmem, size = 0x9000, scoped, tag = 'internal scratch']
  %s0 = inlined_call_operand.vmem [shape: bf16[2,64,128], index: 0, kind: input, shape index: {}]
  %s1 = inlined_call_operand.vmem [shape: f32[64,32], index: 1, kind: input, shape index: {}]
  %s2 = inlined_call_operand.vmem [shape: bf16[128,32], index: 2, kind: input, shape index: {}]
  %s3 = inlined_call_operand.vmem [shape: f32[1,32], index: 3, kind: input, shape index: {}]
  %s4 = inlined_call_operand.vmem [shape: bf16[32,96], index: 4, kind: input, shape index: {}]
  %s5 = inlined_call_operand.vmem [shape: f32[1,96], index: 5, kind: input, shape index: {}]
  %s6 = inlined_call_operand.vmem [shape: bf16[4,8,32], index: 6, kind: input, shape index: {}]
  %s7 = inlined_call_operand.vmem [shape: f32[1,32], index: 7, kind: input, shape index: {}]
  %s8 = inlined_call_operand.vmem [shape: f32[1,32], index: 8, kind: input, shape index: {}]
  %s9 = inlined_call_operand.vmem [shape: f32[1,32], index: 9, kind: input, shape index: {}]
  %s10 = inlined_call_operand.vmem [shape: bf16[32,128], index: 10, kind: input, shape index: {}]
  %s11 = inlined_call_operand.vmem [shape: f32[1,128], index: 11, kind: input, shape index: {}]
  %s12 = inlined_call_operand.vmem [shape: bf16[128,32], index: 12, kind: input, shape index: {}]
  %s13 = inlined_call_operand.vmem [shape: f32[1,32], index: 13, kind: input, shape index: {}]
  %s14 = inlined_call_operand.vmem [shape: f32[1,32], index: 14, kind: input, shape index: {}]
  %s15 = inlined_call_operand.vmem [shape: f32[1,32], index: 15, kind: input, shape index: {}]
  %s16 = inlined_call_operand.vmem [shape: bf16[32,4], index: 16, kind: input, shape index: {}]
  %s17 = inlined_call_operand.vmem [shape: f32[1,4], index: 17, kind: input, shape index: {}]
  %s18 = inlined_call_operand.vmem [shape: f32[2,64,4], index: 18, kind: output, shape index: {}]
  %s19 = sld [smem:[#allocation0]]
  $region82: #{model_forward.1} parent=0
    _
  %s21 = ssub.s32 1, %s19
  %s22 = scalar_select 0, %s21, %s19
  // Predicated region
  $region2: #{model_forward.1} parent=0 // pred_check
    _
  $region3: #{model_forward.1} parent=0 // pred_check_branch
    %24 = sbr.rel (0) target = $region5
  $region4: #{model_forward.1} parent=0 // pred_region
    _
  $region5: #{model_forward.1} parent=0 // pred_fallthru
    _
  // Predicated region
  $region6: #{model_forward.1} parent=0 // pred_check
    _
  $region7: #{model_forward.1} parent=0 // pred_check_branch
    %26 = sbr.rel (0) target = $region9
  $region8: #{model_forward.1} parent=0 // pred_region
    _
  $region9: #{model_forward.1} parent=0 // pred_fallthru
    _
  // Predicated region
  $region10: #{model_forward.1} parent=0 // pred_check
    _
  $region11: #{model_forward.1} parent=0 // pred_check_branch
    %28 = sbr.rel (0) target = $region13
  $region12: #{model_forward.1} parent=0 // pred_region
    _
  $region13: #{model_forward.1} parent=0 // pred_fallthru
    _
  // Predicated region
  $region14: #{model_forward.1} parent=0 // pred_check
    _
  $region15: #{model_forward.1} parent=0 // pred_check_branch
    %30 = sbr.rel (0) target = $region17
  $region16: #{model_forward.1} parent=0 // pred_region
    _
  $region17: #{model_forward.1} parent=0 // pred_fallthru
    _
  // Predicated region
  $region18: #{model_forward.1} parent=0 // pred_check
    _
  $region19: #{model_forward.1} parent=0 // pred_check_branch
    %32 = sbr.rel (0) target = $region21
  $region20: #{model_forward.1} parent=0 // pred_region
    _
  $region21: #{model_forward.1} parent=0 // pred_fallthru
    _
  // Predicated region
  $region22: #{model_forward.1} parent=0 // pred_check
    _
  $region23: #{model_forward.1} parent=0 // pred_check_branch
    %34 = sbr.rel (0) target = $region25
  $region24: #{model_forward.1} parent=0 // pred_region
    _
  $region25: #{model_forward.1} parent=0 // pred_fallthru
    _
  // Predicated region
  $region26: #{model_forward.1} parent=0 // pred_check
    _
  $region27: #{model_forward.1} parent=0 // pred_check_branch
    %36 = sbr.rel (0) target = $region29
  $region28: #{model_forward.1} parent=0 // pred_region
    _
  $region29: #{model_forward.1} parent=0 // pred_fallthru
    _
  // Predicated region
  $region30: #{model_forward.1} parent=0 // pred_check
    _
  $region31: #{model_forward.1} parent=0 // pred_check_branch
    %38 = sbr.rel (0) target = $region33
  $region32: #{model_forward.1} parent=0 // pred_region
    _
  $region33: #{model_forward.1} parent=0 // pred_fallthru
    _
  // Predicated region
  $region34: #{model_forward.1} parent=0 // pred_check
    _
  $region35: #{model_forward.1} parent=0 // pred_check_branch
    %40 = sbr.rel (0) target = $region37
  $region36: #{model_forward.1} parent=0 // pred_region
    _
  $region37: #{model_forward.1} parent=0 // pred_fallthru
    _
  // Predicated region
  $region38: #{model_forward.1} parent=0 // pred_check
    _
  $region39: #{model_forward.1} parent=0 // pred_check_branch
    %42 = sbr.rel (0) target = $region41
  $region40: #{model_forward.1} parent=0 // pred_region
    _
  $region41: #{model_forward.1} parent=0 // pred_fallthru
    _
  // Predicated region
  $region42: #{model_forward.1} parent=0 // pred_check
    _
  $region43: #{model_forward.1} parent=0 // pred_check_branch
    %44 = sbr.rel (0) target = $region45
  $region44: #{model_forward.1} parent=0 // pred_region
    _
  $region45: #{model_forward.1} parent=0 // pred_fallthru
    _
  // Predicated region
  $region46: #{model_forward.1} parent=0 // pred_check
    _
  $region47: #{model_forward.1} parent=0 // pred_check_branch
    %46 = sbr.rel (0) target = $region49
  $region48: #{model_forward.1} parent=0 // pred_region
    _
  $region49: #{model_forward.1} parent=0 // pred_fallthru
    _
  // Predicated region
  $region50: #{model_forward.1} parent=0 // pred_check
    _
  $region51: #{model_forward.1} parent=0 // pred_check_branch
    %48 = sbr.rel (0) target = $region53
  $region52: #{model_forward.1} parent=0 // pred_region
    _
  $region53: #{model_forward.1} parent=0 // pred_fallthru
    _
  // Predicated region
  $region54: #{model_forward.1} parent=0 // pred_check
    _
  $region55: #{model_forward.1} parent=0 // pred_check_branch
    %50 = sbr.rel (0) target = $region57
  $region56: #{model_forward.1} parent=0 // pred_region
    _
  $region57: #{model_forward.1} parent=0 // pred_fallthru
    _
  // Predicated region
  $region58: #{model_forward.1} parent=0 // pred_check
    _
  $region59: #{model_forward.1} parent=0 // pred_check_branch
    %52 = sbr.rel (0) target = $region61
  $region60: #{model_forward.1} parent=0 // pred_region
    _
  $region61: #{model_forward.1} parent=0 // pred_fallthru
    _
  // Predicated region
  $region62: #{model_forward.1} parent=0 // pred_check
    _
  $region63: #{model_forward.1} parent=0 // pred_check_branch
    %54 = sbr.rel (0) target = $region65
  $region64: #{model_forward.1} parent=0 // pred_region
    _
  $region65: #{model_forward.1} parent=0 // pred_fallthru
    _
  // Predicated region
  $region66: #{model_forward.1} parent=0 // pred_check
    _
  $region67: #{model_forward.1} parent=0 // pred_check_branch
    %56 = sbr.rel (0) target = $region69
  $region68: #{model_forward.1} parent=0 // pred_region
    _
  $region69: #{model_forward.1} parent=0 // pred_fallthru
    _
  // Predicated region
  $region70: #{model_forward.1} parent=0 // pred_check
    _
  $region71: #{model_forward.1} parent=0 // pred_check_branch
    %58 = sbr.rel (0) target = $region73
  $region72: #{model_forward.1} parent=0 // pred_region
    _
  $region73: #{model_forward.1} parent=0 // pred_fallthru
    _
  %v60 = vld [vmem:[%s0] sm:$0xf]
  %v61 = vld [vmem:[%s0 + $0x4] sm:$0xf]
  %v62 = vld [vmem:[%s0 + $0x8] sm:$0xf]
  %v63 = vld [vmem:[%s0 + $0xc] sm:$0xf]
  %v64 = vld [vmem:[%s0 + $0x10] sm:$0xf]
  %v65 = vld [vmem:[%s0 + $0x14] sm:$0xf]
  %v66 = vld [vmem:[%s0 + $0x18] sm:$0xf]
  %v67 = vld [vmem:[%s0 + $0x1c] sm:$0xf]
  %v68 = vld [vmem:[%s0 + $0x20] sm:$0xf]
  %v69 = vld [vmem:[%s0 + $0x24] sm:$0xf]
  %v70 = vld [vmem:[%s0 + $0x28] sm:$0xf]
  %v71 = vld [vmem:[%s0 + $0x2c] sm:$0xf]
  %v72 = vld [vmem:[%s0 + $0x30] sm:$0xf]
  %v73 = vld [vmem:[%s0 + $0x34] sm:$0xf]
  %v74 = vld [vmem:[%s0 + $0x38] sm:$0xf]
  %v75 = vld [vmem:[%s0 + $0x3c] sm:$0xf]
  %v76 = vld [vmem:[%s2] sm:$0xf]
  %v77 = vld [vmem:[%s2 + $0x4] sm:$0xf]
  %v78 = vld [vmem:[%s2 + $0x8] sm:$0xf]
  %v79 = vld [vmem:[%s2 + $0xc] sm:$0xf]
  %v80 = vld [vmem:[%s2 + $0x10] sm:$0xf]
  %v81 = vld [vmem:[%s2 + $0x14] sm:$0xf]
  %v82 = vld [vmem:[%s2 + $0x18] sm:$0xf]
  %v83 = vld [vmem:[%s2 + $0x1c] sm:$0xf]
  %v84 = vld [vmem:[%s2 + $0x20] sm:$0xf]
  %v85 = vld [vmem:[%s2 + $0x24] sm:$0xf]
  %v86 = vld [vmem:[%s2 + $0x28] sm:$0xf]
  %v87 = vld [vmem:[%s2 + $0x2c] sm:$0xf]
  %v88 = vld [vmem:[%s2 + $0x30] sm:$0xf]
  %v89 = vld [vmem:[%s2 + $0x34] sm:$0xf]
  %v90 = vld [vmem:[%s2 + $0x38] sm:$0xf]
  %v91 = vld [vmem:[%s2 + $0x3c] sm:$0xf]
  %v92 = vld [vmem:[%s3] sm:$0x1]
  %v94 = vperm.slane %v92, 0
  %v112 = vunpack.c.l.b16 %v60
  %v113 = vunpack.c.l.b16 %v61
  %v114 = vunpack.c.l.b16 %v62
  %v115 = vunpack.c.l.b16 %v63
  %v116 = vunpack.c.l.b16 %v64
  %v117 = vunpack.c.l.b16 %v65
  %v118 = vunpack.c.l.b16 %v66
  %v119 = vunpack.c.l.b16 %v67
  %v120 = vunpack.c.l.b16 %v68
  %v121 = vunpack.c.l.b16 %v69
  %v122 = vunpack.c.l.b16 %v70
  %v123 = vunpack.c.l.b16 %v71
  %v124 = vunpack.c.l.b16 %v72
  %v125 = vunpack.c.l.b16 %v73
  %v126 = vunpack.c.l.b16 %v74
  %v127 = vunpack.c.l.b16 %v75
  %v128 = vpack.c.b16 %v113, %v112
  %v129 = vpack.c.b16 %v115, %v114
  %v130 = vpack.c.b16 %v117, %v116
  %v131 = vpack.c.b16 %v119, %v118
  %v132 = vpack.c.b16 %v121, %v120
  %v133 = vpack.c.b16 %v123, %v122
  %v134 = vpack.c.b16 %v125, %v124
  %v135 = vpack.c.b16 %v127, %v126
  %v160 = vunpack.c.l.b16 %v76
  %v161 = vunpack.c.l.b16 %v77
  %v162 = vunpack.c.l.b16 %v78
  %v163 = vunpack.c.l.b16 %v79
  %v164 = vunpack.c.l.b16 %v80
  %v165 = vunpack.c.l.b16 %v81
  %v166 = vunpack.c.l.b16 %v82
  %v167 = vunpack.c.l.b16 %v83
  %v168 = vunpack.c.l.b16 %v84
  %v169 = vunpack.c.l.b16 %v85
  %v170 = vunpack.c.l.b16 %v86
  %v171 = vunpack.c.l.b16 %v87
  %v172 = vunpack.c.l.b16 %v88
  %v173 = vunpack.c.l.b16 %v89
  %v174 = vunpack.c.l.b16 %v90
  %v175 = vunpack.c.l.b16 %v91
  %v176 = vpack.c.b16 %v161, %v160
  %v177 = vpack.c.b16 %v163, %v162
  %v178 = vpack.c.b16 %v165, %v164
  %v179 = vpack.c.b16 %v167, %v166
  %v180 = vpack.c.b16 %v169, %v168
  %v181 = vpack.c.b16 %v171, %v170
  %v182 = vpack.c.b16 %v173, %v172
  %v183 = vpack.c.b16 %v175, %v174
  %192 = vmatpush.bf16.msra.mxu0 %v183
  %193 = vmatpush.bf16.msra.mxu0 %v182
  %194 = vmatpush.bf16.msra.mxu0 %v181
  %195 = vmatpush.bf16.msra.mxu0 %v180
  %196 = vmatpush.bf16.msra.mxu0 %v179
  %197 = vmatpush.bf16.msra.mxu0 %v178
  %198 = vmatpush.bf16.msra.mxu0 %v177
  %199 = vmatpush.bf16.msra.mxu0 %v176
  %200 = vmatmul.bf16.gmra.mxu0 %v128
  %v201 = vpop.f32.mrf.mxu0
  %v202 = vadd.f32 %v94, %v201
  %v203 = vpop.f32.mrf.mxu0
  %v204 = vadd.f32 %v94, %v203
  %205 = vmatmul.bf16.gmra.mxu0 %v129
  %v206 = vpop.f32.mrf.mxu0
  %v207 = vadd.f32 %v94, %v206
  %v208 = vpop.f32.mrf.mxu0
  %v209 = vadd.f32 %v94, %v208
  %210 = vmatmul.bf16.gmra.mxu0 %v130
  %v211 = vpop.f32.mrf.mxu0
  %v212 = vadd.f32 %v94, %v211
  %v213 = vpop.f32.mrf.mxu0
  %v214 = vadd.f32 %v94, %v213
  %215 = vmatmul.bf16.gmra.mxu0 %v131
  %v216 = vpop.f32.mrf.mxu0
  %v217 = vadd.f32 %v94, %v216
  %v218 = vpop.f32.mrf.mxu0
  %v219 = vadd.f32 %v94, %v218
  %220 = vmatmul.bf16.gmra.mxu0 %v132
  %v221 = vpop.f32.mrf.mxu0
  %v222 = vadd.f32 %v94, %v221
  %v223 = vpop.f32.mrf.mxu0
  %v224 = vadd.f32 %v94, %v223
  %225 = vmatmul.bf16.gmra.mxu0 %v133
  %v226 = vpop.f32.mrf.mxu0
  %v227 = vadd.f32 %v94, %v226
  %v228 = vpop.f32.mrf.mxu0
  %v229 = vadd.f32 %v94, %v228
  %230 = vmatmul.bf16.gmra.mxu0 %v134
  %v231 = vpop.f32.mrf.mxu0
  %v232 = vadd.f32 %v94, %v231
  %v233 = vpop.f32.mrf.mxu0
  %v234 = vadd.f32 %v94, %v233
  %235 = vmatmul.bf16.gmra.mxu0 %v135
  %v236 = vpop.f32.mrf.mxu0
  %v237 = vadd.f32 %v94, %v236
  %v238 = vpop.f32.mrf.mxu0
  %v239 = vadd.f32 %v94, %v238
  %240 = vdwg.mxu0
  %v241 = vmax.f32 %v202, 0.0
  %v242 = vmax.f32 %v204, 0.0
  %v243 = vmax.f32 %v207, 0.0
  %v244 = vmax.f32 %v209, 0.0
  %v245 = vmax.f32 %v212, 0.0
  %v246 = vmax.f32 %v214, 0.0
  %v247 = vmax.f32 %v217, 0.0
  %v248 = vmax.f32 %v219, 0.0
  %v249 = vmax.f32 %v222, 0.0
  %v250 = vmax.f32 %v224, 0.0
  %v251 = vmax.f32 %v227, 0.0
  %v252 = vmax.f32 %v229, 0.0
  %v253 = vmax.f32 %v232, 0.0
  %v254 = vmax.f32 %v234, 0.0
  %v255 = vmax.f32 %v237, 0.0
  %v256 = vmax.f32 %v239, 0.0
  %v257 = vld [vmem:[%s1] sm:$0xff]
  %v258 = vld [vmem:[%s1 + $0x8] sm:$0xff]
  %v259 = vld [vmem:[%s1 + $0x10] sm:$0xff]
  %v260 = vld [vmem:[%s1 + $0x18] sm:$0xff]
  %v261 = vld [vmem:[%s1 + $0x20] sm:$0xff]
  %v262 = vld [vmem:[%s1 + $0x28] sm:$0xff]
  %v263 = vld [vmem:[%s1 + $0x30] sm:$0xff]
  %v264 = vld [vmem:[%s1 + $0x38] sm:$0xff]
  %v265 = vadd.f32 %v241, %v257
  %v266 = vadd.f32 %v242, %v258
  %v267 = vadd.f32 %v243, %v259
  %v268 = vadd.f32 %v244, %v260
  %v269 = vadd.f32 %v245, %v261
  %v270 = vadd.f32 %v246, %v262
  %v271 = vadd.f32 %v247, %v263
  %v272 = vadd.f32 %v248, %v264
  %v273 = vadd.f32 %v249, %v257
  %v274 = vadd.f32 %v250, %v258
  %v275 = vadd.f32 %v251, %v259
  %v276 = vadd.f32 %v252, %v260
  %v277 = vadd.f32 %v253, %v261
  %v278 = vadd.f32 %v254, %v262
  %v279 = vadd.f32 %v255, %v263
  %v280 = vadd.f32 %v256, %v264
  %v281 = vpack.c.bf16 %v266, %v265
  %v282 = vpack.c.bf16 %v268, %v267
  %v283 = vpack.c.bf16 %v270, %v269
  %v284 = vpack.c.bf16 %v272, %v271
  %v285 = vpack.c.bf16 %v274, %v273
  %v286 = vpack.c.bf16 %v276, %v275
  %v287 = vpack.c.bf16 %v278, %v277
  %v288 = vpack.c.bf16 %v280, %v279
  %v289 = vld [vmem:[%s4] sm:$0xf]
  %v290 = vld [vmem:[%s4 + $0x4] sm:$0xf]
  %v291 = vld [vmem:[%s4 + $0x8] sm:$0xf]
  %v292 = vld [vmem:[%s4 + $0xc] sm:$0xf]
  %v293 = vld [vmem:[%s5] sm:$0x1]
  %v295 = vperm.slane %v293, 0
  %v301 = vunpack.c.l.b16 %v289
  %v302 = vunpack.c.l.b16 %v290
  %v303 = vunpack.c.l.b16 %v291
  %v304 = vunpack.c.l.b16 %v292
  %v305 = vpack.c.b16 %v302, %v301
  %v306 = vpack.c.b16 %v304, %v303
  %vm309 = vcmask 261120
  %v311 = vsel %vm309, %v281, 0
  %v314 = vsel %vm309, %v282, 0
  %v317 = vsel %vm309, %v283, 0
  %v320 = vsel %vm309, %v284, 0
  %v323 = vsel %vm309, %v285, 0
  %v326 = vsel %vm309, %v286, 0
  %v329 = vsel %vm309, %v287, 0
  %v332 = vsel %vm309, %v288, 0
  %334 = vmatpush.bf16.msra.mxu0 0
  %335 = vmatpush.bf16.msra.mxu0 0
  %336 = vmatpush.bf16.msra.mxu0 0
  %337 = vmatpush.bf16.msra.mxu0 0
  %338 = vmatpush.bf16.msra.mxu0 0
  %339 = vmatpush.bf16.msra.mxu0 0
  %340 = vmatpush.bf16.msra.mxu0 %v306
  %341 = vmatpush.bf16.msra.mxu0 %v305
  %342 = vmatmul.bf16.gmra.mxu0 %v311
  %v343 = vpop.f32.mrf.mxu0
  %v344 = vadd.f32 %v295, %v343
  %v345 = vpop.f32.mrf.mxu0
  %v346 = vadd.f32 %v295, %v345
  %347 = vmatmul.bf16.gmra.mxu0 %v314
  %v348 = vpop.f32.mrf.mxu0
  %v349 = vadd.f32 %v295, %v348
  %v350 = vpop.f32.mrf.mxu0
  %v351 = vadd.f32 %v295, %v350
  %352 = vmatmul.bf16.gmra.mxu0 %v317
  %v353 = vpop.f32.mrf.mxu0
  %v354 = vadd.f32 %v295, %v353
  %v355 = vpop.f32.mrf.mxu0
  %v356 = vadd.f32 %v295, %v355
  %357 = vmatmul.bf16.gmra.mxu0 %v320
  %v358 = vpop.f32.mrf.mxu0
  %v359 = vadd.f32 %v295, %v358
  %v360 = vpop.f32.mrf.mxu0
  %v361 = vadd.f32 %v295, %v360
  %362 = vmatmul.bf16.gmra.mxu0 %v323
  %v363 = vpop.f32.mrf.mxu0
  %v364 = vadd.f32 %v295, %v363
  %v365 = vpop.f32.mrf.mxu0
  %v366 = vadd.f32 %v295, %v365
  %367 = vmatmul.bf16.gmra.mxu0 %v326
  %v368 = vpop.f32.mrf.mxu0
  %v369 = vadd.f32 %v295, %v368
  %v370 = vpop.f32.mrf.mxu0
  %v371 = vadd.f32 %v295, %v370
  %372 = vmatmul.bf16.gmra.mxu0 %v329
  %v373 = vpop.f32.mrf.mxu0
  %v374 = vadd.f32 %v295, %v373
  %v375 = vpop.f32.mrf.mxu0
  %v376 = vadd.f32 %v295, %v375
  %377 = vmatmul.bf16.gmra.mxu0 %v332
  %v378 = vpop.f32.mrf.mxu0
  %v379 = vadd.f32 %v295, %v378
  %v380 = vpop.f32.mrf.mxu0
  %v381 = vadd.f32 %v295, %v380
  %382 = vdwg.mxu0
  %v383 = vpack.c.bf16 %v344, %v344
  %v384 = vpack.c.bf16 %v346, %v346
  %v385 = vpack.c.bf16 %v349, %v349
  %v386 = vpack.c.bf16 %v351, %v351
  %v387 = vpack.c.bf16 %v354, %v354
  %v388 = vpack.c.bf16 %v356, %v356
  %v389 = vpack.c.bf16 %v359, %v359
  %v390 = vpack.c.bf16 %v361, %v361
  %v391 = vpack.c.bf16 %v364, %v364
  %v392 = vpack.c.bf16 %v366, %v366
  %v393 = vpack.c.bf16 %v369, %v369
  %v394 = vpack.c.bf16 %v371, %v371
  %v395 = vpack.c.bf16 %v374, %v374
  %v396 = vpack.c.bf16 %v376, %v376
  %v397 = vpack.c.bf16 %v379, %v379
  %v398 = vpack.c.bf16 %v381, %v381
  %v407 = vunpack.c.l.b16 %v383
  %v408 = vunpack.c.l.b16 %v384
  %v409 = vunpack.c.l.b16 %v385
  %v410 = vunpack.c.l.b16 %v386
  %v411 = vunpack.c.l.b16 %v387
  %v412 = vunpack.c.l.b16 %v388
  %v413 = vunpack.c.l.b16 %v389
  %v414 = vunpack.c.l.b16 %v390
  %v415 = vpack.c.b16 %v408, %v407
  %v416 = vpack.c.b16 %v410, %v409
  %v417 = vpack.c.b16 %v412, %v411
  %v418 = vpack.c.b16 %v414, %v413
  %419 = vrot.lane.b32.xlu0 %v415, 96
  %v420 = vpop.permute.xlu0 %419
  %421 = vrot.lane.b32.xlu0 %v416, 96
  %v422 = vpop.permute.xlu0 %421
  %423 = vrot.lane.b32.xlu0 %v417, 96
  %v424 = vpop.permute.xlu0 %423
  %425 = vrot.lane.b32.xlu0 %v418, 96
  %v426 = vpop.permute.xlu0 %425
  %vm427 = vcmask 64512
  %v429 = vsel %vm427, %v415, 0
  %v432 = vsel %vm427, %v416, 0
  %v435 = vsel %vm427, %v417, 0
  %v438 = vsel %vm427, %v418, 0
  %v441 = vsel %vm427, %v420, 0
  %v444 = vsel %vm427, %v422, 0
  %v447 = vsel %vm427, %v424, 0
  %v450 = vsel %vm427, %v426, 0
  %452 = vmatpush.bf16.xpose.msra.mxu0 0
  %453 = vmatpush.bf16.xpose.msra.mxu0 0
  %454 = vmatpush.bf16.xpose.msra.mxu0 0
  %455 = vmatpush.bf16.xpose.msra.mxu0 0
  %456 = vmatpush.bf16.xpose.msra.mxu0 %v450
  %457 = vmatpush.bf16.xpose.msra.mxu0 %v447
  %458 = vmatpush.bf16.xpose.msra.mxu0 %v444
  %459 = vmatpush.bf16.xpose.msra.mxu0 %v441
  %460 = vmatmul.bf16.gmra.mxu0 %v429
  %v461 = vpop.f32.mrf.mxu0
  %v462 = vadd.f32 0.0, %v461
  %v463 = vpop.f32.mrf.mxu0
  %v464 = vadd.f32 0.0, %v463
  %465 = vmatmul.bf16.gmra.mxu0 %v432
  %v466 = vpop.f32.mrf.mxu0
  %v467 = vadd.f32 0.0, %v466
  %v468 = vpop.f32.mrf.mxu0
  %v469 = vadd.f32 0.0, %v468
  %470 = vmatmul.bf16.gmra.mxu0 %v435
  %v471 = vpop.f32.mrf.mxu0
  %v472 = vadd.f32 0.0, %v471
  %v473 = vpop.f32.mrf.mxu0
  %v474 = vadd.f32 0.0, %v473
  %475 = vmatmul.bf16.gmra.mxu0 %v438
  %v476 = vpop.f32.mrf.mxu0
  %v477 = vadd.f32 0.0, %v476
  %v478 = vpop.f32.mrf.mxu0
  %v479 = vadd.f32 0.0, %v478
  %480 = vdwg.mxu0
  %v489 = vunpack.c.l.b16 %v391
  %v490 = vunpack.c.l.b16 %v392
  %v491 = vunpack.c.l.b16 %v393
  %v492 = vunpack.c.l.b16 %v394
  %v493 = vunpack.c.l.b16 %v395
  %v494 = vunpack.c.l.b16 %v396
  %v495 = vunpack.c.l.b16 %v397
  %v496 = vunpack.c.l.b16 %v398
  %v497 = vpack.c.b16 %v490, %v489
  %v498 = vpack.c.b16 %v492, %v491
  %v499 = vpack.c.b16 %v494, %v493
  %v500 = vpack.c.b16 %v496, %v495
  %501 = vrot.lane.b32.xlu0 %v497, 96
  %v502 = vpop.permute.xlu0 %501
  %503 = vrot.lane.b32.xlu0 %v498, 96
  %v504 = vpop.permute.xlu0 %503
  %505 = vrot.lane.b32.xlu0 %v499, 96
  %v506 = vpop.permute.xlu0 %505
  %507 = vrot.lane.b32.xlu0 %v500, 96
  %v508 = vpop.permute.xlu0 %507
  %v510 = vsel %vm427, %v497, 0
  %v513 = vsel %vm427, %v498, 0
  %v516 = vsel %vm427, %v499, 0
  %v519 = vsel %vm427, %v500, 0
  %v522 = vsel %vm427, %v502, 0
  %v525 = vsel %vm427, %v504, 0
  %v528 = vsel %vm427, %v506, 0
  %v531 = vsel %vm427, %v508, 0
  %533 = vmatpush.bf16.xpose.msra.mxu0 0
  %534 = vmatpush.bf16.xpose.msra.mxu0 0
  %535 = vmatpush.bf16.xpose.msra.mxu0 0
  %536 = vmatpush.bf16.xpose.msra.mxu0 0
  %537 = vmatpush.bf16.xpose.msra.mxu0 %v531
  %538 = vmatpush.bf16.xpose.msra.mxu0 %v528
  %539 = vmatpush.bf16.xpose.msra.mxu0 %v525
  %540 = vmatpush.bf16.xpose.msra.mxu0 %v522
  %541 = vmatmul.bf16.gmra.mxu0 %v510
  %v542 = vpop.f32.mrf.mxu0
  %v543 = vadd.f32 0.0, %v542
  %v544 = vpop.f32.mrf.mxu0
  %v545 = vadd.f32 0.0, %v544
  %546 = vmatmul.bf16.gmra.mxu0 %v513
  %v547 = vpop.f32.mrf.mxu0
  %v548 = vadd.f32 0.0, %v547
  %v549 = vpop.f32.mrf.mxu0
  %v550 = vadd.f32 0.0, %v549
  %551 = vmatmul.bf16.gmra.mxu0 %v516
  %v552 = vpop.f32.mrf.mxu0
  %v553 = vadd.f32 0.0, %v552
  %v554 = vpop.f32.mrf.mxu0
  %v555 = vadd.f32 0.0, %v554
  %556 = vmatmul.bf16.gmra.mxu0 %v519
  %v557 = vpop.f32.mrf.mxu0
  %v558 = vadd.f32 0.0, %v557
  %v559 = vpop.f32.mrf.mxu0
  %v560 = vadd.f32 0.0, %v559
  %561 = vdwg.mxu0
  %vm562 = vcmask 523264
  %v563 = vsel %vm562, %v462, -inf
  %564 = vmax.xlane.f32.xlu0 %v563
  %v565 = vpop.xlane.xlu0 %564
  %v566 = vsel %vm562, %v464, -inf
  %567 = vmax.xlane.f32.xlu0 %v566
  %v568 = vpop.xlane.xlu0 %567
  %v569 = vsel %vm562, %v467, -inf
  %570 = vmax.xlane.f32.xlu0 %v569
  %v571 = vpop.xlane.xlu0 %570
  %v572 = vsel %vm562, %v469, -inf
  %573 = vmax.xlane.f32.xlu0 %v572
  %v574 = vpop.xlane.xlu0 %573
  %v575 = vsel %vm562, %v472, -inf
  %576 = vmax.xlane.f32.xlu0 %v575
  %v577 = vpop.xlane.xlu0 %576
  %v578 = vsel %vm562, %v474, -inf
  %579 = vmax.xlane.f32.xlu0 %v578
  %v580 = vpop.xlane.xlu0 %579
  %v581 = vsel %vm562, %v477, -inf
  %582 = vmax.xlane.f32.xlu0 %v581
  %v583 = vpop.xlane.xlu0 %582
  %v584 = vsel %vm562, %v479, -inf
  %585 = vmax.xlane.f32.xlu0 %v584
  %v586 = vpop.xlane.xlu0 %585
  %v587 = vsel %vm562, %v543, -inf
  %588 = vmax.xlane.f32.xlu0 %v587
  %v589 = vpop.xlane.xlu0 %588
  %v590 = vsel %vm562, %v545, -inf
  %591 = vmax.xlane.f32.xlu0 %v590
  %v592 = vpop.xlane.xlu0 %591
  %v593 = vsel %vm562, %v548, -inf
  %594 = vmax.xlane.f32.xlu0 %v593
  %v595 = vpop.xlane.xlu0 %594
  %v596 = vsel %vm562, %v550, -inf
  %597 = vmax.xlane.f32.xlu0 %v596
  %v598 = vpop.xlane.xlu0 %597
  %v599 = vsel %vm562, %v553, -inf
  %600 = vmax.xlane.f32.xlu0 %v599
  %v601 = vpop.xlane.xlu0 %600
  %v602 = vsel %vm562, %v555, -inf
  %603 = vmax.xlane.f32.xlu0 %v602
  %v604 = vpop.xlane.xlu0 %603
  %v605 = vsel %vm562, %v558, -inf
  %606 = vmax.xlane.f32.xlu0 %v605
  %v607 = vpop.xlane.xlu0 %606
  %v608 = vsel %vm562, %v560, -inf
  %609 = vmax.xlane.f32.xlu0 %v608
  %v610 = vpop.xlane.xlu0 %609
  %v611 = vsub.f32 %v462, %v565
  %v612 = vsub.f32 %v464, %v568
  %v613 = vsub.f32 %v467, %v571
  %v614 = vsub.f32 %v469, %v574
  %v615 = vsub.f32 %v472, %v577
  %v616 = vsub.f32 %v474, %v580
  %v617 = vsub.f32 %v477, %v583
  %v618 = vsub.f32 %v479, %v586
  %v619 = vsub.f32 %v543, %v589
  %v620 = vsub.f32 %v545, %v592
  %v621 = vsub.f32 %v548, %v595
  %v622 = vsub.f32 %v550, %v598
  %v623 = vsub.f32 %v553, %v601
  %v624 = vsub.f32 %v555, %v604
  %v625 = vsub.f32 %v558, %v607
  %v626 = vsub.f32 %v560, %v610
  %v627 = vmul.f32 %v611, 1.442695
  %v628 = vpow.pop %v627
  %v629 = vmul.f32 %v612, 1.442695
  %v630 = vpow.pop %v629
  %v631 = vmul.f32 %v613, 1.442695
  %v632 = vpow.pop %v631
  %v633 = vmul.f32 %v614, 1.442695
  %v634 = vpow.pop %v633
  %v635 = vmul.f32 %v615, 1.442695
  %v636 = vpow.pop %v635
  %v637 = vmul.f32 %v616, 1.442695
  %v638 = vpow.pop %v637
  %v639 = vmul.f32 %v617, 1.442695
  %v640 = vpow.pop %v639
  %v641 = vmul.f32 %v618, 1.442695
  %v642 = vpow.pop %v641
  %v643 = vmul.f32 %v619, 1.442695
  %v644 = vpow.pop %v643
  %v645 = vmul.f32 %v620, 1.442695
  %v646 = vpow.pop %v645
  %v647 = vmul.f32 %v621, 1.442695
  %v648 = vpow.pop %v647
  %v649 = vmul.f32 %v622, 1.442695
  %v650 = vpow.pop %v649
  %v651 = vmul.f32 %v623, 1.442695
  %v652 = vpow.pop %v651
  %v653 = vmul.f32 %v624, 1.442695
  %v654 = vpow.pop %v653
  %v655 = vmul.f32 %v625, 1.442695
  %v656 = vpow.pop %v655
  %v657 = vmul.f32 %v626, 1.442695
  %v658 = vpow.pop %v657
  %v659 = vsel %vm562, %v628, 0.0
  %660 = vadd.xlane.f32.xlu0 %v659
  %v661 = vpop.xlane.xlu0 %660
  %v662 = vsel %vm562, %v630, 0.0
  %663 = vadd.xlane.f32.xlu0 %v662
  %v664 = vpop.xlane.xlu0 %663
  %v665 = vsel %vm562, %v632, 0.0
  %666 = vadd.xlane.f32.xlu0 %v665
  %v667 = vpop.xlane.xlu0 %666
  %v668 = vsel %vm562, %v634, 0.0
  %669 = vadd.xlane.f32.xlu0 %v668
  %v670 = vpop.xlane.xlu0 %669
  %v671 = vsel %vm562, %v636, 0.0
  %672 = vadd.xlane.f32.xlu0 %v671
  %v673 = vpop.xlane.xlu0 %672
  %v674 = vsel %vm562, %v638, 0.0
  %675 = vadd.xlane.f32.xlu0 %v674
  %v676 = vpop.xlane.xlu0 %675
  %v677 = vsel %vm562, %v640, 0.0
  %678 = vadd.xlane.f32.xlu0 %v677
  %v679 = vpop.xlane.xlu0 %678
  %v680 = vsel %vm562, %v642, 0.0
  %681 = vadd.xlane.f32.xlu0 %v680
  %v682 = vpop.xlane.xlu0 %681
  %v683 = vsel %vm562, %v644, 0.0
  %684 = vadd.xlane.f32.xlu0 %v683
  %v685 = vpop.xlane.xlu0 %684
  %v686 = vsel %vm562, %v646, 0.0
  %687 = vadd.xlane.f32.xlu0 %v686
  %v688 = vpop.xlane.xlu0 %687
  %v689 = vsel %vm562, %v648, 0.0
  %690 = vadd.xlane.f32.xlu0 %v689
  %v691 = vpop.xlane.xlu0 %690
  %v692 = vsel %vm562, %v650, 0.0
  %693 = vadd.xlane.f32.xlu0 %v692
  %v694 = vpop.xlane.xlu0 %693
  %v695 = vsel %vm562, %v652, 0.0
  %696 = vadd.xlane.f32.xlu0 %v695
  %v697 = vpop.xlane.xlu0 %696
  %v698 = vsel %vm562, %v654, 0.0
  %699 = vadd.xlane.f32.xlu0 %v698
  %v700 = vpop.xlane.xlu0 %699
  %v701 = vsel %vm562, %v656, 0.0
  %702 = vadd.xlane.f32.xlu0 %v701
  %v703 = vpop.xlane.xlu0 %702
  %v704 = vsel %vm562, %v658, 0.0
  %705 = vadd.xlane.f32.xlu0 %v704
  %v706 = vpop.xlane.xlu0 %705
  %v707 = vrcp.pop %v661
  %v708 = vrcp.pop %v664
  %v709 = vrcp.pop %v667
  %v710 = vrcp.pop %v670
  %v711 = vrcp.pop %v673
  %v712 = vrcp.pop %v676
  %v713 = vrcp.pop %v679
  %v714 = vrcp.pop %v682
  %v715 = vrcp.pop %v685
  %v716 = vrcp.pop %v688
  %v717 = vrcp.pop %v691
  %v718 = vrcp.pop %v694
  %v719 = vrcp.pop %v697
  %v720 = vrcp.pop %v700
  %v721 = vrcp.pop %v703
  %v722 = vrcp.pop %v706
  %v723 = vmul.f32 %v628, %v707
  %v724 = vmul.f32 %v630, %v708
  %v725 = vmul.f32 %v632, %v709
  %v726 = vmul.f32 %v634, %v710
  %v727 = vmul.f32 %v636, %v711
  %v728 = vmul.f32 %v638, %v712
  %v729 = vmul.f32 %v640, %v713
  %v730 = vmul.f32 %v642, %v714
  %v731 = vmul.f32 %v644, %v715
  %v732 = vmul.f32 %v646, %v716
  %v733 = vmul.f32 %v648, %v717
  %v734 = vmul.f32 %v650, %v718
  %v735 = vmul.f32 %v652, %v719
  %v736 = vmul.f32 %v654, %v720
  %v737 = vmul.f32 %v656, %v721
  %v738 = vmul.f32 %v658, %v722
  %v739 = vpack.c.bf16 %v723, %v723
  %v740 = vpack.c.bf16 %v724, %v724
  %v741 = vpack.c.bf16 %v725, %v725
  %v742 = vpack.c.bf16 %v726, %v726
  %v743 = vpack.c.bf16 %v727, %v727
  %v744 = vpack.c.bf16 %v728, %v728
  %v745 = vpack.c.bf16 %v729, %v729
  %v746 = vpack.c.bf16 %v730, %v730
  %v747 = vpack.c.bf16 %v731, %v731
  %v748 = vpack.c.bf16 %v732, %v732
  %v749 = vpack.c.bf16 %v733, %v733
  %v750 = vpack.c.bf16 %v734, %v734
  %v751 = vpack.c.bf16 %v735, %v735
  %v752 = vpack.c.bf16 %v736, %v736
  %v753 = vpack.c.bf16 %v737, %v737
  %v754 = vpack.c.bf16 %v738, %v738
  %v763 = vunpack.c.l.b16 %v739
  %v764 = vunpack.c.l.b16 %v740
  %v765 = vunpack.c.l.b16 %v741
  %v766 = vunpack.c.l.b16 %v742
  %v767 = vunpack.c.l.b16 %v743
  %v768 = vunpack.c.l.b16 %v744
  %v769 = vunpack.c.l.b16 %v745
  %v770 = vunpack.c.l.b16 %v746
  %v771 = vpack.c.b16 %v764, %v763
  %v772 = vpack.c.b16 %v766, %v765
  %v773 = vpack.c.b16 %v768, %v767
  %v774 = vpack.c.b16 %v770, %v769
  %775 = vrot.lane.b32.xlu0 %v415, 64
  %v776 = vpop.permute.xlu0 %775
  %777 = vrot.lane.b32.xlu0 %v416, 64
  %v778 = vpop.permute.xlu0 %777
  %779 = vrot.lane.b32.xlu0 %v417, 64
  %v780 = vpop.permute.xlu0 %779
  %781 = vrot.lane.b32.xlu0 %v418, 64
  %v782 = vpop.permute.xlu0 %781
  %v788 = vsel %vm562, %v771, 0
  %v791 = vsel %vm562, %v772, 0
  %v794 = vsel %vm562, %v773, 0
  %v797 = vsel %vm562, %v774, 0
  %799 = vmatpush.bf16.msra.mxu0 0
  %800 = vmatpush.bf16.msra.mxu0 0
  %801 = vmatpush.bf16.msra.mxu0 0
  %802 = vmatpush.bf16.msra.mxu0 0
  %803 = vmatpush.bf16.msra.mxu0 %v782
  %804 = vmatpush.bf16.msra.mxu0 %v780
  %805 = vmatpush.bf16.msra.mxu0 %v778
  %806 = vmatpush.bf16.msra.mxu0 %v776
  %807 = vmatmul.bf16.gmra.mxu0 %v788
  %v808 = vpop.f32.mrf.mxu0
  %v809 = vadd.f32 0.0, %v808
  %v810 = vpop.f32.mrf.mxu0
  %v811 = vadd.f32 0.0, %v810
  %812 = vmatmul.bf16.gmra.mxu0 %v791
  %v813 = vpop.f32.mrf.mxu0
  %v814 = vadd.f32 0.0, %v813
  %v815 = vpop.f32.mrf.mxu0
  %v816 = vadd.f32 0.0, %v815
  %817 = vmatmul.bf16.gmra.mxu0 %v794
  %v818 = vpop.f32.mrf.mxu0
  %v819 = vadd.f32 0.0, %v818
  %v820 = vpop.f32.mrf.mxu0
  %v821 = vadd.f32 0.0, %v820
  %822 = vmatmul.bf16.gmra.mxu0 %v797
  %v823 = vpop.f32.mrf.mxu0
  %v824 = vadd.f32 0.0, %v823
  %v825 = vpop.f32.mrf.mxu0
  %v826 = vadd.f32 0.0, %v825
  %827 = vdwg.mxu0
  %v836 = vunpack.c.l.b16 %v747
  %v837 = vunpack.c.l.b16 %v748
  %v838 = vunpack.c.l.b16 %v749
  %v839 = vunpack.c.l.b16 %v750
  %v840 = vunpack.c.l.b16 %v751
  %v841 = vunpack.c.l.b16 %v752
  %v842 = vunpack.c.l.b16 %v753
  %v843 = vunpack.c.l.b16 %v754
  %v844 = vpack.c.b16 %v837, %v836
  %v845 = vpack.c.b16 %v839, %v838
  %v846 = vpack.c.b16 %v841, %v840
  %v847 = vpack.c.b16 %v843, %v842
  %848 = vrot.lane.b32.xlu0 %v497, 64
  %v849 = vpop.permute.xlu0 %848
  %850 = vrot.lane.b32.xlu0 %v498, 64
  %v851 = vpop.permute.xlu0 %850
  %852 = vrot.lane.b32.xlu0 %v499, 64
  %v853 = vpop.permute.xlu0 %852
  %854 = vrot.lane.b32.xlu0 %v500, 64
  %v855 = vpop.permute.xlu0 %854
  %v861 = vsel %vm562, %v844, 0
  %v864 = vsel %vm562, %v845, 0
  %v867 = vsel %vm562, %v846, 0
  %v870 = vsel %vm562, %v847, 0
  %872 = vmatpush.bf16.msra.mxu0 0
  %873 = vmatpush.bf16.msra.mxu0 0
  %874 = vmatpush.bf16.msra.mxu0 0
  %875 = vmatpush.bf16.msra.mxu0 0
  %876 = vmatpush.bf16.msra.mxu0 %v855
  %877 = vmatpush.bf16.msra.mxu0 %v853
  %878 = vmatpush.bf16.msra.mxu0 %v851
  %879 = vmatpush.bf16.msra.mxu0 %v849
  %880 = vmatmul.bf16.gmra.mxu0 %v861
  %v881 = vpop.f32.mrf.mxu0
  %v882 = vadd.f32 0.0, %v881
  %v883 = vpop.f32.mrf.mxu0
  %v884 = vadd.f32 0.0, %v883
  %885 = vmatmul.bf16.gmra.mxu0 %v864
  %v886 = vpop.f32.mrf.mxu0
  %v887 = vadd.f32 0.0, %v886
  %v888 = vpop.f32.mrf.mxu0
  %v889 = vadd.f32 0.0, %v888
  %890 = vmatmul.bf16.gmra.mxu0 %v867
  %v891 = vpop.f32.mrf.mxu0
  %v892 = vadd.f32 0.0, %v891
  %v893 = vpop.f32.mrf.mxu0
  %v894 = vadd.f32 0.0, %v893
  %895 = vmatmul.bf16.gmra.mxu0 %v870
  %v896 = vpop.f32.mrf.mxu0
  %v897 = vadd.f32 0.0, %v896
  %v898 = vpop.f32.mrf.mxu0
  %v899 = vadd.f32 0.0, %v898
  %900 = vdwg.mxu0
  %v901 = vpack.c.bf16 %v809, %v809
  %v902 = vpack.c.bf16 %v811, %v811
  %v903 = vpack.c.bf16 %v814, %v814
  %v904 = vpack.c.bf16 %v816, %v816
  %v905 = vpack.c.bf16 %v819, %v819
  %v906 = vpack.c.bf16 %v821, %v821
  %v907 = vpack.c.bf16 %v824, %v824
  %v908 = vpack.c.bf16 %v826, %v826
  %v909 = vpack.c.bf16 %v882, %v882
  %v910 = vpack.c.bf16 %v884, %v884
  %v911 = vpack.c.bf16 %v887, %v887
  %v912 = vpack.c.bf16 %v889, %v889
  %v913 = vpack.c.bf16 %v892, %v892
  %v914 = vpack.c.bf16 %v894, %v894
  %v915 = vpack.c.bf16 %v897, %v897
  %v916 = vpack.c.bf16 %v899, %v899
  %v917 = vld [vmem:[%s6] sm:$0xf]
  %918 = vrot.lane.b32.xlu0 %v415, 120
  %v919 = vpop.permute.xlu0 %918
  %920 = vrot.lane.b32.xlu0 %v416, 120
  %v921 = vpop.permute.xlu0 %920
  %922 = vrot.lane.b32.xlu0 %v417, 120
  %v923 = vpop.permute.xlu0 %922
  %924 = vrot.lane.b32.xlu0 %v418, 120
  %v925 = vpop.permute.xlu0 %924
  %926 = vrot.lane.b32.xlu0 %v415, 88
  %v927 = vpop.permute.xlu0 %926
  %928 = vrot.lane.b32.xlu0 %v416, 88
  %v929 = vpop.permute.xlu0 %928
  %930 = vrot.lane.b32.xlu0 %v417, 88
  %v931 = vpop.permute.xlu0 %930
  %932 = vrot.lane.b32.xlu0 %v418, 88
  %v933 = vpop.permute.xlu0 %932
  %v935 = vsel %vm427, %v919, 0
  %v938 = vsel %vm427, %v921, 0
  %v941 = vsel %vm427, %v923, 0
  %v944 = vsel %vm427, %v925, 0
  %v947 = vsel %vm427, %v927, 0
  %v950 = vsel %vm427, %v929, 0
  %v953 = vsel %vm427, %v931, 0
  %v956 = vsel %vm427, %v933, 0
  %958 = vmatpush.bf16.xpose.msra.mxu0 0
  %959 = vmatpush.bf16.xpose.msra.mxu0 0
  %960 = vmatpush.bf16.xpose.msra.mxu0 0
  %961 = vmatpush.bf16.xpose.msra.mxu0 0
  %962 = vmatpush.bf16.xpose.msra.mxu0 %v956
  %963 = vmatpush.bf16.xpose.msra.mxu0 %v953
  %964 = vmatpush.bf16.xpose.msra.mxu0 %v950
  %965 = vmatpush.bf16.xpose.msra.mxu0 %v947
  %966 = vmatmul.bf16.gmra.mxu0 %v935
  %v967 = vpop.f32.mrf.mxu0
  %v968 = vadd.f32 0.0, %v967
  %v969 = vpop.f32.mrf.mxu0
  %v970 = vadd.f32 0.0, %v969
  %971 = vmatmul.bf16.gmra.mxu0 %v938
  %v972 = vpop.f32.mrf.mxu0
  %v973 = vadd.f32 0.0, %v972
  %v974 = vpop.f32.mrf.mxu0
  %v975 = vadd.f32 0.0, %v974
  %976 = vmatmul.bf16.gmra.mxu0 %v941
  %v977 = vpop.f32.mrf.mxu0
  %v978 = vadd.f32 0.0, %v977
  %v979 = vpop.f32.mrf.mxu0
  %v980 = vadd.f32 0.0, %v979
  %981 = vmatmul.bf16.gmra.mxu0 %v944
  %v982 = vpop.f32.mrf.mxu0
  %v983 = vadd.f32 0.0, %v982
  %v984 = vpop.f32.mrf.mxu0
  %v985 = vadd.f32 0.0, %v984
  %986 = vdwg.mxu0
  %987 = vrot.lane.b32.xlu0 %v497, 120
  %v988 = vpop.permute.xlu0 %987
  %989 = vrot.lane.b32.xlu0 %v498, 120
  %v990 = vpop.permute.xlu0 %989
  %991 = vrot.lane.b32.xlu0 %v499, 120
  %v992 = vpop.permute.xlu0 %991
  %993 = vrot.lane.b32.xlu0 %v500, 120
  %v994 = vpop.permute.xlu0 %993
  %995 = vrot.lane.b32.xlu0 %v497, 88
  %v996 = vpop.permute.xlu0 %995
  %997 = vrot.lane.b32.xlu0 %v498, 88
  %v998 = vpop.permute.xlu0 %997
  %999 = vrot.lane.b32.xlu0 %v499, 88
  %v1000 = vpop.permute.xlu0 %999
  %1001 = vrot.lane.b32.xlu0 %v500, 88
  %v1002 = vpop.permute.xlu0 %1001
  %v1004 = vsel %vm427, %v988, 0
  %v1007 = vsel %vm427, %v990, 0
  %v1010 = vsel %vm427, %v992, 0
  %v1013 = vsel %vm427, %v994, 0
  %v1016 = vsel %vm427, %v996, 0
  %v1019 = vsel %vm427, %v998, 0
  %v1022 = vsel %vm427, %v1000, 0
  %v1025 = vsel %vm427, %v1002, 0
  %1027 = vmatpush.bf16.xpose.msra.mxu0 0
  %1028 = vmatpush.bf16.xpose.msra.mxu0 0
  %1029 = vmatpush.bf16.xpose.msra.mxu0 0
  %1030 = vmatpush.bf16.xpose.msra.mxu0 0
  %1031 = vmatpush.bf16.xpose.msra.mxu0 %v1025
  %1032 = vmatpush.bf16.xpose.msra.mxu0 %v1022
  %1033 = vmatpush.bf16.xpose.msra.mxu0 %v1019
  %1034 = vmatpush.bf16.xpose.msra.mxu0 %v1016
  %1035 = vmatmul.bf16.gmra.mxu0 %v1004
  %v1036 = vpop.f32.mrf.mxu0
  %v1037 = vadd.f32 0.0, %v1036
  %v1038 = vpop.f32.mrf.mxu0
  %v1039 = vadd.f32 0.0, %v1038
  %1040 = vmatmul.bf16.gmra.mxu0 %v1007
  %v1041 = vpop.f32.mrf.mxu0
  %v1042 = vadd.f32 0.0, %v1041
  %v1043 = vpop.f32.mrf.mxu0
  %v1044 = vadd.f32 0.0, %v1043
  %1045 = vmatmul.bf16.gmra.mxu0 %v1010
  %v1046 = vpop.f32.mrf.mxu0
  %v1047 = vadd.f32 0.0, %v1046
  %v1048 = vpop.f32.mrf.mxu0
  %v1049 = vadd.f32 0.0, %v1048
  %1050 = vmatmul.bf16.gmra.mxu0 %v1013
  %v1051 = vpop.f32.mrf.mxu0
  %v1052 = vadd.f32 0.0, %v1051
  %v1053 = vpop.f32.mrf.mxu0
  %v1054 = vadd.f32 0.0, %v1053
  %1055 = vdwg.mxu0
  %v1056 = vsel %vm562, %v968, -inf
  %1057 = vmax.xlane.f32.xlu0 %v1056
  %v1058 = vpop.xlane.xlu0 %1057
  %v1059 = vsel %vm562, %v970, -inf
  %1060 = vmax.xlane.f32.xlu0 %v1059
  %v1061 = vpop.xlane.xlu0 %1060
  %v1062 = vsel %vm562, %v973, -inf
  %1063 = vmax.xlane.f32.xlu0 %v1062
  %v1064 = vpop.xlane.xlu0 %1063
  %v1065 = vsel %vm562, %v975, -inf
  %1066 = vmax.xlane.f32.xlu0 %v1065
  %v1067 = vpop.xlane.xlu0 %1066
  %v1068 = vsel %vm562, %v978, -inf
  %1069 = vmax.xlane.f32.xlu0 %v1068
  %v1070 = vpop.xlane.xlu0 %1069
  %v1071 = vsel %vm562, %v980, -inf
  %1072 = vmax.xlane.f32.xlu0 %v1071
  %v1073 = vpop.xlane.xlu0 %1072
  %v1074 = vsel %vm562, %v983, -inf
  %1075 = vmax.xlane.f32.xlu0 %v1074
  %v1076 = vpop.xlane.xlu0 %1075
  %v1077 = vsel %vm562, %v985, -inf
  %1078 = vmax.xlane.f32.xlu0 %v1077
  %v1079 = vpop.xlane.xlu0 %1078
  %v1080 = vsel %vm562, %v1037, -inf
  %1081 = vmax.xlane.f32.xlu0 %v1080
  %v1082 = vpop.xlane.xlu0 %1081
  %v1083 = vsel %vm562, %v1039, -inf
  %1084 = vmax.xlane.f32.xlu0 %v1083
  %v1085 = vpop.xlane.xlu0 %1084
  %v1086 = vsel %vm562, %v1042, -inf
  %1087 = vmax.xlane.f32.xlu0 %v1086
  %v1088 = vpop.xlane.xlu0 %1087
  %v1089 = vsel %vm562, %v1044, -inf
  %1090 = vmax.xlane.f32.xlu0 %v1089
  %v1091 = vpop.xlane.xlu0 %1090
  %v1092 = vsel %vm562, %v1047, -inf
  %1093 = vmax.xlane.f32.xlu0 %v1092
  %v1094 = vpop.xlane.xlu0 %1093
  %v1095 = vsel %vm562, %v1049, -inf
  %1096 = vmax.xlane.f32.xlu0 %v1095
  %v1097 = vpop.xlane.xlu0 %1096
  %v1098 = vsel %vm562, %v1052, -inf
  %1099 = vmax.xlane.f32.xlu0 %v1098
  %v1100 = vpop.xlane.xlu0 %1099
  %v1101 = vsel %vm562, %v1054, -inf
  %1102 = vmax.xlane.f32.xlu0 %v1101
  %v1103 = vpop.xlane.xlu0 %1102
  %v1104 = vsub.f32 %v968, %v1058
  %v1105 = vsub.f32 %v970, %v1061
  %v1106 = vsub.f32 %v973, %v1064
  %v1107 = vsub.f32 %v975, %v1067
  %v1108 = vsub.f32 %v978, %v1070
  %v1109 = vsub.f32 %v980, %v1073
  %v1110 = vsub.f32 %v983, %v1076
  %v1111 = vsub.f32 %v985, %v1079
  %v1112 = vsub.f32 %v1037, %v1082
  %v1113 = vsub.f32 %v1039, %v1085
  %v1114 = vsub.f32 %v1042, %v1088
  %v1115 = vsub.f32 %v1044, %v1091
  %v1116 = vsub.f32 %v1047, %v1094
  %v1117 = vsub.f32 %v1049, %v1097
  %v1118 = vsub.f32 %v1052, %v1100
  %v1119 = vsub.f32 %v1054, %v1103
  %v1120 = vmul.f32 %v1104, 1.442695
  %v1121 = vpow.pop %v1120
  %v1122 = vmul.f32 %v1105, 1.442695
  %v1123 = vpow.pop %v1122
  %v1124 = vmul.f32 %v1106, 1.442695
  %v1125 = vpow.pop %v1124
  %v1126 = vmul.f32 %v1107, 1.442695
  %v1127 = vpow.pop %v1126
  %v1128 = vmul.f32 %v1108, 1.442695
  %v1129 = vpow.pop %v1128
  %v1130 = vmul.f32 %v1109, 1.442695
  %v1131 = vpow.pop %v1130
  %v1132 = vmul.f32 %v1110, 1.442695
  %v1133 = vpow.pop %v1132
  %v1134 = vmul.f32 %v1111, 1.442695
  %v1135 = vpow.pop %v1134
  %v1136 = vmul.f32 %v1112, 1.442695
  %v1137 = vpow.pop %v1136
  %v1138 = vmul.f32 %v1113, 1.442695
  %v1139 = vpow.pop %v1138
  %v1140 = vmul.f32 %v1114, 1.442695
  %v1141 = vpow.pop %v1140
  %v1142 = vmul.f32 %v1115, 1.442695
  %v1143 = vpow.pop %v1142
  %v1144 = vmul.f32 %v1116, 1.442695
  %v1145 = vpow.pop %v1144
  %v1146 = vmul.f32 %v1117, 1.442695
  %v1147 = vpow.pop %v1146
  %v1148 = vmul.f32 %v1118, 1.442695
  %v1149 = vpow.pop %v1148
  %v1150 = vmul.f32 %v1119, 1.442695
  %v1151 = vpow.pop %v1150
  %v1152 = vsel %vm562, %v1121, 0.0
  %1153 = vadd.xlane.f32.xlu0 %v1152
  %v1154 = vpop.xlane.xlu0 %1153
  %v1155 = vsel %vm562, %v1123, 0.0
  %1156 = vadd.xlane.f32.xlu0 %v1155
  %v1157 = vpop.xlane.xlu0 %1156
  %v1158 = vsel %vm562, %v1125, 0.0
  %1159 = vadd.xlane.f32.xlu0 %v1158
  %v1160 = vpop.xlane.xlu0 %1159
  %v1161 = vsel %vm562, %v1127, 0.0
  %1162 = vadd.xlane.f32.xlu0 %v1161
  %v1163 = vpop.xlane.xlu0 %1162
  %v1164 = vsel %vm562, %v1129, 0.0
  %1165 = vadd.xlane.f32.xlu0 %v1164
  %v1166 = vpop.xlane.xlu0 %1165
  %v1167 = vsel %vm562, %v1131, 0.0
  %1168 = vadd.xlane.f32.xlu0 %v1167
  %v1169 = vpop.xlane.xlu0 %1168
  %v1170 = vsel %vm562, %v1133, 0.0
  %1171 = vadd.xlane.f32.xlu0 %v1170
  %v1172 = vpop.xlane.xlu0 %1171
  %v1173 = vsel %vm562, %v1135, 0.0
  %1174 = vadd.xlane.f32.xlu0 %v1173
  %v1175 = vpop.xlane.xlu0 %1174
  %v1176 = vsel %vm562, %v1137, 0.0
  %1177 = vadd.xlane.f32.xlu0 %v1176
  %v1178 = vpop.xlane.xlu0 %1177
  %v1179 = vsel %vm562, %v1139, 0.0
  %1180 = vadd.xlane.f32.xlu0 %v1179
  %v1181 = vpop.xlane.xlu0 %1180
  %v1182 = vsel %vm562, %v1141, 0.0
  %1183 = vadd.xlane.f32.xlu0 %v1182
  %v1184 = vpop.xlane.xlu0 %1183
  %v1185 = vsel %vm562, %v1143, 0.0
  %1186 = vadd.xlane.f32.xlu0 %v1185
  %v1187 = vpop.xlane.xlu0 %1186
  %v1188 = vsel %vm562, %v1145, 0.0
  %1189 = vadd.xlane.f32.xlu0 %v1188
  %v1190 = vpop.xlane.xlu0 %1189
  %v1191 = vsel %vm562, %v1147, 0.0
  %1192 = vadd.xlane.f32.xlu0 %v1191
  %v1193 = vpop.xlane.xlu0 %1192
  %v1194 = vsel %vm562, %v1149, 0.0
  %1195 = vadd.xlane.f32.xlu0 %v1194
  %v1196 = vpop.xlane.xlu0 %1195
  %v1197 = vsel %vm562, %v1151, 0.0
  %1198 = vadd.xlane.f32.xlu0 %v1197
  %v1199 = vpop.xlane.xlu0 %1198
  %v1200 = vrcp.pop %v1154
  %v1201 = vrcp.pop %v1157
  %v1202 = vrcp.pop %v1160
  %v1203 = vrcp.pop %v1163
  %v1204 = vrcp.pop %v1166
  %v1205 = vrcp.pop %v1169
  %v1206 = vrcp.pop %v1172
  %v1207 = vrcp.pop %v1175
  %v1208 = vrcp.pop %v1178
  %v1209 = vrcp.pop %v1181
  %v1210 = vrcp.pop %v1184
  %v1211 = vrcp.pop %v1187
  %v1212 = vrcp.pop %v1190
  %v1213 = vrcp.pop %v1193
  %v1214 = vrcp.pop %v1196
  %v1215 = vrcp.pop %v1199
  %v1216 = vmul.f32 %v1121, %v1200
  %v1217 = vmul.f32 %v1123, %v1201
  %v1218 = vmul.f32 %v1125, %v1202
  %v1219 = vmul.f32 %v1127, %v1203
  %v1220 = vmul.f32 %v1129, %v1204
  %v1221 = vmul.f32 %v1131, %v1205
  %v1222 = vmul.f32 %v1133, %v1206
  %v1223 = vmul.f32 %v1135, %v1207
  %v1224 = vmul.f32 %v1137, %v1208
  %v1225 = vmul.f32 %v1139, %v1209
  %v1226 = vmul.f32 %v1141, %v1210
  %v1227 = vmul.f32 %v1143, %v1211
  %v1228 = vmul.f32 %v1145, %v1212
  %v1229 = vmul.f32 %v1147, %v1213
  %v1230 = vmul.f32 %v1149, %v1214
  %v1231 = vmul.f32 %v1151, %v1215
  %v1232 = vpack.c.bf16 %v1216, %v1216
  %v1233 = vpack.c.bf16 %v1217, %v1217
  %v1234 = vpack.c.bf16 %v1218, %v1218
  %v1235 = vpack.c.bf16 %v1219, %v1219
  %v1236 = vpack.c.bf16 %v1220, %v1220
  %v1237 = vpack.c.bf16 %v1221, %v1221
  %v1238 = vpack.c.bf16 %v1222, %v1222
  %v1239 = vpack.c.bf16 %v1223, %v1223
  %v1240 = vpack.c.bf16 %v1224, %v1224
  %v1241 = vpack.c.bf16 %v1225, %v1225
  %v1242 = vpack.c.bf16 %v1226, %v1226
  %v1243 = vpack.c.bf16 %v1227, %v1227
  %v1244 = vpack.c.bf16 %v1228, %v1228
  %v1245 = vpack.c.bf16 %v1229, %v1229
  %v1246 = vpack.c.bf16 %v1230, %v1230
  %v1247 = vpack.c.bf16 %v1231, %v1231
  %v1256 = vunpack.c.l.b16 %v1232
  %v1257 = vunpack.c.l.b16 %v1233
  %v1258 = vunpack.c.l.b16 %v1234
  %v1259 = vunpack.c.l.b16 %v1235
  %v1260 = vunpack.c.l.b16 %v1236
  %v1261 = vunpack.c.l.b16 %v1237
  %v1262 = vunpack.c.l.b16 %v1238
  %v1263 = vunpack.c.l.b16 %v1239
  %v1264 = vpack.c.b16 %v1257, %v1256
  %v1265 = vpack.c.b16 %v1259, %v1258
  %v1266 = vpack.c.b16 %v1261, %v1260
  %v1267 = vpack.c.b16 %v1263, %v1262
  %1268 = vrot.lane.b32.xlu0 %v415, 56
  %v1269 = vpop.permute.xlu0 %1268
  %1270 = vrot.lane.b32.xlu0 %v416, 56
  %v1271 = vpop.permute.xlu0 %1270
  %1272 = vrot.lane.b32.xlu0 %v417, 56
  %v1273 = vpop.permute.xlu0 %1272
  %1274 = vrot.lane.b32.xlu0 %v418, 56
  %v1275 = vpop.permute.xlu0 %1274
  %v1281 = vsel %vm562, %v1264, 0
  %v1284 = vsel %vm562, %v1265, 0
  %v1287 = vsel %vm562, %v1266, 0
  %v1290 = vsel %vm562, %v1267, 0
  %1292 = vmatpush.bf16.msra.mxu0 0
  %1293 = vmatpush.bf16.msra.mxu0 0
  %1294 = vmatpush.bf16.msra.mxu0 0
  %1295 = vmatpush.bf16.msra.mxu0 0
  %1296 = vmatpush.bf16.msra.mxu0 %v1275
  %1297 = vmatpush.bf16.msra.mxu0 %v1273
  %1298 = vmatpush.bf16.msra.mxu0 %v1271
  %1299 = vmatpush.bf16.msra.mxu0 %v1269
  %1300 = vmatmul.bf16.gmra.mxu0 %v1281
  %v1301 = vpop.f32.mrf.mxu0
  %v1302 = vadd.f32 0.0, %v1301
  %v1303 = vpop.f32.mrf.mxu0
  %v1304 = vadd.f32 0.0, %v1303
  %1305 = vmatmul.bf16.gmra.mxu0 %v1284
  %v1306 = vpop.f32.mrf.mxu0
  %v1307 = vadd.f32 0.0, %v1306
  %v1308 = vpop.f32.mrf.mxu0
  %v1309 = vadd.f32 0.0, %v1308
  %1310 = vmatmul.bf16.gmra.mxu0 %v1287
  %v1311 = vpop.f32.mrf.mxu0
  %v1312 = vadd.f32 0.0, %v1311
  %v1313 = vpop.f32.mrf.mxu0
  %v1314 = vadd.f32 0.0, %v1313
  %1315 = vmatmul.bf16.gmra.mxu0 %v1290
  %v1316 = vpop.f32.mrf.mxu0
  %v1317 = vadd.f32 0.0, %v1316
  %v1318 = vpop.f32.mrf.mxu0
  %v1319 = vadd.f32 0.0, %v1318
  %1320 = vdwg.mxu0
  %v1329 = vunpack.c.l.b16 %v1240
  %v1330 = vunpack.c.l.b16 %v1241
  %v1331 = vunpack.c.l.b16 %v1242
  %v1332 = vunpack.c.l.b16 %v1243
  %v1333 = vunpack.c.l.b16 %v1244
  %v1334 = vunpack.c.l.b16 %v1245
  %v1335 = vunpack.c.l.b16 %v1246
  %v1336 = vunpack.c.l.b16 %v1247
  %v1337 = vpack.c.b16 %v1330, %v1329
  %v1338 = vpack.c.b16 %v1332, %v1331
  %v1339 = vpack.c.b16 %v1334, %v1333
  %v1340 = vpack.c.b16 %v1336, %v1335
  %1341 = vrot.lane.b32.xlu0 %v497, 56
  %v1342 = vpop.permute.xlu0 %1341
  %1343 = vrot.lane.b32.xlu0 %v498, 56
  %v1344 = vpop.permute.xlu0 %1343
  %1345 = vrot.lane.b32.xlu0 %v499, 56
  %v1346 = vpop.permute.xlu0 %1345
  %1347 = vrot.lane.b32.xlu0 %v500, 56
  %v1348 = vpop.permute.xlu0 %1347
  %v1354 = vsel %vm562, %v1337, 0
  %v1357 = vsel %vm562, %v1338, 0
  %v1360 = vsel %vm562, %v1339, 0
  %v1363 = vsel %vm562, %v1340, 0
  %1365 = vmatpush.bf16.msra.mxu0 0
  %1366 = vmatpush.bf16.msra.mxu0 0
  %1367 = vmatpush.bf16.msra.mxu0 0
  %1368 = vmatpush.bf16.msra.mxu0 0
  %1369 = vmatpush.bf16.msra.mxu0 %v1348
  %1370 = vmatpush.bf16.msra.mxu0 %v1346
  %1371 = vmatpush.bf16.msra.mxu0 %v1344
  %1372 = vmatpush.bf16.msra.mxu0 %v1342
  %1373 = vmatmul.bf16.gmra.mxu0 %v1354
  %v1374 = vpop.f32.mrf.mxu0
  %v1375 = vadd.f32 0.0, %v1374
  %v1376 = vpop.f32.mrf.mxu0
  %v1377 = vadd.f32 0.0, %v1376
  %1378 = vmatmul.bf16.gmra.mxu0 %v1357
  %v1379 = vpop.f32.mrf.mxu0
  %v1380 = vadd.f32 0.0, %v1379
  %v1381 = vpop.f32.mrf.mxu0
  %v1382 = vadd.f32 0.0, %v1381
  %1383 = vmatmul.bf16.gmra.mxu0 %v1360
  %v1384 = vpop.f32.mrf.mxu0
  %v1385 = vadd.f32 0.0, %v1384
  %v1386 = vpop.f32.mrf.mxu0
  %v1387 = vadd.f32 0.0, %v1386
  %1388 = vmatmul.bf16.gmra.mxu0 %v1363
  %v1389 = vpop.f32.mrf.mxu0
  %v1390 = vadd.f32 0.0, %v1389
  %v1391 = vpop.f32.mrf.mxu0
  %v1392 = vadd.f32 0.0, %v1391
  %1393 = vdwg.mxu0
  %v1394 = vpack.c.bf16 %v1302, %v1302
  %v1395 = vpack.c.bf16 %v1304, %v1304
  %v1396 = vpack.c.bf16 %v1307, %v1307
  %v1397 = vpack.c.bf16 %v1309, %v1309
  %v1398 = vpack.c.bf16 %v1312, %v1312
  %v1399 = vpack.c.bf16 %v1314, %v1314
  %v1400 = vpack.c.bf16 %v1317, %v1317
  %v1401 = vpack.c.bf16 %v1319, %v1319
  %v1402 = vpack.c.bf16 %v1375, %v1375
  %v1403 = vpack.c.bf16 %v1377, %v1377
  %v1404 = vpack.c.bf16 %v1380, %v1380
  %v1405 = vpack.c.bf16 %v1382, %v1382
  %v1406 = vpack.c.bf16 %v1385, %v1385
  %v1407 = vpack.c.bf16 %v1387, %v1387
  %v1408 = vpack.c.bf16 %v1390, %v1390
  %v1409 = vpack.c.bf16 %v1392, %v1392
  %s1410 = scalar_lea.vmem %s6, 4
  %v1411 = vld [vmem:[%s1410] sm:$0xf]
  %v1428 = vunpack.c.l.b16 %v1394
  %v1429 = vunpack.c.l.b16 %v1395
  %v1430 = vunpack.c.l.b16 %v1396
  %v1431 = vunpack.c.l.b16 %v1397
  %v1432 = vunpack.c.l.b16 %v1398
  %v1433 = vunpack.c.l.b16 %v1399
  %v1434 = vunpack.c.l.b16 %v1400
  %v1435 = vunpack.c.l.b16 %v1401
  %v1436 = vunpack.c.l.b16 %v1402
  %v1437 = vunpack.c.l.b16 %v1403
  %v1438 = vunpack.c.l.b16 %v1404
  %v1439 = vunpack.c.l.b16 %v1405
  %v1440 = vunpack.c.l.b16 %v1406
  %v1441 = vunpack.c.l.b16 %v1407
  %v1442 = vunpack.c.l.b16 %v1408
  %v1443 = vunpack.c.l.b16 %v1409
  %v1444 = vpack.c.b16 %v1429, %v1428
  %v1445 = vpack.c.b16 %v1431, %v1430
  %v1446 = vpack.c.b16 %v1433, %v1432
  %v1447 = vpack.c.b16 %v1435, %v1434
  %v1448 = vpack.c.b16 %v1437, %v1436
  %v1449 = vpack.c.b16 %v1439, %v1438
  %v1450 = vpack.c.b16 %v1441, %v1440
  %v1451 = vpack.c.b16 %v1443, %v1442
  %v1453 = vsel %vm427, %v1444, 0
  %v1456 = vsel %vm427, %v1445, 0
  %v1459 = vsel %vm427, %v1446, 0
  %v1462 = vsel %vm427, %v1447, 0
  %v1465 = vsel %vm427, %v1448, 0
  %v1468 = vsel %vm427, %v1449, 0
  %v1471 = vsel %vm427, %v1450, 0
  %v1474 = vsel %vm427, %v1451, 0
  %vm1476 = vcmask 1043456
  %v1478 = vsel %vm1476, %v1411, 0
  %1480 = vmatpush.bf16.msra.mxu0 0
  %1481 = vmatpush.bf16.msra.mxu0 0
  %1482 = vmatpush.bf16.msra.mxu0 0
  %1483 = vmatpush.bf16.msra.mxu0 0
  %1484 = vmatpush.bf16.msra.mxu0 0
  %1485 = vmatpush.bf16.msra.mxu0 0
  %1486 = vmatpush.bf16.msra.mxu0 0
  %1487 = vmatpush.bf16.msra.mxu0 %v1478
  %1488 = vmatmul.bf16.gmra.mxu0 %v1453
  %v1489 = vpop.f32.mrf.mxu0
  %v1490 = vadd.f32 0.0, %v1489
  %v1491 = vpop.f32.mrf.mxu0
  %v1492 = vadd.f32 0.0, %v1491
  %1493 = vmatmul.bf16.gmra.mxu0 %v1456
  %v1494 = vpop.f32.mrf.mxu0
  %v1495 = vadd.f32 0.0, %v1494
  %v1496 = vpop.f32.mrf.mxu0
  %v1497 = vadd.f32 0.0, %v1496
  %1498 = vmatmul.bf16.gmra.mxu0 %v1459
  %v1499 = vpop.f32.mrf.mxu0
  %v1500 = vadd.f32 0.0, %v1499
  %v1501 = vpop.f32.mrf.mxu0
  %v1502 = vadd.f32 0.0, %v1501
  %1503 = vmatmul.bf16.gmra.mxu0 %v1462
  %v1504 = vpop.f32.mrf.mxu0
  %v1505 = vadd.f32 0.0, %v1504
  %v1506 = vpop.f32.mrf.mxu0
  %v1507 = vadd.f32 0.0, %v1506
  %1508 = vmatmul.bf16.gmra.mxu0 %v1465
  %v1509 = vpop.f32.mrf.mxu0
  %v1510 = vadd.f32 0.0, %v1509
  %v1511 = vpop.f32.mrf.mxu0
  %v1512 = vadd.f32 0.0, %v1511
  %1513 = vmatmul.bf16.gmra.mxu0 %v1468
  %v1514 = vpop.f32.mrf.mxu0
  %v1515 = vadd.f32 0.0, %v1514
  %v1516 = vpop.f32.mrf.mxu0
  %v1517 = vadd.f32 0.0, %v1516
  %1518 = vmatmul.bf16.gmra.mxu0 %v1471
  %v1519 = vpop.f32.mrf.mxu0
  %v1520 = vadd.f32 0.0, %v1519
  %v1521 = vpop.f32.mrf.mxu0
  %v1522 = vadd.f32 0.0, %v1521
  %1523 = vmatmul.bf16.gmra.mxu0 %v1474
  %v1524 = vpop.f32.mrf.mxu0
  %v1525 = vadd.f32 0.0, %v1524
  %v1526 = vpop.f32.mrf.mxu0
  %v1527 = vadd.f32 0.0, %v1526
  %1528 = vdwg.mxu0
  %v1545 = vunpack.c.l.b16 %v901
  %v1546 = vunpack.c.l.b16 %v902
  %v1547 = vunpack.c.l.b16 %v903
  %v1548 = vunpack.c.l.b16 %v904
  %v1549 = vunpack.c.l.b16 %v905
  %v1550 = vunpack.c.l.b16 %v906
  %v1551 = vunpack.c.l.b16 %v907
  %v1552 = vunpack.c.l.b16 %v908
  %v1553 = vunpack.c.l.b16 %v909
  %v1554 = vunpack.c.l.b16 %v910
  %v1555 = vunpack.c.l.b16 %v911
  %v1556 = vunpack.c.l.b16 %v912
  %v1557 = vunpack.c.l.b16 %v913
  %v1558 = vunpack.c.l.b16 %v914
  %v1559 = vunpack.c.l.b16 %v915
  %v1560 = vunpack.c.l.b16 %v916
  %v1561 = vpack.c.b16 %v1546, %v1545
  %v1562 = vpack.c.b16 %v1548, %v1547
  %v1563 = vpack.c.b16 %v1550, %v1549
  %v1564 = vpack.c.b16 %v1552, %v1551
  %v1565 = vpack.c.b16 %v1554, %v1553
  %v1566 = vpack.c.b16 %v1556, %v1555
  %v1567 = vpack.c.b16 %v1558, %v1557
  %v1568 = vpack.c.b16 %v1560, %v1559
  %v1570 = vsel %vm427, %v1561, 0
  %v1573 = vsel %vm427, %v1562, 0
  %v1576 = vsel %vm427, %v1563, 0
  %v1579 = vsel %vm427, %v1564, 0
  %v1582 = vsel %vm427, %v1565, 0
  %v1585 = vsel %vm427, %v1566, 0
  %v1588 = vsel %vm427, %v1567, 0
  %v1591 = vsel %vm427, %v1568, 0
  %v1594 = vsel %vm1476, %v917, 0
  %1596 = vmatpush.bf16.msra.mxu0 0
  %1597 = vmatpush.bf16.msra.mxu0 0
  %1598 = vmatpush.bf16.msra.mxu0 0
  %1599 = vmatpush.bf16.msra.mxu0 0
  %1600 = vmatpush.bf16.msra.mxu0 0
  %1601 = vmatpush.bf16.msra.mxu0 0
  %1602 = vmatpush.bf16.msra.mxu0 0
  %1603 = vmatpush.bf16.msra.mxu0 %v1594
  %1604 = vmatmul.bf16.gmra.mxu0 %v1570
  %v1605 = vpop.f32.mrf.mxu0
  %v1606 = vadd.f32 %v1490, %v1605
  %v1607 = vpop.f32.mrf.mxu0
  %v1608 = vadd.f32 %v1492, %v1607
  %1609 = vmatmul.bf16.gmra.mxu0 %v1573
  %v1610 = vpop.f32.mrf.mxu0
  %v1611 = vadd.f32 %v1495, %v1610
  %v1612 = vpop.f32.mrf.mxu0
  %v1613 = vadd.f32 %v1497, %v1612
  %1614 = vmatmul.bf16.gmra.mxu0 %v1576
  %v1615 = vpop.f32.mrf.mxu0
  %v1616 = vadd.f32 %v1500, %v1615
  %v1617 = vpop.f32.mrf.mxu0
  %v1618 = vadd.f32 %v1502, %v1617
  %1619 = vmatmul.bf16.gmra.mxu0 %v1579
  %v1620 = vpop.f32.mrf.mxu0
  %v1621 = vadd.f32 %v1505, %v1620
  %v1622 = vpop.f32.mrf.mxu0
  %v1623 = vadd.f32 %v1507, %v1622
  %1624 = vmatmul.bf16.gmra.mxu0 %v1582
  %v1625 = vpop.f32.mrf.mxu0
  %v1626 = vadd.f32 %v1510, %v1625
  %v1627 = vpop.f32.mrf.mxu0
  %v1628 = vadd.f32 %v1512, %v1627
  %1629 = vmatmul.bf16.gmra.mxu0 %v1585
  %v1630 = vpop.f32.mrf.mxu0
  %v1631 = vadd.f32 %v1515, %v1630
  %v1632 = vpop.f32.mrf.mxu0
  %v1633 = vadd.f32 %v1517, %v1632
  %1634 = vmatmul.bf16.gmra.mxu0 %v1588
  %v1635 = vpop.f32.mrf.mxu0
  %v1636 = vadd.f32 %v1520, %v1635
  %v1637 = vpop.f32.mrf.mxu0
  %v1638 = vadd.f32 %v1522, %v1637
  %1639 = vmatmul.bf16.gmra.mxu0 %v1591
  %v1640 = vpop.f32.mrf.mxu0
  %v1641 = vadd.f32 %v1525, %v1640
  %v1642 = vpop.f32.mrf.mxu0
  %v1643 = vadd.f32 %v1527, %v1642
  %1644 = vdwg.mxu0
  %1645 = vrot.lane.b32.xlu0 %v415, 112
  %v1646 = vpop.permute.xlu0 %1645
  %1647 = vrot.lane.b32.xlu0 %v416, 112
  %v1648 = vpop.permute.xlu0 %1647
  %1649 = vrot.lane.b32.xlu0 %v417, 112
  %v1650 = vpop.permute.xlu0 %1649
  %1651 = vrot.lane.b32.xlu0 %v418, 112
  %v1652 = vpop.permute.xlu0 %1651
  %1653 = vrot.lane.b32.xlu0 %v415, 80
  %v1654 = vpop.permute.xlu0 %1653
  %1655 = vrot.lane.b32.xlu0 %v416, 80
  %v1656 = vpop.permute.xlu0 %1655
  %1657 = vrot.lane.b32.xlu0 %v417, 80
  %v1658 = vpop.permute.xlu0 %1657
  %1659 = vrot.lane.b32.xlu0 %v418, 80
  %v1660 = vpop.permute.xlu0 %1659
  %v1662 = vsel %vm427, %v1646, 0
  %v1665 = vsel %vm427, %v1648, 0
  %v1668 = vsel %vm427, %v1650, 0
  %v1671 = vsel %vm427, %v1652, 0
  %v1674 = vsel %vm427, %v1654, 0
  %v1677 = vsel %vm427, %v1656, 0
  %v1680 = vsel %vm427, %v1658, 0
  %v1683 = vsel %vm427, %v1660, 0
  %1685 = vmatpush.bf16.xpose.msra.mxu0 0
  %1686 = vmatpush.bf16.xpose.msra.mxu0 0
  %1687 = vmatpush.bf16.xpose.msra.mxu0 0
  %1688 = vmatpush.bf16.xpose.msra.mxu0 0
  %1689 = vmatpush.bf16.xpose.msra.mxu0 %v1683
  %1690 = vmatpush.bf16.xpose.msra.mxu0 %v1680
  %1691 = vmatpush.bf16.xpose.msra.mxu0 %v1677
  %1692 = vmatpush.bf16.xpose.msra.mxu0 %v1674
  %1693 = vmatmul.bf16.gmra.mxu0 %v1662
  %v1694 = vpop.f32.mrf.mxu0
  %v1695 = vadd.f32 0.0, %v1694
  %v1696 = vpop.f32.mrf.mxu0
  %v1697 = vadd.f32 0.0, %v1696
  %1698 = vmatmul.bf16.gmra.mxu0 %v1665
  %v1699 = vpop.f32.mrf.mxu0
  %v1700 = vadd.f32 0.0, %v1699
  %v1701 = vpop.f32.mrf.mxu0
  %v1702 = vadd.f32 0.0, %v1701
  %1703 = vmatmul.bf16.gmra.mxu0 %v1668
  %v1704 = vpop.f32.mrf.mxu0
  %v1705 = vadd.f32 0.0, %v1704
  %v1706 = vpop.f32.mrf.mxu0
  %v1707 = vadd.f32 0.0, %v1706
  %1708 = vmatmul.bf16.gmra.mxu0 %v1671
  %v1709 = vpop.f32.mrf.mxu0
  %v1710 = vadd.f32 0.0, %v1709
  %v1711 = vpop.f32.mrf.mxu0
  %v1712 = vadd.f32 0.0, %v1711
  %1713 = vdwg.mxu0
  %1714 = vrot.lane.b32.xlu0 %v497, 112
  %v1715 = vpop.permute.xlu0 %1714
  %1716 = vrot.lane.b32.xlu0 %v498, 112
  %v1717 = vpop.permute.xlu0 %1716
  %1718 = vrot.lane.b32.xlu0 %v499, 112
  %v1719 = vpop.permute.xlu0 %1718
  %1720 = vrot.lane.b32.xlu0 %v500, 112
  %v1721 = vpop.permute.xlu0 %1720
  %1722 = vrot.lane.b32.xlu0 %v497, 80
  %v1723 = vpop.permute.xlu0 %1722
  %1724 = vrot.lane.b32.xlu0 %v498, 80
  %v1725 = vpop.permute.xlu0 %1724
  %1726 = vrot.lane.b32.xlu0 %v499, 80
  %v1727 = vpop.permute.xlu0 %1726
  %1728 = vrot.lane.b32.xlu0 %v500, 80
  %v1729 = vpop.permute.xlu0 %1728
  %v1731 = vsel %vm427, %v1715, 0
  %v1734 = vsel %vm427, %v1717, 0
  %v1737 = vsel %vm427, %v1719, 0
  %v1740 = vsel %vm427, %v1721, 0
  %v1743 = vsel %vm427, %v1723, 0
  %v1746 = vsel %vm427, %v1725, 0
  %v1749 = vsel %vm427, %v1727, 0
  %v1752 = vsel %vm427, %v1729, 0
  %1754 = vmatpush.bf16.xpose.msra.mxu0 0
  %1755 = vmatpush.bf16.xpose.msra.mxu0 0
  %1756 = vmatpush.bf16.xpose.msra.mxu0 0
  %1757 = vmatpush.bf16.xpose.msra.mxu0 0
  %1758 = vmatpush.bf16.xpose.msra.mxu0 %v1752
  %1759 = vmatpush.bf16.xpose.msra.mxu0 %v1749
  %1760 = vmatpush.bf16.xpose.msra.mxu0 %v1746
  %1761 = vmatpush.bf16.xpose.msra.mxu0 %v1743
  %1762 = vmatmul.bf16.gmra.mxu0 %v1731
  %v1763 = vpop.f32.mrf.mxu0
  %v1764 = vadd.f32 0.0, %v1763
  %v1765 = vpop.f32.mrf.mxu0
  %v1766 = vadd.f32 0.0, %v1765
  %1767 = vmatmul.bf16.gmra.mxu0 %v1734
  %v1768 = vpop.f32.mrf.mxu0
  %v1769 = vadd.f32 0.0, %v1768
  %v1770 = vpop.f32.mrf.mxu0
  %v1771 = vadd.f32 0.0, %v1770
  %1772 = vmatmul.bf16.gmra.mxu0 %v1737
  %v1773 = vpop.f32.mrf.mxu0
  %v1774 = vadd.f32 0.0, %v1773
  %v1775 = vpop.f32.mrf.mxu0
  %v1776 = vadd.f32 0.0, %v1775
  %1777 = vmatmul.bf16.gmra.mxu0 %v1740
  %v1778 = vpop.f32.mrf.mxu0
  %v1779 = vadd.f32 0.0, %v1778
  %v1780 = vpop.f32.mrf.mxu0
  %v1781 = vadd.f32 0.0, %v1780
  %1782 = vdwg.mxu0
  %v1783 = vsel %vm562, %v1695, -inf
  %1784 = vmax.xlane.f32.xlu0 %v1783
  %v1785 = vpop.xlane.xlu0 %1784
  %v1786 = vsel %vm562, %v1697, -inf
  %1787 = vmax.xlane.f32.xlu0 %v1786
  %v1788 = vpop.xlane.xlu0 %1787
  %v1789 = vsel %vm562, %v1700, -inf
  %1790 = vmax.xlane.f32.xlu0 %v1789
  %v1791 = vpop.xlane.xlu0 %1790
  %v1792 = vsel %vm562, %v1702, -inf
  %1793 = vmax.xlane.f32.xlu0 %v1792
  %v1794 = vpop.xlane.xlu0 %1793
  %v1795 = vsel %vm562, %v1705, -inf
  %1796 = vmax.xlane.f32.xlu0 %v1795
  %v1797 = vpop.xlane.xlu0 %1796
  %v1798 = vsel %vm562, %v1707, -inf
  %1799 = vmax.xlane.f32.xlu0 %v1798
  %v1800 = vpop.xlane.xlu0 %1799
  %v1801 = vsel %vm562, %v1710, -inf
  %1802 = vmax.xlane.f32.xlu0 %v1801
  %v1803 = vpop.xlane.xlu0 %1802
  %v1804 = vsel %vm562, %v1712, -inf
  %1805 = vmax.xlane.f32.xlu0 %v1804
  %v1806 = vpop.xlane.xlu0 %1805
  %v1807 = vsel %vm562, %v1764, -inf
  %1808 = vmax.xlane.f32.xlu0 %v1807
  %v1809 = vpop.xlane.xlu0 %1808
  %v1810 = vsel %vm562, %v1766, -inf
  %1811 = vmax.xlane.f32.xlu0 %v1810
  %v1812 = vpop.xlane.xlu0 %1811
  %v1813 = vsel %vm562, %v1769, -inf
  %1814 = vmax.xlane.f32.xlu0 %v1813
  %v1815 = vpop.xlane.xlu0 %1814
  %v1816 = vsel %vm562, %v1771, -inf
  %1817 = vmax.xlane.f32.xlu0 %v1816
  %v1818 = vpop.xlane.xlu0 %1817
  %v1819 = vsel %vm562, %v1774, -inf
  %1820 = vmax.xlane.f32.xlu0 %v1819
  %v1821 = vpop.xlane.xlu0 %1820
  %v1822 = vsel %vm562, %v1776, -inf
  %1823 = vmax.xlane.f32.xlu0 %v1822
  %v1824 = vpop.xlane.xlu0 %1823
  %v1825 = vsel %vm562, %v1779, -inf
  %1826 = vmax.xlane.f32.xlu0 %v1825
  %v1827 = vpop.xlane.xlu0 %1826
  %v1828 = vsel %vm562, %v1781, -inf
  %1829 = vmax.xlane.f32.xlu0 %v1828
  %v1830 = vpop.xlane.xlu0 %1829
  %v1831 = vsub.f32 %v1695, %v1785
  %v1832 = vsub.f32 %v1697, %v1788
  %v1833 = vsub.f32 %v1700, %v1791
  %v1834 = vsub.f32 %v1702, %v1794
  %v1835 = vsub.f32 %v1705, %v1797
  %v1836 = vsub.f32 %v1707, %v1800
  %v1837 = vsub.f32 %v1710, %v1803
  %v1838 = vsub.f32 %v1712, %v1806
  %v1839 = vsub.f32 %v1764, %v1809
  %v1840 = vsub.f32 %v1766, %v1812
  %v1841 = vsub.f32 %v1769, %v1815
  %v1842 = vsub.f32 %v1771, %v1818
  %v1843 = vsub.f32 %v1774, %v1821
  %v1844 = vsub.f32 %v1776, %v1824
  %v1845 = vsub.f32 %v1779, %v1827
  %v1846 = vsub.f32 %v1781, %v1830
  %v1847 = vmul.f32 %v1831, 1.442695
  %v1848 = vpow.pop %v1847
  %v1849 = vmul.f32 %v1832, 1.442695
  %v1850 = vpow.pop %v1849
  %v1851 = vmul.f32 %v1833, 1.442695
  %v1852 = vpow.pop %v1851
  %v1853 = vmul.f32 %v1834, 1.442695
  %v1854 = vpow.pop %v1853
  %v1855 = vmul.f32 %v1835, 1.442695
  %v1856 = vpow.pop %v1855
  %v1857 = vmul.f32 %v1836, 1.442695
  %v1858 = vpow.pop %v1857
  %v1859 = vmul.f32 %v1837, 1.442695
  %v1860 = vpow.pop %v1859
  %v1861 = vmul.f32 %v1838, 1.442695
  %v1862 = vpow.pop %v1861
  %v1863 = vmul.f32 %v1839, 1.442695
  %v1864 = vpow.pop %v1863
  %v1865 = vmul.f32 %v1840, 1.442695
  %v1866 = vpow.pop %v1865
  %v1867 = vmul.f32 %v1841, 1.442695
  %v1868 = vpow.pop %v1867
  %v1869 = vmul.f32 %v1842, 1.442695
  %v1870 = vpow.pop %v1869
  %v1871 = vmul.f32 %v1843, 1.442695
  %v1872 = vpow.pop %v1871
  %v1873 = vmul.f32 %v1844, 1.442695
  %v1874 = vpow.pop %v1873
  %v1875 = vmul.f32 %v1845, 1.442695
  %v1876 = vpow.pop %v1875
  %v1877 = vmul.f32 %v1846, 1.442695
  %v1878 = vpow.pop %v1877
  %v1879 = vsel %vm562, %v1848, 0.0
  %1880 = vadd.xlane.f32.xlu0 %v1879
  %v1881 = vpop.xlane.xlu0 %1880
  %v1882 = vsel %vm562, %v1850, 0.0
  %1883 = vadd.xlane.f32.xlu0 %v1882
  %v1884 = vpop.xlane.xlu0 %1883
  %v1885 = vsel %vm562, %v1852, 0.0
  %1886 = vadd.xlane.f32.xlu0 %v1885
  %v1887 = vpop.xlane.xlu0 %1886
  %v1888 = vsel %vm562, %v1854, 0.0
  %1889 = vadd.xlane.f32.xlu0 %v1888
  %v1890 = vpop.xlane.xlu0 %1889
  %v1891 = vsel %vm562, %v1856, 0.0
  %1892 = vadd.xlane.f32.xlu0 %v1891
  %v1893 = vpop.xlane.xlu0 %1892
  %v1894 = vsel %vm562, %v1858, 0.0
  %1895 = vadd.xlane.f32.xlu0 %v1894
  %v1896 = vpop.xlane.xlu0 %1895
  %v1897 = vsel %vm562, %v1860, 0.0
  %1898 = vadd.xlane.f32.xlu0 %v1897
  %v1899 = vpop.xlane.xlu0 %1898
  %v1900 = vsel %vm562, %v1862, 0.0
  %1901 = vadd.xlane.f32.xlu0 %v1900
  %v1902 = vpop.xlane.xlu0 %1901
  %v1903 = vsel %vm562, %v1864, 0.0
  %1904 = vadd.xlane.f32.xlu0 %v1903
  %v1905 = vpop.xlane.xlu0 %1904
  %v1906 = vsel %vm562, %v1866, 0.0
  %1907 = vadd.xlane.f32.xlu0 %v1906
  %v1908 = vpop.xlane.xlu0 %1907
  %v1909 = vsel %vm562, %v1868, 0.0
  %1910 = vadd.xlane.f32.xlu0 %v1909
  %v1911 = vpop.xlane.xlu0 %1910
  %v1912 = vsel %vm562, %v1870, 0.0
  %1913 = vadd.xlane.f32.xlu0 %v1912
  %v1914 = vpop.xlane.xlu0 %1913
  %v1915 = vsel %vm562, %v1872, 0.0
  %1916 = vadd.xlane.f32.xlu0 %v1915
  %v1917 = vpop.xlane.xlu0 %1916
  %v1918 = vsel %vm562, %v1874, 0.0
  %1919 = vadd.xlane.f32.xlu0 %v1918
  %v1920 = vpop.xlane.xlu0 %1919
  %v1921 = vsel %vm562, %v1876, 0.0
  %1922 = vadd.xlane.f32.xlu0 %v1921
  %v1923 = vpop.xlane.xlu0 %1922
  %v1924 = vsel %vm562, %v1878, 0.0
  %1925 = vadd.xlane.f32.xlu0 %v1924
  %v1926 = vpop.xlane.xlu0 %1925
  %v1927 = vrcp.pop %v1881
  %v1928 = vrcp.pop %v1884
  %v1929 = vrcp.pop %v1887
  %v1930 = vrcp.pop %v1890
  %v1931 = vrcp.pop %v1893
  %v1932 = vrcp.pop %v1896
  %v1933 = vrcp.pop %v1899
  %v1934 = vrcp.pop %v1902
  %v1935 = vrcp.pop %v1905
  %v1936 = vrcp.pop %v1908
  %v1937 = vrcp.pop %v1911
  %v1938 = vrcp.pop %v1914
  %v1939 = vrcp.pop %v1917
  %v1940 = vrcp.pop %v1920
  %v1941 = vrcp.pop %v1923
  %v1942 = vrcp.pop %v1926
  %v1943 = vmul.f32 %v1848, %v1927
  %v1944 = vmul.f32 %v1850, %v1928
  %v1945 = vmul.f32 %v1852, %v1929
  %v1946 = vmul.f32 %v1854, %v1930
  %v1947 = vmul.f32 %v1856, %v1931
  %v1948 = vmul.f32 %v1858, %v1932
  %v1949 = vmul.f32 %v1860, %v1933
  %v1950 = vmul.f32 %v1862, %v1934
  %v1951 = vmul.f32 %v1864, %v1935
  %v1952 = vmul.f32 %v1866, %v1936
  %v1953 = vmul.f32 %v1868, %v1937
  %v1954 = vmul.f32 %v1870, %v1938
  %v1955 = vmul.f32 %v1872, %v1939
  %v1956 = vmul.f32 %v1874, %v1940
  %v1957 = vmul.f32 %v1876, %v1941
  %v1958 = vmul.f32 %v1878, %v1942
  %v1959 = vpack.c.bf16 %v1943, %v1943
  %v1960 = vpack.c.bf16 %v1944, %v1944
  %v1961 = vpack.c.bf16 %v1945, %v1945
  %v1962 = vpack.c.bf16 %v1946, %v1946
  %v1963 = vpack.c.bf16 %v1947, %v1947
  %v1964 = vpack.c.bf16 %v1948, %v1948
  %v1965 = vpack.c.bf16 %v1949, %v1949
  %v1966 = vpack.c.bf16 %v1950, %v1950
  %v1967 = vpack.c.bf16 %v1951, %v1951
  %v1968 = vpack.c.bf16 %v1952, %v1952
  %v1969 = vpack.c.bf16 %v1953, %v1953
  %v1970 = vpack.c.bf16 %v1954, %v1954
  %v1971 = vpack.c.bf16 %v1955, %v1955
  %v1972 = vpack.c.bf16 %v1956, %v1956
  %v1973 = vpack.c.bf16 %v1957, %v1957
  %v1974 = vpack.c.bf16 %v1958, %v1958
  %v1983 = vunpack.c.l.b16 %v1959
  %v1984 = vunpack.c.l.b16 %v1960
  %v1985 = vunpack.c.l.b16 %v1961
  %v1986 = vunpack.c.l.b16 %v1962
  %v1987 = vunpack.c.l.b16 %v1963
  %v1988 = vunpack.c.l.b16 %v1964
  %v1989 = vunpack.c.l.b16 %v1965
  %v1990 = vunpack.c.l.b16 %v1966
  %v1991 = vpack.c.b16 %v1984, %v1983
  %v1992 = vpack.c.b16 %v1986, %v1985
  %v1993 = vpack.c.b16 %v1988, %v1987
  %v1994 = vpack.c.b16 %v1990, %v1989
  %1995 = vrot.lane.b32.xlu0 %v415, 48
  %v1996 = vpop.permute.xlu0 %1995
  %1997 = vrot.lane.b32.xlu0 %v416, 48
  %v1998 = vpop.permute.xlu0 %1997
  %1999 = vrot.lane.b32.xlu0 %v417, 48
  %v2000 = vpop.permute.xlu0 %1999
  %2001 = vrot.lane.b32.xlu0 %v418, 48
  %v2002 = vpop.permute.xlu0 %2001
  %v2008 = vsel %vm562, %v1991, 0
  %v2011 = vsel %vm562, %v1992, 0
  %v2014 = vsel %vm562, %v1993, 0
  %v2017 = vsel %vm562, %v1994, 0
  %2019 = vmatpush.bf16.msra.mxu0 0
  %2020 = vmatpush.bf16.msra.mxu0 0
  %2021 = vmatpush.bf16.msra.mxu0 0
  %2022 = vmatpush.bf16.msra.mxu0 0
  %2023 = vmatpush.bf16.msra.mxu0 %v2002
  %2024 = vmatpush.bf16.msra.mxu0 %v2000
  %2025 = vmatpush.bf16.msra.mxu0 %v1998
  %2026 = vmatpush.bf16.msra.mxu0 %v1996
  %2027 = vmatmul.bf16.gmra.mxu0 %v2008
  %v2028 = vpop.f32.mrf.mxu0
  %v2029 = vadd.f32 0.0, %v2028
  %v2030 = vpop.f32.mrf.mxu0
  %v2031 = vadd.f32 0.0, %v2030
  %2032 = vmatmul.bf16.gmra.mxu0 %v2011
  %v2033 = vpop.f32.mrf.mxu0
  %v2034 = vadd.f32 0.0, %v2033
  %v2035 = vpop.f32.mrf.mxu0
  %v2036 = vadd.f32 0.0, %v2035
  %2037 = vmatmul.bf16.gmra.mxu0 %v2014
  %v2038 = vpop.f32.mrf.mxu0
  %v2039 = vadd.f32 0.0, %v2038
  %v2040 = vpop.f32.mrf.mxu0
  %v2041 = vadd.f32 0.0, %v2040
  %2042 = vmatmul.bf16.gmra.mxu0 %v2017
  %v2043 = vpop.f32.mrf.mxu0
  %v2044 = vadd.f32 0.0, %v2043
  %v2045 = vpop.f32.mrf.mxu0
  %v2046 = vadd.f32 0.0, %v2045
  %2047 = vdwg.mxu0
  %v2056 = vunpack.c.l.b16 %v1967
  %v2057 = vunpack.c.l.b16 %v1968
  %v2058 = vunpack.c.l.b16 %v1969
  %v2059 = vunpack.c.l.b16 %v1970
  %v2060 = vunpack.c.l.b16 %v1971
  %v2061 = vunpack.c.l.b16 %v1972
  %v2062 = vunpack.c.l.b16 %v1973
  %v2063 = vunpack.c.l.b16 %v1974
  %v2064 = vpack.c.b16 %v2057, %v2056
  %v2065 = vpack.c.b16 %v2059, %v2058
  %v2066 = vpack.c.b16 %v2061, %v2060
  %v2067 = vpack.c.b16 %v2063, %v2062
  %2068 = vrot.lane.b32.xlu0 %v497, 48
  %v2069 = vpop.permute.xlu0 %2068
  %2070 = vrot.lane.b32.xlu0 %v498, 48
  %v2071 = vpop.permute.xlu0 %2070
  %2072 = vrot.lane.b32.xlu0 %v499, 48
  %v2073 = vpop.permute.xlu0 %2072
  %2074 = vrot.lane.b32.xlu0 %v500, 48
  %v2075 = vpop.permute.xlu0 %2074
  %v2081 = vsel %vm562, %v2064, 0
  %v2084 = vsel %vm562, %v2065, 0
  %v2087 = vsel %vm562, %v2066, 0
  %v2090 = vsel %vm562, %v2067, 0
  %2092 = vmatpush.bf16.msra.mxu0 0
  %2093 = vmatpush.bf16.msra.mxu0 0
  %2094 = vmatpush.bf16.msra.mxu0 0
  %2095 = vmatpush.bf16.msra.mxu0 0
  %2096 = vmatpush.bf16.msra.mxu0 %v2075
  %2097 = vmatpush.bf16.msra.mxu0 %v2073
  %2098 = vmatpush.bf16.msra.mxu0 %v2071
  %2099 = vmatpush.bf16.msra.mxu0 %v2069
  %2100 = vmatmul.bf16.gmra.mxu0 %v2081
  %v2101 = vpop.f32.mrf.mxu0
  %v2102 = vadd.f32 0.0, %v2101
  %v2103 = vpop.f32.mrf.mxu0
  %v2104 = vadd.f32 0.0, %v2103
  %2105 = vmatmul.bf16.gmra.mxu0 %v2084
  %v2106 = vpop.f32.mrf.mxu0
  %v2107 = vadd.f32 0.0, %v2106
  %v2108 = vpop.f32.mrf.mxu0
  %v2109 = vadd.f32 0.0, %v2108
  %2110 = vmatmul.bf16.gmra.mxu0 %v2087
  %v2111 = vpop.f32.mrf.mxu0
  %v2112 = vadd.f32 0.0, %v2111
  %v2113 = vpop.f32.mrf.mxu0
  %v2114 = vadd.f32 0.0, %v2113
  %2115 = vmatmul.bf16.gmra.mxu0 %v2090
  %v2116 = vpop.f32.mrf.mxu0
  %v2117 = vadd.f32 0.0, %v2116
  %v2118 = vpop.f32.mrf.mxu0
  %v2119 = vadd.f32 0.0, %v2118
  %2120 = vdwg.mxu0
  %v2121 = vpack.c.bf16 %v2029, %v2029
  %v2122 = vpack.c.bf16 %v2031, %v2031
  %v2123 = vpack.c.bf16 %v2034, %v2034
  %v2124 = vpack.c.bf16 %v2036, %v2036
  %v2125 = vpack.c.bf16 %v2039, %v2039
  %v2126 = vpack.c.bf16 %v2041, %v2041
  %v2127 = vpack.c.bf16 %v2044, %v2044
  %v2128 = vpack.c.bf16 %v2046, %v2046
  %v2129 = vpack.c.bf16 %v2102, %v2102
  %v2130 = vpack.c.bf16 %v2104, %v2104
  %v2131 = vpack.c.bf16 %v2107, %v2107
  %v2132 = vpack.c.bf16 %v2109, %v2109
  %v2133 = vpack.c.bf16 %v2112, %v2112
  %v2134 = vpack.c.bf16 %v2114, %v2114
  %v2135 = vpack.c.bf16 %v2117, %v2117
  %v2136 = vpack.c.bf16 %v2119, %v2119
  %s2137 = scalar_lea.vmem %s6, 8
  %v2138 = vld [vmem:[%s2137] sm:$0xf]
  %v2155 = vunpack.c.l.b16 %v2121
  %v2156 = vunpack.c.l.b16 %v2122
  %v2157 = vunpack.c.l.b16 %v2123
  %v2158 = vunpack.c.l.b16 %v2124
  %v2159 = vunpack.c.l.b16 %v2125
  %v2160 = vunpack.c.l.b16 %v2126
  %v2161 = vunpack.c.l.b16 %v2127
  %v2162 = vunpack.c.l.b16 %v2128
  %v2163 = vunpack.c.l.b16 %v2129
  %v2164 = vunpack.c.l.b16 %v2130
  %v2165 = vunpack.c.l.b16 %v2131
  %v2166 = vunpack.c.l.b16 %v2132
  %v2167 = vunpack.c.l.b16 %v2133
  %v2168 = vunpack.c.l.b16 %v2134
  %v2169 = vunpack.c.l.b16 %v2135
  %v2170 = vunpack.c.l.b16 %v2136
  %v2171 = vpack.c.b16 %v2156, %v2155
  %v2172 = vpack.c.b16 %v2158, %v2157
  %v2173 = vpack.c.b16 %v2160, %v2159
  %v2174 = vpack.c.b16 %v2162, %v2161
  %v2175 = vpack.c.b16 %v2164, %v2163
  %v2176 = vpack.c.b16 %v2166, %v2165
  %v2177 = vpack.c.b16 %v2168, %v2167
  %v2178 = vpack.c.b16 %v2170, %v2169
  %v2180 = vsel %vm427, %v2171, 0
  %v2183 = vsel %vm427, %v2172, 0
  %v2186 = vsel %vm427, %v2173, 0
  %v2189 = vsel %vm427, %v2174, 0
  %v2192 = vsel %vm427, %v2175, 0
  %v2195 = vsel %vm427, %v2176, 0
  %v2198 = vsel %vm427, %v2177, 0
  %v2201 = vsel %vm427, %v2178, 0
  %v2204 = vsel %vm1476, %v2138, 0
  %2206 = vmatpush.bf16.msra.mxu0 0
  %2207 = vmatpush.bf16.msra.mxu0 0
  %2208 = vmatpush.bf16.msra.mxu0 0
  %2209 = vmatpush.bf16.msra.mxu0 0
  %2210 = vmatpush.bf16.msra.mxu0 0
  %2211 = vmatpush.bf16.msra.mxu0 0
  %2212 = vmatpush.bf16.msra.mxu0 0
  %2213 = vmatpush.bf16.msra.mxu0 %v2204
  %2214 = vmatmul.bf16.gmra.mxu0 %v2180
  %v2215 = vpop.f32.mrf.mxu0
  %v2216 = vadd.f32 0.0, %v2215
  %v2217 = vpop.f32.mrf.mxu0
  %v2218 = vadd.f32 0.0, %v2217
  %2219 = vmatmul.bf16.gmra.mxu0 %v2183
  %v2220 = vpop.f32.mrf.mxu0
  %v2221 = vadd.f32 0.0, %v2220
  %v2222 = vpop.f32.mrf.mxu0
  %v2223 = vadd.f32 0.0, %v2222
  %2224 = vmatmul.bf16.gmra.mxu0 %v2186
  %v2225 = vpop.f32.mrf.mxu0
  %v2226 = vadd.f32 0.0, %v2225
  %v2227 = vpop.f32.mrf.mxu0
  %v2228 = vadd.f32 0.0, %v2227
  %2229 = vmatmul.bf16.gmra.mxu0 %v2189
  %v2230 = vpop.f32.mrf.mxu0
  %v2231 = vadd.f32 0.0, %v2230
  %v2232 = vpop.f32.mrf.mxu0
  %v2233 = vadd.f32 0.0, %v2232
  %2234 = vmatmul.bf16.gmra.mxu0 %v2192
  %v2235 = vpop.f32.mrf.mxu0
  %v2236 = vadd.f32 0.0, %v2235
  %v2237 = vpop.f32.mrf.mxu0
  %v2238 = vadd.f32 0.0, %v2237
  %2239 = vmatmul.bf16.gmra.mxu0 %v2195
  %v2240 = vpop.f32.mrf.mxu0
  %v2241 = vadd.f32 0.0, %v2240
  %v2242 = vpop.f32.mrf.mxu0
  %v2243 = vadd.f32 0.0, %v2242
  %2244 = vmatmul.bf16.gmra.mxu0 %v2198
  %v2245 = vpop.f32.mrf.mxu0
  %v2246 = vadd.f32 0.0, %v2245
  %v2247 = vpop.f32.mrf.mxu0
  %v2248 = vadd.f32 0.0, %v2247
  %2249 = vmatmul.bf16.gmra.mxu0 %v2201
  %v2250 = vpop.f32.mrf.mxu0
  %v2251 = vadd.f32 0.0, %v2250
  %v2252 = vpop.f32.mrf.mxu0
  %v2253 = vadd.f32 0.0, %v2252
  %2254 = vdwg.mxu0
  %v2255 = vadd.f32 %v1606, %v2216
  %v2256 = vadd.f32 %v1608, %v2218
  %v2257 = vadd.f32 %v1611, %v2221
  %v2258 = vadd.f32 %v1613, %v2223
  %v2259 = vadd.f32 %v1616, %v2226
  %v2260 = vadd.f32 %v1618, %v2228
  %v2261 = vadd.f32 %v1621, %v2231
  %v2262 = vadd.f32 %v1623, %v2233
  %v2263 = vadd.f32 %v1626, %v2236
  %v2264 = vadd.f32 %v1628, %v2238
  %v2265 = vadd.f32 %v1631, %v2241
  %v2266 = vadd.f32 %v1633, %v2243
  %v2267 = vadd.f32 %v1636, %v2246
  %v2268 = vadd.f32 %v1638, %v2248
  %v2269 = vadd.f32 %v1641, %v2251
  %v2270 = vadd.f32 %v1643, %v2253
  %2271 = vrot.lane.b32.xlu0 %v415, 104
  %v2272 = vpop.permute.xlu0 %2271
  %2273 = vrot.lane.b32.xlu0 %v416, 104
  %v2274 = vpop.permute.xlu0 %2273
  %2275 = vrot.lane.b32.xlu0 %v417, 104
  %v2276 = vpop.permute.xlu0 %2275
  %2277 = vrot.lane.b32.xlu0 %v418, 104
  %v2278 = vpop.permute.xlu0 %2277
  %2279 = vrot.lane.b32.xlu0 %v415, 72
  %v2280 = vpop.permute.xlu0 %2279
  %2281 = vrot.lane.b32.xlu0 %v416, 72
  %v2282 = vpop.permute.xlu0 %2281
  %2283 = vrot.lane.b32.xlu0 %v417, 72
  %v2284 = vpop.permute.xlu0 %2283
  %2285 = vrot.lane.b32.xlu0 %v418, 72
  %v2286 = vpop.permute.xlu0 %2285
  %v2288 = vsel %vm427, %v2272, 0
  %v2291 = vsel %vm427, %v2274, 0
  %v2294 = vsel %vm427, %v2276, 0
  %v2297 = vsel %vm427, %v2278, 0
  %v2300 = vsel %vm427, %v2280, 0
  %v2303 = vsel %vm427, %v2282, 0
  %v2306 = vsel %vm427, %v2284, 0
  %v2309 = vsel %vm427, %v2286, 0
  %2311 = vmatpush.bf16.xpose.msra.mxu0 0
  %2312 = vmatpush.bf16.xpose.msra.mxu0 0
  %2313 = vmatpush.bf16.xpose.msra.mxu0 0
  %2314 = vmatpush.bf16.xpose.msra.mxu0 0
  %2315 = vmatpush.bf16.xpose.msra.mxu0 %v2309
  %2316 = vmatpush.bf16.xpose.msra.mxu0 %v2306
  %2317 = vmatpush.bf16.xpose.msra.mxu0 %v2303
  %2318 = vmatpush.bf16.xpose.msra.mxu0 %v2300
  %2319 = vmatmul.bf16.gmra.mxu0 %v2288
  %v2320 = vpop.f32.mrf.mxu0
  %v2321 = vadd.f32 0.0, %v2320
  %v2322 = vpop.f32.mrf.mxu0
  %v2323 = vadd.f32 0.0, %v2322
  %2324 = vmatmul.bf16.gmra.mxu0 %v2291
  %v2325 = vpop.f32.mrf.mxu0
  %v2326 = vadd.f32 0.0, %v2325
  %v2327 = vpop.f32.mrf.mxu0
  %v2328 = vadd.f32 0.0, %v2327
  %2329 = vmatmul.bf16.gmra.mxu0 %v2294
  %v2330 = vpop.f32.mrf.mxu0
  %v2331 = vadd.f32 0.0, %v2330
  %v2332 = vpop.f32.mrf.mxu0
  %v2333 = vadd.f32 0.0, %v2332
  %2334 = vmatmul.bf16.gmra.mxu0 %v2297
  %v2335 = vpop.f32.mrf.mxu0
  %v2336 = vadd.f32 0.0, %v2335
  %v2337 = vpop.f32.mrf.mxu0
  %v2338 = vadd.f32 0.0, %v2337
  %2339 = vdwg.mxu0
  %2340 = vrot.lane.b32.xlu0 %v497, 104
  %v2341 = vpop.permute.xlu0 %2340
  %2342 = vrot.lane.b32.xlu0 %v498, 104
  %v2343 = vpop.permute.xlu0 %2342
  %2344 = vrot.lane.b32.xlu0 %v499, 104
  %v2345 = vpop.permute.xlu0 %2344
  %2346 = vrot.lane.b32.xlu0 %v500, 104
  %v2347 = vpop.permute.xlu0 %2346
  %2348 = vrot.lane.b32.xlu0 %v497, 72
  %v2349 = vpop.permute.xlu0 %2348
  %2350 = vrot.lane.b32.xlu0 %v498, 72
  %v2351 = vpop.permute.xlu0 %2350
  %2352 = vrot.lane.b32.xlu0 %v499, 72
  %v2353 = vpop.permute.xlu0 %2352
  %2354 = vrot.lane.b32.xlu0 %v500, 72
  %v2355 = vpop.permute.xlu0 %2354
  %v2357 = vsel %vm427, %v2341, 0
  %v2360 = vsel %vm427, %v2343, 0
  %v2363 = vsel %vm427, %v2345, 0
  %v2366 = vsel %vm427, %v2347, 0
  %v2369 = vsel %vm427, %v2349, 0
  %v2372 = vsel %vm427, %v2351, 0
  %v2375 = vsel %vm427, %v2353, 0
  %v2378 = vsel %vm427, %v2355, 0
  %2380 = vmatpush.bf16.xpose.msra.mxu0 0
  %2381 = vmatpush.bf16.xpose.msra.mxu0 0
  %2382 = vmatpush.bf16.xpose.msra.mxu0 0
  %2383 = vmatpush.bf16.xpose.msra.mxu0 0
  %2384 = vmatpush.bf16.xpose.msra.mxu0 %v2378
  %2385 = vmatpush.bf16.xpose.msra.mxu0 %v2375
  %2386 = vmatpush.bf16.xpose.msra.mxu0 %v2372
  %2387 = vmatpush.bf16.xpose.msra.mxu0 %v2369
  %2388 = vmatmul.bf16.gmra.mxu0 %v2357
  %v2389 = vpop.f32.mrf.mxu0
  %v2390 = vadd.f32 0.0, %v2389
  %v2391 = vpop.f32.mrf.mxu0
  %v2392 = vadd.f32 0.0, %v2391
  %2393 = vmatmul.bf16.gmra.mxu0 %v2360
  %v2394 = vpop.f32.mrf.mxu0
  %v2395 = vadd.f32 0.0, %v2394
  %v2396 = vpop.f32.mrf.mxu0
  %v2397 = vadd.f32 0.0, %v2396
  %2398 = vmatmul.bf16.gmra.mxu0 %v2363
  %v2399 = vpop.f32.mrf.mxu0
  %v2400 = vadd.f32 0.0, %v2399
  %v2401 = vpop.f32.mrf.mxu0
  %v2402 = vadd.f32 0.0, %v2401
  %2403 = vmatmul.bf16.gmra.mxu0 %v2366
  %v2404 = vpop.f32.mrf.mxu0
  %v2405 = vadd.f32 0.0, %v2404
  %v2406 = vpop.f32.mrf.mxu0
  %v2407 = vadd.f32 0.0, %v2406
  %2408 = vdwg.mxu0
  %v2409 = vsel %vm562, %v2321, -inf
  %2410 = vmax.xlane.f32.xlu0 %v2409
  %v2411 = vpop.xlane.xlu0 %2410
  %v2412 = vsel %vm562, %v2323, -inf
  %2413 = vmax.xlane.f32.xlu0 %v2412
  %v2414 = vpop.xlane.xlu0 %2413
  %v2415 = vsel %vm562, %v2326, -inf
  %2416 = vmax.xlane.f32.xlu0 %v2415
  %v2417 = vpop.xlane.xlu0 %2416
  %v2418 = vsel %vm562, %v2328, -inf
  %2419 = vmax.xlane.f32.xlu0 %v2418
  %v2420 = vpop.xlane.xlu0 %2419
  %v2421 = vsel %vm562, %v2331, -inf
  %2422 = vmax.xlane.f32.xlu0 %v2421
  %v2423 = vpop.xlane.xlu0 %2422
  %v2424 = vsel %vm562, %v2333, -inf
  %2425 = vmax.xlane.f32.xlu0 %v2424
  %v2426 = vpop.xlane.xlu0 %2425
  %v2427 = vsel %vm562, %v2336, -inf
  %2428 = vmax.xlane.f32.xlu0 %v2427
  %v2429 = vpop.xlane.xlu0 %2428
  %v2430 = vsel %vm562, %v2338, -inf
  %2431 = vmax.xlane.f32.xlu0 %v2430
  %v2432 = vpop.xlane.xlu0 %2431
  %v2433 = vsel %vm562, %v2390, -inf
  %2434 = vmax.xlane.f32.xlu0 %v2433
  %v2435 = vpop.xlane.xlu0 %2434
  %v2436 = vsel %vm562, %v2392, -inf
  %2437 = vmax.xlane.f32.xlu0 %v2436
  %v2438 = vpop.xlane.xlu0 %2437
  %v2439 = vsel %vm562, %v2395, -inf
  %2440 = vmax.xlane.f32.xlu0 %v2439
  %v2441 = vpop.xlane.xlu0 %2440
  %v2442 = vsel %vm562, %v2397, -inf
  %2443 = vmax.xlane.f32.xlu0 %v2442
  %v2444 = vpop.xlane.xlu0 %2443
  %v2445 = vsel %vm562, %v2400, -inf
  %2446 = vmax.xlane.f32.xlu0 %v2445
  %v2447 = vpop.xlane.xlu0 %2446
  %v2448 = vsel %vm562, %v2402, -inf
  %2449 = vmax.xlane.f32.xlu0 %v2448
  %v2450 = vpop.xlane.xlu0 %2449
  %v2451 = vsel %vm562, %v2405, -inf
  %2452 = vmax.xlane.f32.xlu0 %v2451
  %v2453 = vpop.xlane.xlu0 %2452
  %v2454 = vsel %vm562, %v2407, -inf
  %2455 = vmax.xlane.f32.xlu0 %v2454
  %v2456 = vpop.xlane.xlu0 %2455
  %v2457 = vsub.f32 %v2321, %v2411
  %v2458 = vsub.f32 %v2323, %v2414
  %v2459 = vsub.f32 %v2326, %v2417
  %v2460 = vsub.f32 %v2328, %v2420
  %v2461 = vsub.f32 %v2331, %v2423
  %v2462 = vsub.f32 %v2333, %v2426
  %v2463 = vsub.f32 %v2336, %v2429
  %v2464 = vsub.f32 %v2338, %v2432
  %v2465 = vsub.f32 %v2390, %v2435
  %v2466 = vsub.f32 %v2392, %v2438
  %v2467 = vsub.f32 %v2395, %v2441
  %v2468 = vsub.f32 %v2397, %v2444
  %v2469 = vsub.f32 %v2400, %v2447
  %v2470 = vsub.f32 %v2402, %v2450
  %v2471 = vsub.f32 %v2405, %v2453
  %v2472 = vsub.f32 %v2407, %v2456
  %v2473 = vmul.f32 %v2457, 1.442695
  %v2474 = vpow.pop %v2473
  %v2475 = vmul.f32 %v2458, 1.442695
  %v2476 = vpow.pop %v2475
  %v2477 = vmul.f32 %v2459, 1.442695
  %v2478 = vpow.pop %v2477
  %v2479 = vmul.f32 %v2460, 1.442695
  %v2480 = vpow.pop %v2479
  %v2481 = vmul.f32 %v2461, 1.442695
  %v2482 = vpow.pop %v2481
  %v2483 = vmul.f32 %v2462, 1.442695
  %v2484 = vpow.pop %v2483
  %v2485 = vmul.f32 %v2463, 1.442695
  %v2486 = vpow.pop %v2485
  %v2487 = vmul.f32 %v2464, 1.442695
  %v2488 = vpow.pop %v2487
  %v2489 = vmul.f32 %v2465, 1.442695
  %v2490 = vpow.pop %v2489
  %v2491 = vmul.f32 %v2466, 1.442695
  %v2492 = vpow.pop %v2491
  %v2493 = vmul.f32 %v2467, 1.442695
  %v2494 = vpow.pop %v2493
  %v2495 = vmul.f32 %v2468, 1.442695
  %v2496 = vpow.pop %v2495
  %v2497 = vmul.f32 %v2469, 1.442695
  %v2498 = vpow.pop %v2497
  %v2499 = vmul.f32 %v2470, 1.442695
  %v2500 = vpow.pop %v2499
  %v2501 = vmul.f32 %v2471, 1.442695
  %v2502 = vpow.pop %v2501
  %v2503 = vmul.f32 %v2472, 1.442695
  %v2504 = vpow.pop %v2503
  %v2505 = vsel %vm562, %v2474, 0.0
  %2506 = vadd.xlane.f32.xlu0 %v2505
  %v2507 = vpop.xlane.xlu0 %2506
  %v2508 = vsel %vm562, %v2476, 0.0
  %2509 = vadd.xlane.f32.xlu0 %v2508
  %v2510 = vpop.xlane.xlu0 %2509
  %v2511 = vsel %vm562, %v2478, 0.0
  %2512 = vadd.xlane.f32.xlu0 %v2511
  %v2513 = vpop.xlane.xlu0 %2512
  %v2514 = vsel %vm562, %v2480, 0.0
  %2515 = vadd.xlane.f32.xlu0 %v2514
  %v2516 = vpop.xlane.xlu0 %2515
  %v2517 = vsel %vm562, %v2482, 0.0
  %2518 = vadd.xlane.f32.xlu0 %v2517
  %v2519 = vpop.xlane.xlu0 %2518
  %v2520 = vsel %vm562, %v2484, 0.0
  %2521 = vadd.xlane.f32.xlu0 %v2520
  %v2522 = vpop.xlane.xlu0 %2521
  %v2523 = vsel %vm562, %v2486, 0.0
  %2524 = vadd.xlane.f32.xlu0 %v2523
  %v2525 = vpop.xlane.xlu0 %2524
  %v2526 = vsel %vm562, %v2488, 0.0
  %2527 = vadd.xlane.f32.xlu0 %v2526
  %v2528 = vpop.xlane.xlu0 %2527
  %v2529 = vsel %vm562, %v2490, 0.0
  %2530 = vadd.xlane.f32.xlu0 %v2529
  %v2531 = vpop.xlane.xlu0 %2530
  %v2532 = vsel %vm562, %v2492, 0.0
  %2533 = vadd.xlane.f32.xlu0 %v2532
  %v2534 = vpop.xlane.xlu0 %2533
  %v2535 = vsel %vm562, %v2494, 0.0
  %2536 = vadd.xlane.f32.xlu0 %v2535
  %v2537 = vpop.xlane.xlu0 %2536
  %v2538 = vsel %vm562, %v2496, 0.0
  %2539 = vadd.xlane.f32.xlu0 %v2538
  %v2540 = vpop.xlane.xlu0 %2539
  %v2541 = vsel %vm562, %v2498, 0.0
  %2542 = vadd.xlane.f32.xlu0 %v2541
  %v2543 = vpop.xlane.xlu0 %2542
  %v2544 = vsel %vm562, %v2500, 0.0
  %2545 = vadd.xlane.f32.xlu0 %v2544
  %v2546 = vpop.xlane.xlu0 %2545
  %v2547 = vsel %vm562, %v2502, 0.0
  %2548 = vadd.xlane.f32.xlu0 %v2547
  %v2549 = vpop.xlane.xlu0 %2548
  %v2550 = vsel %vm562, %v2504, 0.0
  %2551 = vadd.xlane.f32.xlu0 %v2550
  %v2552 = vpop.xlane.xlu0 %2551
  %v2553 = vrcp.pop %v2507
  %v2554 = vrcp.pop %v2510
  %v2555 = vrcp.pop %v2513
  %v2556 = vrcp.pop %v2516
  %v2557 = vrcp.pop %v2519
  %v2558 = vrcp.pop %v2522
  %v2559 = vrcp.pop %v2525
  %v2560 = vrcp.pop %v2528
  %v2561 = vrcp.pop %v2531
  %v2562 = vrcp.pop %v2534
  %v2563 = vrcp.pop %v2537
  %v2564 = vrcp.pop %v2540
  %v2565 = vrcp.pop %v2543
  %v2566 = vrcp.pop %v2546
  %v2567 = vrcp.pop %v2549
  %v2568 = vrcp.pop %v2552
  %v2569 = vmul.f32 %v2474, %v2553
  %v2570 = vmul.f32 %v2476, %v2554
  %v2571 = vmul.f32 %v2478, %v2555
  %v2572 = vmul.f32 %v2480, %v2556
  %v2573 = vmul.f32 %v2482, %v2557
  %v2574 = vmul.f32 %v2484, %v2558
  %v2575 = vmul.f32 %v2486, %v2559
  %v2576 = vmul.f32 %v2488, %v2560
  %v2577 = vmul.f32 %v2490, %v2561
  %v2578 = vmul.f32 %v2492, %v2562
  %v2579 = vmul.f32 %v2494, %v2563
  %v2580 = vmul.f32 %v2496, %v2564
  %v2581 = vmul.f32 %v2498, %v2565
  %v2582 = vmul.f32 %v2500, %v2566
  %v2583 = vmul.f32 %v2502, %v2567
  %v2584 = vmul.f32 %v2504, %v2568
  %v2585 = vpack.c.bf16 %v2569, %v2569
  %v2586 = vpack.c.bf16 %v2570, %v2570
  %v2587 = vpack.c.bf16 %v2571, %v2571
  %v2588 = vpack.c.bf16 %v2572, %v2572
  %v2589 = vpack.c.bf16 %v2573, %v2573
  %v2590 = vpack.c.bf16 %v2574, %v2574
  %v2591 = vpack.c.bf16 %v2575, %v2575
  %v2592 = vpack.c.bf16 %v2576, %v2576
  %v2593 = vpack.c.bf16 %v2577, %v2577
  %v2594 = vpack.c.bf16 %v2578, %v2578
  %v2595 = vpack.c.bf16 %v2579, %v2579
  %v2596 = vpack.c.bf16 %v2580, %v2580
  %v2597 = vpack.c.bf16 %v2581, %v2581
  %v2598 = vpack.c.bf16 %v2582, %v2582
  %v2599 = vpack.c.bf16 %v2583, %v2583
  %v2600 = vpack.c.bf16 %v2584, %v2584
  %v2609 = vunpack.c.l.b16 %v2585
  %v2610 = vunpack.c.l.b16 %v2586
  %v2611 = vunpack.c.l.b16 %v2587
  %v2612 = vunpack.c.l.b16 %v2588
  %v2613 = vunpack.c.l.b16 %v2589
  %v2614 = vunpack.c.l.b16 %v2590
  %v2615 = vunpack.c.l.b16 %v2591
  %v2616 = vunpack.c.l.b16 %v2592
  %v2617 = vpack.c.b16 %v2610, %v2609
  %v2618 = vpack.c.b16 %v2612, %v2611
  %v2619 = vpack.c.b16 %v2614, %v2613
  %v2620 = vpack.c.b16 %v2616, %v2615
  %2621 = vrot.lane.b32.xlu0 %v415, 40
  %v2622 = vpop.permute.xlu0 %2621
  %2623 = vrot.lane.b32.xlu0 %v416, 40
  %v2624 = vpop.permute.xlu0 %2623
  %2625 = vrot.lane.b32.xlu0 %v417, 40
  %v2626 = vpop.permute.xlu0 %2625
  %2627 = vrot.lane.b32.xlu0 %v418, 40
  %v2628 = vpop.permute.xlu0 %2627
  %v2634 = vsel %vm562, %v2617, 0
  %v2637 = vsel %vm562, %v2618, 0
  %v2640 = vsel %vm562, %v2619, 0
  %v2643 = vsel %vm562, %v2620, 0
  %2645 = vmatpush.bf16.msra.mxu0 0
  %2646 = vmatpush.bf16.msra.mxu0 0
  %2647 = vmatpush.bf16.msra.mxu0 0
  %2648 = vmatpush.bf16.msra.mxu0 0
  %2649 = vmatpush.bf16.msra.mxu0 %v2628
  %2650 = vmatpush.bf16.msra.mxu0 %v2626
  %2651 = vmatpush.bf16.msra.mxu0 %v2624
  %2652 = vmatpush.bf16.msra.mxu0 %v2622
  %2653 = vmatmul.bf16.gmra.mxu0 %v2634
  %v2654 = vpop.f32.mrf.mxu0
  %v2655 = vadd.f32 0.0, %v2654
  %v2656 = vpop.f32.mrf.mxu0
  %v2657 = vadd.f32 0.0, %v2656
  %2658 = vmatmul.bf16.gmra.mxu0 %v2637
  %v2659 = vpop.f32.mrf.mxu0
  %v2660 = vadd.f32 0.0, %v2659
  %v2661 = vpop.f32.mrf.mxu0
  %v2662 = vadd.f32 0.0, %v2661
  %2663 = vmatmul.bf16.gmra.mxu0 %v2640
  %v2664 = vpop.f32.mrf.mxu0
  %v2665 = vadd.f32 0.0, %v2664
  %v2666 = vpop.f32.mrf.mxu0
  %v2667 = vadd.f32 0.0, %v2666
  %2668 = vmatmul.bf16.gmra.mxu0 %v2643
  %v2669 = vpop.f32.mrf.mxu0
  %v2670 = vadd.f32 0.0, %v2669
  %v2671 = vpop.f32.mrf.mxu0
  %v2672 = vadd.f32 0.0, %v2671
  %2673 = vdwg.mxu0
  %v2682 = vunpack.c.l.b16 %v2593
  %v2683 = vunpack.c.l.b16 %v2594
  %v2684 = vunpack.c.l.b16 %v2595
  %v2685 = vunpack.c.l.b16 %v2596
  %v2686 = vunpack.c.l.b16 %v2597
  %v2687 = vunpack.c.l.b16 %v2598
  %v2688 = vunpack.c.l.b16 %v2599
  %v2689 = vunpack.c.l.b16 %v2600
  %v2690 = vpack.c.b16 %v2683, %v2682
  %v2691 = vpack.c.b16 %v2685, %v2684
  %v2692 = vpack.c.b16 %v2687, %v2686
  %v2693 = vpack.c.b16 %v2689, %v2688
  %2694 = vrot.lane.b32.xlu0 %v497, 40
  %v2695 = vpop.permute.xlu0 %2694
  %2696 = vrot.lane.b32.xlu0 %v498, 40
  %v2697 = vpop.permute.xlu0 %2696
  %2698 = vrot.lane.b32.xlu0 %v499, 40
  %v2699 = vpop.permute.xlu0 %2698
  %2700 = vrot.lane.b32.xlu0 %v500, 40
  %v2701 = vpop.permute.xlu0 %2700
  %v2707 = vsel %vm562, %v2690, 0
  %v2710 = vsel %vm562, %v2691, 0
  %v2713 = vsel %vm562, %v2692, 0
  %v2716 = vsel %vm562, %v2693, 0
  %2718 = vmatpush.bf16.msra.mxu0 0
  %2719 = vmatpush.bf16.msra.mxu0 0
  %2720 = vmatpush.bf16.msra.mxu0 0
  %2721 = vmatpush.bf16.msra.mxu0 0
  %2722 = vmatpush.bf16.msra.mxu0 %v2701
  %2723 = vmatpush.bf16.msra.mxu0 %v2699
  %2724 = vmatpush.bf16.msra.mxu0 %v2697
  %2725 = vmatpush.bf16.msra.mxu0 %v2695
  %2726 = vmatmul.bf16.gmra.mxu0 %v2707
  %v2727 = vpop.f32.mrf.mxu0
  %v2728 = vadd.f32 0.0, %v2727
  %v2729 = vpop.f32.mrf.mxu0
  %v2730 = vadd.f32 0.0, %v2729
  %2731 = vmatmul.bf16.gmra.mxu0 %v2710
  %v2732 = vpop.f32.mrf.mxu0
  %v2733 = vadd.f32 0.0, %v2732
  %v2734 = vpop.f32.mrf.mxu0
  %v2735 = vadd.f32 0.0, %v2734
  %2736 = vmatmul.bf16.gmra.mxu0 %v2713
  %v2737 = vpop.f32.mrf.mxu0
  %v2738 = vadd.f32 0.0, %v2737
  %v2739 = vpop.f32.mrf.mxu0
  %v2740 = vadd.f32 0.0, %v2739
  %2741 = vmatmul.bf16.gmra.mxu0 %v2716
  %v2742 = vpop.f32.mrf.mxu0
  %v2743 = vadd.f32 0.0, %v2742
  %v2744 = vpop.f32.mrf.mxu0
  %v2745 = vadd.f32 0.0, %v2744
  %2746 = vdwg.mxu0
  %v2747 = vpack.c.bf16 %v2655, %v2655
  %v2748 = vpack.c.bf16 %v2657, %v2657
  %v2749 = vpack.c.bf16 %v2660, %v2660
  %v2750 = vpack.c.bf16 %v2662, %v2662
  %v2751 = vpack.c.bf16 %v2665, %v2665
  %v2752 = vpack.c.bf16 %v2667, %v2667
  %v2753 = vpack.c.bf16 %v2670, %v2670
  %v2754 = vpack.c.bf16 %v2672, %v2672
  %v2755 = vpack.c.bf16 %v2728, %v2728
  %v2756 = vpack.c.bf16 %v2730, %v2730
  %v2757 = vpack.c.bf16 %v2733, %v2733
  %v2758 = vpack.c.bf16 %v2735, %v2735
  %v2759 = vpack.c.bf16 %v2738, %v2738
  %v2760 = vpack.c.bf16 %v2740, %v2740
  %v2761 = vpack.c.bf16 %v2743, %v2743
  %v2762 = vpack.c.bf16 %v2745, %v2745
  %s2763 = scalar_lea.vmem %s6, 12
  %v2764 = vld [vmem:[%s2763] sm:$0xf]
  %v2781 = vunpack.c.l.b16 %v2747
  %v2782 = vunpack.c.l.b16 %v2748
  %v2783 = vunpack.c.l.b16 %v2749
  %v2784 = vunpack.c.l.b16 %v2750
  %v2785 = vunpack.c.l.b16 %v2751
  %v2786 = vunpack.c.l.b16 %v2752
  %v2787 = vunpack.c.l.b16 %v2753
  %v2788 = vunpack.c.l.b16 %v2754
  %v2789 = vunpack.c.l.b16 %v2755
  %v2790 = vunpack.c.l.b16 %v2756
  %v2791 = vunpack.c.l.b16 %v2757
  %v2792 = vunpack.c.l.b16 %v2758
  %v2793 = vunpack.c.l.b16 %v2759
  %v2794 = vunpack.c.l.b16 %v2760
  %v2795 = vunpack.c.l.b16 %v2761
  %v2796 = vunpack.c.l.b16 %v2762
  %v2797 = vpack.c.b16 %v2782, %v2781
  %v2798 = vpack.c.b16 %v2784, %v2783
  %v2799 = vpack.c.b16 %v2786, %v2785
  %v2800 = vpack.c.b16 %v2788, %v2787
  %v2801 = vpack.c.b16 %v2790, %v2789
  %v2802 = vpack.c.b16 %v2792, %v2791
  %v2803 = vpack.c.b16 %v2794, %v2793
  %v2804 = vpack.c.b16 %v2796, %v2795
  %v2806 = vsel %vm427, %v2797, 0
  %v2809 = vsel %vm427, %v2798, 0
  %v2812 = vsel %vm427, %v2799, 0
  %v2815 = vsel %vm427, %v2800, 0
  %v2818 = vsel %vm427, %v2801, 0
  %v2821 = vsel %vm427, %v2802, 0
  %v2824 = vsel %vm427, %v2803, 0
  %v2827 = vsel %vm427, %v2804, 0
  %v2830 = vsel %vm1476, %v2764, 0
  %2832 = vmatpush.bf16.msra.mxu0 0
  %2833 = vmatpush.bf16.msra.mxu0 0
  %2834 = vmatpush.bf16.msra.mxu0 0
  %2835 = vmatpush.bf16.msra.mxu0 0
  %2836 = vmatpush.bf16.msra.mxu0 0
  %2837 = vmatpush.bf16.msra.mxu0 0
  %2838 = vmatpush.bf16.msra.mxu0 0
  %2839 = vmatpush.bf16.msra.mxu0 %v2830
  %2840 = vmatmul.bf16.gmra.mxu0 %v2806
  %v2841 = vpop.f32.mrf.mxu0
  %v2842 = vadd.f32 0.0, %v2841
  %v2843 = vpop.f32.mrf.mxu0
  %v2844 = vadd.f32 0.0, %v2843
  %2845 = vmatmul.bf16.gmra.mxu0 %v2809
  %v2846 = vpop.f32.mrf.mxu0
  %v2847 = vadd.f32 0.0, %v2846
  %v2848 = vpop.f32.mrf.mxu0
  %v2849 = vadd.f32 0.0, %v2848
  %2850 = vmatmul.bf16.gmra.mxu0 %v2812
  %v2851 = vpop.f32.mrf.mxu0
  %v2852 = vadd.f32 0.0, %v2851
  %v2853 = vpop.f32.mrf.mxu0
  %v2854 = vadd.f32 0.0, %v2853
  %2855 = vmatmul.bf16.gmra.mxu0 %v2815
  %v2856 = vpop.f32.mrf.mxu0
  %v2857 = vadd.f32 0.0, %v2856
  %v2858 = vpop.f32.mrf.mxu0
  %v2859 = vadd.f32 0.0, %v2858
  %2860 = vmatmul.bf16.gmra.mxu0 %v2818
  %v2861 = vpop.f32.mrf.mxu0
  %v2862 = vadd.f32 0.0, %v2861
  %v2863 = vpop.f32.mrf.mxu0
  %v2864 = vadd.f32 0.0, %v2863
  %2865 = vmatmul.bf16.gmra.mxu0 %v2821
  %v2866 = vpop.f32.mrf.mxu0
  %v2867 = vadd.f32 0.0, %v2866
  %v2868 = vpop.f32.mrf.mxu0
  %v2869 = vadd.f32 0.0, %v2868
  %2870 = vmatmul.bf16.gmra.mxu0 %v2824
  %v2871 = vpop.f32.mrf.mxu0
  %v2872 = vadd.f32 0.0, %v2871
  %v2873 = vpop.f32.mrf.mxu0
  %v2874 = vadd.f32 0.0, %v2873
  %2875 = vmatmul.bf16.gmra.mxu0 %v2827
  %v2876 = vpop.f32.mrf.mxu0
  %v2877 = vadd.f32 0.0, %v2876
  %v2878 = vpop.f32.mrf.mxu0
  %v2879 = vadd.f32 0.0, %v2878
  %2880 = vdwg.mxu0
  %v2881 = vadd.f32 %v2255, %v2842
  %v2882 = vadd.f32 %v2256, %v2844
  %v2883 = vadd.f32 %v2257, %v2847
  %v2884 = vadd.f32 %v2258, %v2849
  %v2885 = vadd.f32 %v2259, %v2852
  %v2886 = vadd.f32 %v2260, %v2854
  %v2887 = vadd.f32 %v2261, %v2857
  %v2888 = vadd.f32 %v2262, %v2859
  %v2889 = vadd.f32 %v2263, %v2862
  %v2890 = vadd.f32 %v2264, %v2864
  %v2891 = vadd.f32 %v2265, %v2867
  %v2892 = vadd.f32 %v2266, %v2869
  %v2893 = vadd.f32 %v2267, %v2872
  %v2894 = vadd.f32 %v2268, %v2874
  %v2895 = vadd.f32 %v2269, %v2877
  %v2896 = vadd.f32 %v2270, %v2879
  %v2897 = vld [vmem:[%s7] sm:$0x1]
  %v2899 = vperm.slane %v2897, 0
  %v2901 = vadd.f32 %v2881, %v2899
  %v2902 = vadd.f32 %v2882, %v2899
  %v2903 = vadd.f32 %v2883, %v2899
  %v2904 = vadd.f32 %v2884, %v2899
  %v2905 = vadd.f32 %v2885, %v2899
  %v2906 = vadd.f32 %v2886, %v2899
  %v2907 = vadd.f32 %v2887, %v2899
  %v2908 = vadd.f32 %v2888, %v2899
  %v2909 = vadd.f32 %v2889, %v2899
  %v2910 = vadd.f32 %v2890, %v2899
  %v2911 = vadd.f32 %v2891, %v2899
  %v2912 = vadd.f32 %v2892, %v2899
  %v2913 = vadd.f32 %v2893, %v2899
  %v2914 = vadd.f32 %v2894, %v2899
  %v2915 = vadd.f32 %v2895, %v2899
  %v2916 = vadd.f32 %v2896, %v2899
  %v2917 = vadd.f32 %v2901, %v265
  %v2918 = vadd.f32 %v2902, %v266
  %v2919 = vadd.f32 %v2903, %v267
  %v2920 = vadd.f32 %v2904, %v268
  %v2921 = vadd.f32 %v2905, %v269
  %v2922 = vadd.f32 %v2906, %v270
  %v2923 = vadd.f32 %v2907, %v271
  %v2924 = vadd.f32 %v2908, %v272
  %v2925 = vadd.f32 %v2909, %v273
  %v2926 = vadd.f32 %v2910, %v274
  %v2927 = vadd.f32 %v2911, %v275
  %v2928 = vadd.f32 %v2912, %v276
  %v2929 = vadd.f32 %v2913, %v277
  %v2930 = vadd.f32 %v2914, %v278
  %v2931 = vadd.f32 %v2915, %v279
  %v2932 = vadd.f32 %v2916, %v280
  %v2933 = vsel %vm309, %v2917, 0.0
  %2934 = vadd.xlane.f32.xlu0 %v2933
  %v2935 = vpop.xlane.xlu0 %2934
  %v2936 = vsel %vm309, %v2918, 0.0
  %2937 = vadd.xlane.f32.xlu0 %v2936
  %v2938 = vpop.xlane.xlu0 %2937
  %v2939 = vsel %vm309, %v2919, 0.0
  %2940 = vadd.xlane.f32.xlu0 %v2939
  %v2941 = vpop.xlane.xlu0 %2940
  %v2942 = vsel %vm309, %v2920, 0.0
  %2943 = vadd.xlane.f32.xlu0 %v2942
  %v2944 = vpop.xlane.xlu0 %2943
  %v2945 = vsel %vm309, %v2921, 0.0
  %2946 = vadd.xlane.f32.xlu0 %v2945
  %v2947 = vpop.xlane.xlu0 %2946
  %v2948 = vsel %vm309, %v2922, 0.0
  %2949 = vadd.xlane.f32.xlu0 %v2948
  %v2950 = vpop.xlane.xlu0 %2949
  %v2951 = vsel %vm309, %v2923, 0.0
  %2952 = vadd.xlane.f32.xlu0 %v2951
  %v2953 = vpop.xlane.xlu0 %2952
  %v2954 = vsel %vm309, %v2924, 0.0
  %2955 = vadd.xlane.f32.xlu0 %v2954
  %v2956 = vpop.xlane.xlu0 %2955
  %v2957 = vsel %vm309, %v2925, 0.0
  %2958 = vadd.xlane.f32.xlu0 %v2957
  %v2959 = vpop.xlane.xlu0 %2958
  %v2960 = vsel %vm309, %v2926, 0.0
  %2961 = vadd.xlane.f32.xlu0 %v2960
  %v2962 = vpop.xlane.xlu0 %2961
  %v2963 = vsel %vm309, %v2927, 0.0
  %2964 = vadd.xlane.f32.xlu0 %v2963
  %v2965 = vpop.xlane.xlu0 %2964
  %v2966 = vsel %vm309, %v2928, 0.0
  %2967 = vadd.xlane.f32.xlu0 %v2966
  %v2968 = vpop.xlane.xlu0 %2967
  %v2969 = vsel %vm309, %v2929, 0.0
  %2970 = vadd.xlane.f32.xlu0 %v2969
  %v2971 = vpop.xlane.xlu0 %2970
  %v2972 = vsel %vm309, %v2930, 0.0
  %2973 = vadd.xlane.f32.xlu0 %v2972
  %v2974 = vpop.xlane.xlu0 %2973
  %v2975 = vsel %vm309, %v2931, 0.0
  %2976 = vadd.xlane.f32.xlu0 %v2975
  %v2977 = vpop.xlane.xlu0 %2976
  %v2978 = vsel %vm309, %v2932, 0.0
  %2979 = vadd.xlane.f32.xlu0 %v2978
  %v2980 = vpop.xlane.xlu0 %2979
  %v2981 = vrcp.pop 32.0
  %v2982 = vmul.f32 32.0, %v2981
  %v2983 = vsub.f32 1.0, %v2982
  %v2984 = vmul.f32 %v2981, %v2983
  %v2985 = vadd.f32 %v2981, %v2984
  %vm2986 = vweird.f32 %v2981
  %v2987 = vsel %vm2986, %v2981, %v2985
  %v2988 = vmul.f32 %v2935, %v2987
  %v2989 = vmul.f32 %v2938, %v2987
  %v2990 = vmul.f32 %v2941, %v2987
  %v2991 = vmul.f32 %v2944, %v2987
  %v2992 = vmul.f32 %v2947, %v2987
  %v2993 = vmul.f32 %v2950, %v2987
  %v2994 = vmul.f32 %v2953, %v2987
  %v2995 = vmul.f32 %v2956, %v2987
  %v2996 = vmul.f32 %v2959, %v2987
  %v2997 = vmul.f32 %v2962, %v2987
  %v2998 = vmul.f32 %v2965, %v2987
  %v2999 = vmul.f32 %v2968, %v2987
  %v3000 = vmul.f32 %v2971, %v2987
  %v3001 = vmul.f32 %v2974, %v2987
  %v3002 = vmul.f32 %v2977, %v2987
  %v3003 = vmul.f32 %v2980, %v2987
  %v3004 = vsub.f32 %v2917, %v2988
  %v3005 = vsub.f32 %v2918, %v2989
  %v3006 = vsub.f32 %v2919, %v2990
  %v3007 = vsub.f32 %v2920, %v2991
  %v3008 = vsub.f32 %v2921, %v2992
  %v3009 = vsub.f32 %v2922, %v2993
  %v3010 = vsub.f32 %v2923, %v2994
  %v3011 = vsub.f32 %v2924, %v2995
  %v3012 = vsub.f32 %v2925, %v2996
  %v3013 = vsub.f32 %v2926, %v2997
  %v3014 = vsub.f32 %v2927, %v2998
  %v3015 = vsub.f32 %v2928, %v2999
  %v3016 = vsub.f32 %v2929, %v3000
  %v3017 = vsub.f32 %v2930, %v3001
  %v3018 = vsub.f32 %v2931, %v3002
  %v3019 = vsub.f32 %v2932, %v3003
  %v3020 = vmul.f32 %v3004, %v3004
  %v3021 = vmul.f32 %v3005, %v3005
  %v3022 = vmul.f32 %v3006, %v3006
  %v3023 = vmul.f32 %v3007, %v3007
  %v3024 = vmul.f32 %v3008, %v3008
  %v3025 = vmul.f32 %v3009, %v3009
  %v3026 = vmul.f32 %v3010, %v3010
  %v3027 = vmul.f32 %v3011, %v3011
  %v3028 = vmul.f32 %v3012, %v3012
  %v3029 = vmul.f32 %v3013, %v3013
  %v3030 = vmul.f32 %v3014, %v3014
  %v3031 = vmul.f32 %v3015, %v3015
  %v3032 = vmul.f32 %v3016, %v3016
  %v3033 = vmul.f32 %v3017, %v3017
  %v3034 = vmul.f32 %v3018, %v3018
  %v3035 = vmul.f32 %v3019, %v3019
  %v3036 = vsel %vm309, %v3020, 0.0
  %3037 = vadd.xlane.f32.xlu0 %v3036
  %v3038 = vpop.xlane.xlu0 %3037
  %v3039 = vsel %vm309, %v3021, 0.0
  %3040 = vadd.xlane.f32.xlu0 %v3039
  %v3041 = vpop.xlane.xlu0 %3040
  %v3042 = vsel %vm309, %v3022, 0.0
  %3043 = vadd.xlane.f32.xlu0 %v3042
  %v3044 = vpop.xlane.xlu0 %3043
  %v3045 = vsel %vm309, %v3023, 0.0
  %3046 = vadd.xlane.f32.xlu0 %v3045
  %v3047 = vpop.xlane.xlu0 %3046
  %v3048 = vsel %vm309, %v3024, 0.0
  %3049 = vadd.xlane.f32.xlu0 %v3048
  %v3050 = vpop.xlane.xlu0 %3049
  %v3051 = vsel %vm309, %v3025, 0.0
  %3052 = vadd.xlane.f32.xlu0 %v3051
  %v3053 = vpop.xlane.xlu0 %3052
  %v3054 = vsel %vm309, %v3026, 0.0
  %3055 = vadd.xlane.f32.xlu0 %v3054
  %v3056 = vpop.xlane.xlu0 %3055
  %v3057 = vsel %vm309, %v3027, 0.0
  %3058 = vadd.xlane.f32.xlu0 %v3057
  %v3059 = vpop.xlane.xlu0 %3058
  %v3060 = vsel %vm309, %v3028, 0.0
  %3061 = vadd.xlane.f32.xlu0 %v3060
  %v3062 = vpop.xlane.xlu0 %3061
  %v3063 = vsel %vm309, %v3029, 0.0
  %3064 = vadd.xlane.f32.xlu0 %v3063
  %v3065 = vpop.xlane.xlu0 %3064
  %v3066 = vsel %vm309, %v3030, 0.0
  %3067 = vadd.xlane.f32.xlu0 %v3066
  %v3068 = vpop.xlane.xlu0 %3067
  %v3069 = vsel %vm309, %v3031, 0.0
  %3070 = vadd.xlane.f32.xlu0 %v3069
  %v3071 = vpop.xlane.xlu0 %3070
  %v3072 = vsel %vm309, %v3032, 0.0
  %3073 = vadd.xlane.f32.xlu0 %v3072
  %v3074 = vpop.xlane.xlu0 %3073
  %v3075 = vsel %vm309, %v3033, 0.0
  %3076 = vadd.xlane.f32.xlu0 %v3075
  %v3077 = vpop.xlane.xlu0 %3076
  %v3078 = vsel %vm309, %v3034, 0.0
  %3079 = vadd.xlane.f32.xlu0 %v3078
  %v3080 = vpop.xlane.xlu0 %3079
  %v3081 = vsel %vm309, %v3035, 0.0
  %3082 = vadd.xlane.f32.xlu0 %v3081
  %v3083 = vpop.xlane.xlu0 %3082
  %v3084 = vmul.f32 %v3038, %v2987
  %v3085 = vmul.f32 %v3041, %v2987
  %v3086 = vmul.f32 %v3044, %v2987
  %v3087 = vmul.f32 %v3047, %v2987
  %v3088 = vmul.f32 %v3050, %v2987
  %v3089 = vmul.f32 %v3053, %v2987
  %v3090 = vmul.f32 %v3056, %v2987
  %v3091 = vmul.f32 %v3059, %v2987
  %v3092 = vmul.f32 %v3062, %v2987
  %v3093 = vmul.f32 %v3065, %v2987
  %v3094 = vmul.f32 %v3068, %v2987
  %v3095 = vmul.f32 %v3071, %v2987
  %v3096 = vmul.f32 %v3074, %v2987
  %v3097 = vmul.f32 %v3077, %v2987
  %v3098 = vmul.f32 %v3080, %v2987
  %v3099 = vmul.f32 %v3083, %v2987
  %v3100 = vadd.f32 %v3084, 1e-05
  %v3101 = vadd.f32 %v3085, 1e-05
  %v3102 = vadd.f32 %v3086, 1e-05
  %v3103 = vadd.f32 %v3087, 1e-05
  %v3104 = vadd.f32 %v3088, 1e-05
  %v3105 = vadd.f32 %v3089, 1e-05
  %v3106 = vadd.f32 %v3090, 1e-05
  %v3107 = vadd.f32 %v3091, 1e-05
  %v3108 = vadd.f32 %v3092, 1e-05
  %v3109 = vadd.f32 %v3093, 1e-05
  %v3110 = vadd.f32 %v3094, 1e-05
  %v3111 = vadd.f32 %v3095, 1e-05
  %v3112 = vadd.f32 %v3096, 1e-05
  %v3113 = vadd.f32 %v3097, 1e-05
  %v3114 = vadd.f32 %v3098, 1e-05
  %v3115 = vadd.f32 %v3099, 1e-05
  %v3116 = vrsqrt.pop %v3100
  %v3117 = vmul.f32 %v3116, %v3100
  %v3118 = vmul.f32 %v3117, %v3116
  %v3119 = vmul.f32 0.5, %v3118
  %v3120 = vsub.f32 1.5, %v3119
  %v3121 = vmul.f32 %v3116, %v3120
  %vm3122 = vweird.f32 %v3100
  %vm3123 = vweird.f32 %v3116
  %vm3124 = vmor %vm3122, %vm3123
  %v3125 = vsel %vm3124, %v3116, %v3121
  %v3126 = vrsqrt.pop %v3101
  %v3127 = vmul.f32 %v3126, %v3101
  %v3128 = vmul.f32 %v3127, %v3126
  %v3129 = vmul.f32 0.5, %v3128
  %v3130 = vsub.f32 1.5, %v3129
  %v3131 = vmul.f32 %v3126, %v3130
  %vm3132 = vweird.f32 %v3101
  %vm3133 = vweird.f32 %v3126
  %vm3134 = vmor %vm3132, %vm3133
  %v3135 = vsel %vm3134, %v3126, %v3131
  %v3136 = vrsqrt.pop %v3102
  %v3137 = vmul.f32 %v3136, %v3102
  %v3138 = vmul.f32 %v3137, %v3136
  %v3139 = vmul.f32 0.5, %v3138
  %v3140 = vsub.f32 1.5, %v3139
  %v3141 = vmul.f32 %v3136, %v3140
  %vm3142 = vweird.f32 %v3102
  %vm3143 = vweird.f32 %v3136
  %vm3144 = vmor %vm3142, %vm3143
  %v3145 = vsel %vm3144, %v3136, %v3141
  %v3146 = vrsqrt.pop %v3103
  %v3147 = vmul.f32 %v3146, %v3103
  %v3148 = vmul.f32 %v3147, %v3146
  %v3149 = vmul.f32 0.5, %v3148
  %v3150 = vsub.f32 1.5, %v3149
  %v3151 = vmul.f32 %v3146, %v3150
  %vm3152 = vweird.f32 %v3103
  %vm3153 = vweird.f32 %v3146
  %vm3154 = vmor %vm3152, %vm3153
  %v3155 = vsel %vm3154, %v3146, %v3151
  %v3156 = vrsqrt.pop %v3104
  %v3157 = vmul.f32 %v3156, %v3104
  %v3158 = vmul.f32 %v3157, %v3156
  %v3159 = vmul.f32 0.5, %v3158
  %v3160 = vsub.f32 1.5, %v3159
  %v3161 = vmul.f32 %v3156, %v3160
  %vm3162 = vweird.f32 %v3104
  %vm3163 = vweird.f32 %v3156
  %vm3164 = vmor %vm3162, %vm3163
  %v3165 = vsel %vm3164, %v3156, %v3161
  %v3166 = vrsqrt.pop %v3105
  %v3167 = vmul.f32 %v3166, %v3105
  %v3168 = vmul.f32 %v3167, %v3166
  %v3169 = vmul.f32 0.5, %v3168
  %v3170 = vsub.f32 1.5, %v3169
  %v3171 = vmul.f32 %v3166, %v3170
  %vm3172 = vweird.f32 %v3105
  %vm3173 = vweird.f32 %v3166
  %vm3174 = vmor %vm3172, %vm3173
  %v3175 = vsel %vm3174, %v3166, %v3171
  %v3176 = vrsqrt.pop %v3106
  %v3177 = vmul.f32 %v3176, %v3106
  %v3178 = vmul.f32 %v3177, %v3176
  %v3179 = vmul.f32 0.5, %v3178
  %v3180 = vsub.f32 1.5, %v3179
  %v3181 = vmul.f32 %v3176, %v3180
  %vm3182 = vweird.f32 %v3106
  %vm3183 = vweird.f32 %v3176
  %vm3184 = vmor %vm3182, %vm3183
  %v3185 = vsel %vm3184, %v3176, %v3181
  %v3186 = vrsqrt.pop %v3107
  %v3187 = vmul.f32 %v3186, %v3107
  %v3188 = vmul.f32 %v3187, %v3186
  %v3189 = vmul.f32 0.5, %v3188
  %v3190 = vsub.f32 1.5, %v3189
  %v3191 = vmul.f32 %v3186, %v3190
  %vm3192 = vweird.f32 %v3107
  %vm3193 = vweird.f32 %v3186
  %vm3194 = vmor %vm3192, %vm3193
  %v3195 = vsel %vm3194, %v3186, %v3191
  %v3196 = vrsqrt.pop %v3108
  %v3197 = vmul.f32 %v3196, %v3108
  %v3198 = vmul.f32 %v3197, %v3196
  %v3199 = vmul.f32 0.5, %v3198
  %v3200 = vsub.f32 1.5, %v3199
  %v3201 = vmul.f32 %v3196, %v3200
  %vm3202 = vweird.f32 %v3108
  %vm3203 = vweird.f32 %v3196
  %vm3204 = vmor %vm3202, %vm3203
  %v3205 = vsel %vm3204, %v3196, %v3201
  %v3206 = vrsqrt.pop %v3109
  %v3207 = vmul.f32 %v3206, %v3109
  %v3208 = vmul.f32 %v3207, %v3206
  %v3209 = vmul.f32 0.5, %v3208
  %v3210 = vsub.f32 1.5, %v3209
  %v3211 = vmul.f32 %v3206, %v3210
  %vm3212 = vweird.f32 %v3109
  %vm3213 = vweird.f32 %v3206
  %vm3214 = vmor %vm3212, %vm3213
  %v3215 = vsel %vm3214, %v3206, %v3211
  %v3216 = vrsqrt.pop %v3110
  %v3217 = vmul.f32 %v3216, %v3110
  %v3218 = vmul.f32 %v3217, %v3216
  %v3219 = vmul.f32 0.5, %v3218
  %v3220 = vsub.f32 1.5, %v3219
  %v3221 = vmul.f32 %v3216, %v3220
  %vm3222 = vweird.f32 %v3110
  %vm3223 = vweird.f32 %v3216
  %vm3224 = vmor %vm3222, %vm3223
  %v3225 = vsel %vm3224, %v3216, %v3221
  %v3226 = vrsqrt.pop %v3111
  %v3227 = vmul.f32 %v3226, %v3111
  %v3228 = vmul.f32 %v3227, %v3226
  %v3229 = vmul.f32 0.5, %v3228
  %v3230 = vsub.f32 1.5, %v3229
  %v3231 = vmul.f32 %v3226, %v3230
  %vm3232 = vweird.f32 %v3111
  %vm3233 = vweird.f32 %v3226
  %vm3234 = vmor %vm3232, %vm3233
  %v3235 = vsel %vm3234, %v3226, %v3231
  %v3236 = vrsqrt.pop %v3112
  %v3237 = vmul.f32 %v3236, %v3112
  %v3238 = vmul.f32 %v3237, %v3236
  %v3239 = vmul.f32 0.5, %v3238
  %v3240 = vsub.f32 1.5, %v3239
  %v3241 = vmul.f32 %v3236, %v3240
  %vm3242 = vweird.f32 %v3112
  %vm3243 = vweird.f32 %v3236
  %vm3244 = vmor %vm3242, %vm3243
  %v3245 = vsel %vm3244, %v3236, %v3241
  %v3246 = vrsqrt.pop %v3113
  %v3247 = vmul.f32 %v3246, %v3113
  %v3248 = vmul.f32 %v3247, %v3246
  %v3249 = vmul.f32 0.5, %v3248
  %v3250 = vsub.f32 1.5, %v3249
  %v3251 = vmul.f32 %v3246, %v3250
  %vm3252 = vweird.f32 %v3113
  %vm3253 = vweird.f32 %v3246
  %vm3254 = vmor %vm3252, %vm3253
  %v3255 = vsel %vm3254, %v3246, %v3251
  %v3256 = vrsqrt.pop %v3114
  %v3257 = vmul.f32 %v3256, %v3114
  %v3258 = vmul.f32 %v3257, %v3256
  %v3259 = vmul.f32 0.5, %v3258
  %v3260 = vsub.f32 1.5, %v3259
  %v3261 = vmul.f32 %v3256, %v3260
  %vm3262 = vweird.f32 %v3114
  %vm3263 = vweird.f32 %v3256
  %vm3264 = vmor %vm3262, %vm3263
  %v3265 = vsel %vm3264, %v3256, %v3261
  %v3266 = vrsqrt.pop %v3115
  %v3267 = vmul.f32 %v3266, %v3115
  %v3268 = vmul.f32 %v3267, %v3266
  %v3269 = vmul.f32 0.5, %v3268
  %v3270 = vsub.f32 1.5, %v3269
  %v3271 = vmul.f32 %v3266, %v3270
  %vm3272 = vweird.f32 %v3115
  %vm3273 = vweird.f32 %v3266
  %vm3274 = vmor %vm3272, %vm3273
  %v3275 = vsel %vm3274, %v3266, %v3271
  %v3276 = vmul.f32 %v3004, %v3125
  %v3277 = vmul.f32 %v3005, %v3135
  %v3278 = vmul.f32 %v3006, %v3145
  %v3279 = vmul.f32 %v3007, %v3155
  %v3280 = vmul.f32 %v3008, %v3165
  %v3281 = vmul.f32 %v3009, %v3175
  %v3282 = vmul.f32 %v3010, %v3185
  %v3283 = vmul.f32 %v3011, %v3195
  %v3284 = vmul.f32 %v3012, %v3205
  %v3285 = vmul.f32 %v3013, %v3215
  %v3286 = vmul.f32 %v3014, %v3225
  %v3287 = vmul.f32 %v3015, %v3235
  %v3288 = vmul.f32 %v3016, %v3245
  %v3289 = vmul.f32 %v3017, %v3255
  %v3290 = vmul.f32 %v3018, %v3265
  %v3291 = vmul.f32 %v3019, %v3275
  %v3292 = vld [vmem:[%s8] sm:$0x1]
  %v3294 = vperm.slane %v3292, 0
  %v3296 = vmul.f32 %v3276, %v3294
  %v3297 = vmul.f32 %v3277, %v3294
  %v3298 = vmul.f32 %v3278, %v3294
  %v3299 = vmul.f32 %v3279, %v3294
  %v3300 = vmul.f32 %v3280, %v3294
  %v3301 = vmul.f32 %v3281, %v3294
  %v3302 = vmul.f32 %v3282, %v3294
  %v3303 = vmul.f32 %v3283, %v3294
  %v3304 = vmul.f32 %v3284, %v3294
  %v3305 = vmul.f32 %v3285, %v3294
  %v3306 = vmul.f32 %v3286, %v3294
  %v3307 = vmul.f32 %v3287, %v3294
  %v3308 = vmul.f32 %v3288, %v3294
  %v3309 = vmul.f32 %v3289, %v3294
  %v3310 = vmul.f32 %v3290, %v3294
  %v3311 = vmul.f32 %v3291, %v3294
  %v3312 = vld [vmem:[%s9] sm:$0x1]
  %v3314 = vperm.slane %v3312, 0
  %v3316 = vadd.f32 %v3296, %v3314
  %v3317 = vadd.f32 %v3297, %v3314
  %v3318 = vadd.f32 %v3298, %v3314
  %v3319 = vadd.f32 %v3299, %v3314
  %v3320 = vadd.f32 %v3300, %v3314
  %v3321 = vadd.f32 %v3301, %v3314
  %v3322 = vadd.f32 %v3302, %v3314
  %v3323 = vadd.f32 %v3303, %v3314
  %v3324 = vadd.f32 %v3304, %v3314
  %v3325 = vadd.f32 %v3305, %v3314
  %v3326 = vadd.f32 %v3306, %v3314
  %v3327 = vadd.f32 %v3307, %v3314
  %v3328 = vadd.f32 %v3308, %v3314
  %v3329 = vadd.f32 %v3309, %v3314
  %v3330 = vadd.f32 %v3310, %v3314
  %v3331 = vadd.f32 %v3311, %v3314
  %v3332 = vpack.c.bf16 %v3317, %v3316
  %v3333 = vpack.c.bf16 %v3319, %v3318
  %v3334 = vpack.c.bf16 %v3321, %v3320
  %v3335 = vpack.c.bf16 %v3323, %v3322
  %v3336 = vpack.c.bf16 %v3325, %v3324
  %v3337 = vpack.c.bf16 %v3327, %v3326
  %v3338 = vpack.c.bf16 %v3329, %v3328
  %v3339 = vpack.c.bf16 %v3331, %v3330
  %v3340 = vld [vmem:[%s10] sm:$0xf]
  %v3341 = vld [vmem:[%s10 + $0x4] sm:$0xf]
  %v3342 = vld [vmem:[%s10 + $0x8] sm:$0xf]
  %v3343 = vld [vmem:[%s10 + $0xc] sm:$0xf]
  %v3344 = vld [vmem:[%s11] sm:$0x1]
  %v3346 = vperm.slane %v3344, 0
  %v3352 = vunpack.c.l.b16 %v3340
  %v3353 = vunpack.c.l.b16 %v3341
  %v3354 = vunpack.c.l.b16 %v3342
  %v3355 = vunpack.c.l.b16 %v3343
  %v3356 = vpack.c.b16 %v3353, %v3352
  %v3357 = vpack.c.b16 %v3355, %v3354
  %v3361 = vsel %vm309, %v3332, 0
  %v3364 = vsel %vm309, %v3333, 0
  %v3367 = vsel %vm309, %v3334, 0
  %v3370 = vsel %vm309, %v3335, 0
  %v3373 = vsel %vm309, %v3336, 0
  %v3376 = vsel %vm309, %v3337, 0
  %v3379 = vsel %vm309, %v3338, 0
  %v3382 = vsel %vm309, %v3339, 0
  %3384 = vmatpush.bf16.msra.mxu0 0
  %3385 = vmatpush.bf16.msra.mxu0 0
  %3386 = vmatpush.bf16.msra.mxu0 0
  %3387 = vmatpush.bf16.msra.mxu0 0
  %3388 = vmatpush.bf16.msra.mxu0 0
  %3389 = vmatpush.bf16.msra.mxu0 0
  %3390 = vmatpush.bf16.msra.mxu0 %v3357
  %3391 = vmatpush.bf16.msra.mxu0 %v3356
  %3392 = vmatmul.bf16.gmra.mxu0 %v3361
  %v3393 = vpop.f32.mrf.mxu0
  %v3394 = vadd.f32 %v3346, %v3393
  %v3395 = vpop.f32.mrf.mxu0
  %v3396 = vadd.f32 %v3346, %v3395
  %3397 = vmatmul.bf16.gmra.mxu0 %v3364
  %v3398 = vpop.f32.mrf.mxu0
  %v3399 = vadd.f32 %v3346, %v3398
  %v3400 = vpop.f32.mrf.mxu0
  %v3401 = vadd.f32 %v3346, %v3400
  %3402 = vmatmul.bf16.gmra.mxu0 %v3367
  %v3403 = vpop.f32.mrf.mxu0
  %v3404 = vadd.f32 %v3346, %v3403
  %v3405 = vpop.f32.mrf.mxu0
  %v3406 = vadd.f32 %v3346, %v3405
  %3407 = vmatmul.bf16.gmra.mxu0 %v3370
  %v3408 = vpop.f32.mrf.mxu0
  %v3409 = vadd.f32 %v3346, %v3408
  %v3410 = vpop.f32.mrf.mxu0
  %v3411 = vadd.f32 %v3346, %v3410
  %3412 = vmatmul.bf16.gmra.mxu0 %v3373
  %v3413 = vpop.f32.mrf.mxu0
  %v3414 = vadd.f32 %v3346, %v3413
  %v3415 = vpop.f32.mrf.mxu0
  %v3416 = vadd.f32 %v3346, %v3415
  %3417 = vmatmul.bf16.gmra.mxu0 %v3376
  %v3418 = vpop.f32.mrf.mxu0
  %v3419 = vadd.f32 %v3346, %v3418
  %v3420 = vpop.f32.mrf.mxu0
  %v3421 = vadd.f32 %v3346, %v3420
  %3422 = vmatmul.bf16.gmra.mxu0 %v3379
  %v3423 = vpop.f32.mrf.mxu0
  %v3424 = vadd.f32 %v3346, %v3423
  %v3425 = vpop.f32.mrf.mxu0
  %v3426 = vadd.f32 %v3346, %v3425
  %3427 = vmatmul.bf16.gmra.mxu0 %v3382
  %v3428 = vpop.f32.mrf.mxu0
  %v3429 = vadd.f32 %v3346, %v3428
  %v3430 = vpop.f32.mrf.mxu0
  %v3431 = vadd.f32 %v3346, %v3430
  %3432 = vdwg.mxu0
  %v3433 = vmax.f32 %v3394, 0.0
  %v3434 = vmax.f32 %v3396, 0.0
  %v3435 = vmax.f32 %v3399, 0.0
  %v3436 = vmax.f32 %v3401, 0.0
  %v3437 = vmax.f32 %v3404, 0.0
  %v3438 = vmax.f32 %v3406, 0.0
  %v3439 = vmax.f32 %v3409, 0.0
  %v3440 = vmax.f32 %v3411, 0.0
  %v3441 = vmax.f32 %v3414, 0.0
  %v3442 = vmax.f32 %v3416, 0.0
  %v3443 = vmax.f32 %v3419, 0.0
  %v3444 = vmax.f32 %v3421, 0.0
  %v3445 = vmax.f32 %v3424, 0.0
  %v3446 = vmax.f32 %v3426, 0.0
  %v3447 = vmax.f32 %v3429, 0.0
  %v3448 = vmax.f32 %v3431, 0.0
  %v3449 = vpack.c.bf16 %v3434, %v3433
  %v3450 = vpack.c.bf16 %v3436, %v3435
  %v3451 = vpack.c.bf16 %v3438, %v3437
  %v3452 = vpack.c.bf16 %v3440, %v3439
  %v3453 = vpack.c.bf16 %v3442, %v3441
  %v3454 = vpack.c.bf16 %v3444, %v3443
  %v3455 = vpack.c.bf16 %v3446, %v3445
  %v3456 = vpack.c.bf16 %v3448, %v3447
  %v3457 = vld [vmem:[%s12] sm:$0xf]
  %v3458 = vld [vmem:[%s12 + $0x4] sm:$0xf]
  %v3459 = vld [vmem:[%s12 + $0x8] sm:$0xf]
  %v3460 = vld [vmem:[%s12 + $0xc] sm:$0xf]
  %v3461 = vld [vmem:[%s12 + $0x10] sm:$0xf]
  %v3462 = vld [vmem:[%s12 + $0x14] sm:$0xf]
  %v3463 = vld [vmem:[%s12 + $0x18] sm:$0xf]
  %v3464 = vld [vmem:[%s12 + $0x1c] sm:$0xf]
  %v3465 = vld [vmem:[%s12 + $0x20] sm:$0xf]
  %v3466 = vld [vmem:[%s12 + $0x24] sm:$0xf]
  %v3467 = vld [vmem:[%s12 + $0x28] sm:$0xf]
  %v3468 = vld [vmem:[%s12 + $0x2c] sm:$0xf]
  %v3469 = vld [vmem:[%s12 + $0x30] sm:$0xf]
  %v3470 = vld [vmem:[%s12 + $0x34] sm:$0xf]
  %v3471 = vld [vmem:[%s12 + $0x38] sm:$0xf]
  %v3472 = vld [vmem:[%s12 + $0x3c] sm:$0xf]
  %v3473 = vld [vmem:[%s13] sm:$0x1]
  %v3475 = vperm.slane %v3473, 0
  %v3493 = vunpack.c.l.b16 %v3457
  %v3494 = vunpack.c.l.b16 %v3458
  %v3495 = vunpack.c.l.b16 %v3459
  %v3496 = vunpack.c.l.b16 %v3460
  %v3497 = vunpack.c.l.b16 %v3461
  %v3498 = vunpack.c.l.b16 %v3462
  %v3499 = vunpack.c.l.b16 %v3463
  %v3500 = vunpack.c.l.b16 %v3464
  %v3501 = vunpack.c.l.b16 %v3465
  %v3502 = vunpack.c.l.b16 %v3466
  %v3503 = vunpack.c.l.b16 %v3467
  %v3504 = vunpack.c.l.b16 %v3468
  %v3505 = vunpack.c.l.b16 %v3469
  %v3506 = vunpack.c.l.b16 %v3470
  %v3507 = vunpack.c.l.b16 %v3471
  %v3508 = vunpack.c.l.b16 %v3472
  %v3509 = vpack.c.b16 %v3494, %v3493
  %v3510 = vpack.c.b16 %v3496, %v3495
  %v3511 = vpack.c.b16 %v3498, %v3497
  %v3512 = vpack.c.b16 %v3500, %v3499
  %v3513 = vpack.c.b16 %v3502, %v3501
  %v3514 = vpack.c.b16 %v3504, %v3503
  %v3515 = vpack.c.b16 %v3506, %v3505
  %v3516 = vpack.c.b16 %v3508, %v3507
  %3525 = vmatpush.bf16.msra.mxu0 %v3516
  %3526 = vmatpush.bf16.msra.mxu0 %v3515
  %3527 = vmatpush.bf16.msra.mxu0 %v3514
  %3528 = vmatpush.bf16.msra.mxu0 %v3513
  %3529 = vmatpush.bf16.msra.mxu0 %v3512
  %3530 = vmatpush.bf16.msra.mxu0 %v3511
  %3531 = vmatpush.bf16.msra.mxu0 %v3510
  %3532 = vmatpush.bf16.msra.mxu0 %v3509
  %3533 = vmatmul.bf16.gmra.mxu0 %v3449
  %v3534 = vpop.f32.mrf.mxu0
  %v3535 = vadd.f32 %v3475, %v3534
  %v3536 = vpop.f32.mrf.mxu0
  %v3537 = vadd.f32 %v3475, %v3536
  %3538 = vmatmul.bf16.gmra.mxu0 %v3450
  %v3539 = vpop.f32.mrf.mxu0
  %v3540 = vadd.f32 %v3475, %v3539
  %v3541 = vpop.f32.mrf.mxu0
  %v3542 = vadd.f32 %v3475, %v3541
  %3543 = vmatmul.bf16.gmra.mxu0 %v3451
  %v3544 = vpop.f32.mrf.mxu0
  %v3545 = vadd.f32 %v3475, %v3544
  %v3546 = vpop.f32.mrf.mxu0
  %v3547 = vadd.f32 %v3475, %v3546
  %3548 = vmatmul.bf16.gmra.mxu0 %v3452
  %v3549 = vpop.f32.mrf.mxu0
  %v3550 = vadd.f32 %v3475, %v3549
  %v3551 = vpop.f32.mrf.mxu0
  %v3552 = vadd.f32 %v3475, %v3551
  %3553 = vmatmul.bf16.gmra.mxu0 %v3453
  %v3554 = vpop.f32.mrf.mxu0
  %v3555 = vadd.f32 %v3475, %v3554
  %v3556 = vpop.f32.mrf.mxu0
  %v3557 = vadd.f32 %v3475, %v3556
  %3558 = vmatmul.bf16.gmra.mxu0 %v3454
  %v3559 = vpop.f32.mrf.mxu0
  %v3560 = vadd.f32 %v3475, %v3559
  %v3561 = vpop.f32.mrf.mxu0
  %v3562 = vadd.f32 %v3475, %v3561
  %3563 = vmatmul.bf16.gmra.mxu0 %v3455
  %v3564 = vpop.f32.mrf.mxu0
  %v3565 = vadd.f32 %v3475, %v3564
  %v3566 = vpop.f32.mrf.mxu0
  %v3567 = vadd.f32 %v3475, %v3566
  %3568 = vmatmul.bf16.gmra.mxu0 %v3456
  %v3569 = vpop.f32.mrf.mxu0
  %v3570 = vadd.f32 %v3475, %v3569
  %v3571 = vpop.f32.mrf.mxu0
  %v3572 = vadd.f32 %v3475, %v3571
  %3573 = vdwg.mxu0
  %v3574 = vadd.f32 %v3535, %v3316
  %v3575 = vadd.f32 %v3537, %v3317
  %v3576 = vadd.f32 %v3540, %v3318
  %v3577 = vadd.f32 %v3542, %v3319
  %v3578 = vadd.f32 %v3545, %v3320
  %v3579 = vadd.f32 %v3547, %v3321
  %v3580 = vadd.f32 %v3550, %v3322
  %v3581 = vadd.f32 %v3552, %v3323
  %v3582 = vadd.f32 %v3555, %v3324
  %v3583 = vadd.f32 %v3557, %v3325
  %v3584 = vadd.f32 %v3560, %v3326
  %v3585 = vadd.f32 %v3562, %v3327
  %v3586 = vadd.f32 %v3565, %v3328
  %v3587 = vadd.f32 %v3567, %v3329
  %v3588 = vadd.f32 %v3570, %v3330
  %v3589 = vadd.f32 %v3572, %v3331
  %v3590 = vsel %vm309, %v3574, 0.0
  %3591 = vadd.xlane.f32.xlu0 %v3590
  %v3592 = vpop.xlane.xlu0 %3591
  %v3593 = vsel %vm309, %v3575, 0.0
  %3594 = vadd.xlane.f32.xlu0 %v3593
  %v3595 = vpop.xlane.xlu0 %3594
  %v3596 = vsel %vm309, %v3576, 0.0
  %3597 = vadd.xlane.f32.xlu0 %v3596
  %v3598 = vpop.xlane.xlu0 %3597
  %v3599 = vsel %vm309, %v3577, 0.0
  %3600 = vadd.xlane.f32.xlu0 %v3599
  %v3601 = vpop.xlane.xlu0 %3600
  %v3602 = vsel %vm309, %v3578, 0.0
  %3603 = vadd.xlane.f32.xlu0 %v3602
  %v3604 = vpop.xlane.xlu0 %3603
  %v3605 = vsel %vm309, %v3579, 0.0
  %3606 = vadd.xlane.f32.xlu0 %v3605
  %v3607 = vpop.xlane.xlu0 %3606
  %v3608 = vsel %vm309, %v3580, 0.0
  %3609 = vadd.xlane.f32.xlu0 %v3608
  %v3610 = vpop.xlane.xlu0 %3609
  %v3611 = vsel %vm309, %v3581, 0.0
  %3612 = vadd.xlane.f32.xlu0 %v3611
  %v3613 = vpop.xlane.xlu0 %3612
  %v3614 = vsel %vm309, %v3582, 0.0
  %3615 = vadd.xlane.f32.xlu0 %v3614
  %v3616 = vpop.xlane.xlu0 %3615
  %v3617 = vsel %vm309, %v3583, 0.0
  %3618 = vadd.xlane.f32.xlu0 %v3617
  %v3619 = vpop.xlane.xlu0 %3618
  %v3620 = vsel %vm309, %v3584, 0.0
  %3621 = vadd.xlane.f32.xlu0 %v3620
  %v3622 = vpop.xlane.xlu0 %3621
  %v3623 = vsel %vm309, %v3585, 0.0
  %3624 = vadd.xlane.f32.xlu0 %v3623
  %v3625 = vpop.xlane.xlu0 %3624
  %v3626 = vsel %vm309, %v3586, 0.0
  %3627 = vadd.xlane.f32.xlu0 %v3626
  %v3628 = vpop.xlane.xlu0 %3627
  %v3629 = vsel %vm309, %v3587, 0.0
  %3630 = vadd.xlane.f32.xlu0 %v3629
  %v3631 = vpop.xlane.xlu0 %3630
  %v3632 = vsel %vm309, %v3588, 0.0
  %3633 = vadd.xlane.f32.xlu0 %v3632
  %v3634 = vpop.xlane.xlu0 %3633
  %v3635 = vsel %vm309, %v3589, 0.0
  %3636 = vadd.xlane.f32.xlu0 %v3635
  %v3637 = vpop.xlane.xlu0 %3636
  %v3638 = vmul.f32 %v3592, %v2987
  %v3639 = vmul.f32 %v3595, %v2987
  %v3640 = vmul.f32 %v3598, %v2987
  %v3641 = vmul.f32 %v3601, %v2987
  %v3642 = vmul.f32 %v3604, %v2987
  %v3643 = vmul.f32 %v3607, %v2987
  %v3644 = vmul.f32 %v3610, %v2987
  %v3645 = vmul.f32 %v3613, %v2987
  %v3646 = vmul.f32 %v3616, %v2987
  %v3647 = vmul.f32 %v3619, %v2987
  %v3648 = vmul.f32 %v3622, %v2987
  %v3649 = vmul.f32 %v3625, %v2987
  %v3650 = vmul.f32 %v3628, %v2987
  %v3651 = vmul.f32 %v3631, %v2987
  %v3652 = vmul.f32 %v3634, %v2987
  %v3653 = vmul.f32 %v3637, %v2987
  %v3654 = vsub.f32 %v3574, %v3638
  %v3655 = vsub.f32 %v3575, %v3639
  %v3656 = vsub.f32 %v3576, %v3640
  %v3657 = vsub.f32 %v3577, %v3641
  %v3658 = vsub.f32 %v3578, %v3642
  %v3659 = vsub.f32 %v3579, %v3643
  %v3660 = vsub.f32 %v3580, %v3644
  %v3661 = vsub.f32 %v3581, %v3645
  %v3662 = vsub.f32 %v3582, %v3646
  %v3663 = vsub.f32 %v3583, %v3647
  %v3664 = vsub.f32 %v3584, %v3648
  %v3665 = vsub.f32 %v3585, %v3649
  %v3666 = vsub.f32 %v3586, %v3650
  %v3667 = vsub.f32 %v3587, %v3651
  %v3668 = vsub.f32 %v3588, %v3652
  %v3669 = vsub.f32 %v3589, %v3653
  %v3670 = vmul.f32 %v3654, %v3654
  %v3671 = vmul.f32 %v3655, %v3655
  %v3672 = vmul.f32 %v3656, %v3656
  %v3673 = vmul.f32 %v3657, %v3657
  %v3674 = vmul.f32 %v3658, %v3658
  %v3675 = vmul.f32 %v3659, %v3659
  %v3676 = vmul.f32 %v3660, %v3660
  %v3677 = vmul.f32 %v3661, %v3661
  %v3678 = vmul.f32 %v3662, %v3662
  %v3679 = vmul.f32 %v3663, %v3663
  %v3680 = vmul.f32 %v3664, %v3664
  %v3681 = vmul.f32 %v3665, %v3665
  %v3682 = vmul.f32 %v3666, %v3666
  %v3683 = vmul.f32 %v3667, %v3667
  %v3684 = vmul.f32 %v3668, %v3668
  %v3685 = vmul.f32 %v3669, %v3669
  %v3686 = vsel %vm309, %v3670, 0.0
  %3687 = vadd.xlane.f32.xlu0 %v3686
  %v3688 = vpop.xlane.xlu0 %3687
  %v3689 = vsel %vm309, %v3671, 0.0
  %3690 = vadd.xlane.f32.xlu0 %v3689
  %v3691 = vpop.xlane.xlu0 %3690
  %v3692 = vsel %vm309, %v3672, 0.0
  %3693 = vadd.xlane.f32.xlu0 %v3692
  %v3694 = vpop.xlane.xlu0 %3693
  %v3695 = vsel %vm309, %v3673, 0.0
  %3696 = vadd.xlane.f32.xlu0 %v3695
  %v3697 = vpop.xlane.xlu0 %3696
  %v3698 = vsel %vm309, %v3674, 0.0
  %3699 = vadd.xlane.f32.xlu0 %v3698
  %v3700 = vpop.xlane.xlu0 %3699
  %v3701 = vsel %vm309, %v3675, 0.0
  %3702 = vadd.xlane.f32.xlu0 %v3701
  %v3703 = vpop.xlane.xlu0 %3702
  %v3704 = vsel %vm309, %v3676, 0.0
  %3705 = vadd.xlane.f32.xlu0 %v3704
  %v3706 = vpop.xlane.xlu0 %3705
  %v3707 = vsel %vm309, %v3677, 0.0
  %3708 = vadd.xlane.f32.xlu0 %v3707
  %v3709 = vpop.xlane.xlu0 %3708
  %v3710 = vsel %vm309, %v3678, 0.0
  %3711 = vadd.xlane.f32.xlu0 %v3710
  %v3712 = vpop.xlane.xlu0 %3711
  %v3713 = vsel %vm309, %v3679, 0.0
  %3714 = vadd.xlane.f32.xlu0 %v3713
  %v3715 = vpop.xlane.xlu0 %3714
  %v3716 = vsel %vm309, %v3680, 0.0
  %3717 = vadd.xlane.f32.xlu0 %v3716
  %v3718 = vpop.xlane.xlu0 %3717
  %v3719 = vsel %vm309, %v3681, 0.0
  %3720 = vadd.xlane.f32.xlu0 %v3719
  %v3721 = vpop.xlane.xlu0 %3720
  %v3722 = vsel %vm309, %v3682, 0.0
  %3723 = vadd.xlane.f32.xlu0 %v3722
  %v3724 = vpop.xlane.xlu0 %3723
  %v3725 = vsel %vm309, %v3683, 0.0
  %3726 = vadd.xlane.f32.xlu0 %v3725
  %v3727 = vpop.xlane.xlu0 %3726
  %v3728 = vsel %vm309, %v3684, 0.0
  %3729 = vadd.xlane.f32.xlu0 %v3728
  %v3730 = vpop.xlane.xlu0 %3729
  %v3731 = vsel %vm309, %v3685, 0.0
  %3732 = vadd.xlane.f32.xlu0 %v3731
  %v3733 = vpop.xlane.xlu0 %3732
  %v3734 = vmul.f32 %v3688, %v2987
  %v3735 = vmul.f32 %v3691, %v2987
  %v3736 = vmul.f32 %v3694, %v2987
  %v3737 = vmul.f32 %v3697, %v2987
  %v3738 = vmul.f32 %v3700, %v2987
  %v3739 = vmul.f32 %v3703, %v2987
  %v3740 = vmul.f32 %v3706, %v2987
  %v3741 = vmul.f32 %v3709, %v2987
  %v3742 = vmul.f32 %v3712, %v2987
  %v3743 = vmul.f32 %v3715, %v2987
  %v3744 = vmul.f32 %v3718, %v2987
  %v3745 = vmul.f32 %v3721, %v2987
  %v3746 = vmul.f32 %v3724, %v2987
  %v3747 = vmul.f32 %v3727, %v2987
  %v3748 = vmul.f32 %v3730, %v2987
  %v3749 = vmul.f32 %v3733, %v2987
  %v3750 = vadd.f32 %v3734, 1e-05
  %v3751 = vadd.f32 %v3735, 1e-05
  %v3752 = vadd.f32 %v3736, 1e-05
  %v3753 = vadd.f32 %v3737, 1e-05
  %v3754 = vadd.f32 %v3738, 1e-05
  %v3755 = vadd.f32 %v3739, 1e-05
  %v3756 = vadd.f32 %v3740, 1e-05
  %v3757 = vadd.f32 %v3741, 1e-05
  %v3758 = vadd.f32 %v3742, 1e-05
  %v3759 = vadd.f32 %v3743, 1e-05
  %v3760 = vadd.f32 %v3744, 1e-05
  %v3761 = vadd.f32 %v3745, 1e-05
  %v3762 = vadd.f32 %v3746, 1e-05
  %v3763 = vadd.f32 %v3747, 1e-05
  %v3764 = vadd.f32 %v3748, 1e-05
  %v3765 = vadd.f32 %v3749, 1e-05
  %v3766 = vrsqrt.pop %v3750
  %v3767 = vmul.f32 %v3766, %v3750
  %v3768 = vmul.f32 %v3767, %v3766
  %v3769 = vmul.f32 0.5, %v3768
  %v3770 = vsub.f32 1.5, %v3769
  %v3771 = vmul.f32 %v3766, %v3770
  %vm3772 = vweird.f32 %v3750
  %vm3773 = vweird.f32 %v3766
  %vm3774 = vmor %vm3772, %vm3773
  %v3775 = vsel %vm3774, %v3766, %v3771
  %v3776 = vrsqrt.pop %v3751
  %v3777 = vmul.f32 %v3776, %v3751
  %v3778 = vmul.f32 %v3777, %v3776
  %v3779 = vmul.f32 0.5, %v3778
  %v3780 = vsub.f32 1.5, %v3779
  %v3781 = vmul.f32 %v3776, %v3780
  %vm3782 = vweird.f32 %v3751
  %vm3783 = vweird.f32 %v3776
  %vm3784 = vmor %vm3782, %vm3783
  %v3785 = vsel %vm3784, %v3776, %v3781
  %v3786 = vrsqrt.pop %v3752
  %v3787 = vmul.f32 %v3786, %v3752
  %v3788 = vmul.f32 %v3787, %v3786
  %v3789 = vmul.f32 0.5, %v3788
  %v3790 = vsub.f32 1.5, %v3789
  %v3791 = vmul.f32 %v3786, %v3790
  %vm3792 = vweird.f32 %v3752
  %vm3793 = vweird.f32 %v3786
  %vm3794 = vmor %vm3792, %vm3793
  %v3795 = vsel %vm3794, %v3786, %v3791
  %v3796 = vrsqrt.pop %v3753
  %v3797 = vmul.f32 %v3796, %v3753
  %v3798 = vmul.f32 %v3797, %v3796
  %v3799 = vmul.f32 0.5, %v3798
  %v3800 = vsub.f32 1.5, %v3799
  %v3801 = vmul.f32 %v3796, %v3800
  %vm3802 = vweird.f32 %v3753
  %vm3803 = vweird.f32 %v3796
  %vm3804 = vmor %vm3802, %vm3803
  %v3805 = vsel %vm3804, %v3796, %v3801
  %v3806 = vrsqrt.pop %v3754
  %v3807 = vmul.f32 %v3806, %v3754
  %v3808 = vmul.f32 %v3807, %v3806
  %v3809 = vmul.f32 0.5, %v3808
  %v3810 = vsub.f32 1.5, %v3809
  %v3811 = vmul.f32 %v3806, %v3810
  %vm3812 = vweird.f32 %v3754
  %vm3813 = vweird.f32 %v3806
  %vm3814 = vmor %vm3812, %vm3813
  %v3815 = vsel %vm3814, %v3806, %v3811
  %v3816 = vrsqrt.pop %v3755
  %v3817 = vmul.f32 %v3816, %v3755
  %v3818 = vmul.f32 %v3817, %v3816
  %v3819 = vmul.f32 0.5, %v3818
  %v3820 = vsub.f32 1.5, %v3819
  %v3821 = vmul.f32 %v3816, %v3820
  %vm3822 = vweird.f32 %v3755
  %vm3823 = vweird.f32 %v3816
  %vm3824 = vmor %vm3822, %vm3823
  %v3825 = vsel %vm3824, %v3816, %v3821
  %v3826 = vrsqrt.pop %v3756
  %v3827 = vmul.f32 %v3826, %v3756
  %v3828 = vmul.f32 %v3827, %v3826
  %v3829 = vmul.f32 0.5, %v3828
  %v3830 = vsub.f32 1.5, %v3829
  %v3831 = vmul.f32 %v3826, %v3830
  %vm3832 = vweird.f32 %v3756
  %vm3833 = vweird.f32 %v3826
  %vm3834 = vmor %vm3832, %vm3833
  %v3835 = vsel %vm3834, %v3826, %v3831
  %v3836 = vrsqrt.pop %v3757
  %v3837 = vmul.f32 %v3836, %v3757
  %v3838 = vmul.f32 %v3837, %v3836
  %v3839 = vmul.f32 0.5, %v3838
  %v3840 = vsub.f32 1.5, %v3839
  %v3841 = vmul.f32 %v3836, %v3840
  %vm3842 = vweird.f32 %v3757
  %vm3843 = vweird.f32 %v3836
  %vm3844 = vmor %vm3842, %vm3843
  %v3845 = vsel %vm3844, %v3836, %v3841
  %v3846 = vrsqrt.pop %v3758
  %v3847 = vmul.f32 %v3846, %v3758
  %v3848 = vmul.f32 %v3847, %v3846
  %v3849 = vmul.f32 0.5, %v3848
  %v3850 = vsub.f32 1.5, %v3849
  %v3851 = vmul.f32 %v3846, %v3850
  %vm3852 = vweird.f32 %v3758
  %vm3853 = vweird.f32 %v3846
  %vm3854 = vmor %vm3852, %vm3853
  %v3855 = vsel %vm3854, %v3846, %v3851
  %v3856 = vrsqrt.pop %v3759
  %v3857 = vmul.f32 %v3856, %v3759
  %v3858 = vmul.f32 %v3857, %v3856
  %v3859 = vmul.f32 0.5, %v3858
  %v3860 = vsub.f32 1.5, %v3859
  %v3861 = vmul.f32 %v3856, %v3860
  %vm3862 = vweird.f32 %v3759
  %vm3863 = vweird.f32 %v3856
  %vm3864 = vmor %vm3862, %vm3863
  %v3865 = vsel %vm3864, %v3856, %v3861
  %v3866 = vrsqrt.pop %v3760
  %v3867 = vmul.f32 %v3866, %v3760
  %v3868 = vmul.f32 %v3867, %v3866
  %v3869 = vmul.f32 0.5, %v3868
  %v3870 = vsub.f32 1.5, %v3869
  %v3871 = vmul.f32 %v3866, %v3870
  %vm3872 = vweird.f32 %v3760
  %vm3873 = vweird.f32 %v3866
  %vm3874 = vmor %vm3872, %vm3873
  %v3875 = vsel %vm3874, %v3866, %v3871
  %v3876 = vrsqrt.pop %v3761
  %v3877 = vmul.f32 %v3876, %v3761
  %v3878 = vmul.f32 %v3877, %v3876
  %v3879 = vmul.f32 0.5, %v3878
  %v3880 = vsub.f32 1.5, %v3879
  %v3881 = vmul.f32 %v3876, %v3880
  %vm3882 = vweird.f32 %v3761
  %vm3883 = vweird.f32 %v3876
  %vm3884 = vmor %vm3882, %vm3883
  %v3885 = vsel %vm3884, %v3876, %v3881
  %v3886 = vrsqrt.pop %v3762
  %v3887 = vmul.f32 %v3886, %v3762
  %v3888 = vmul.f32 %v3887, %v3886
  %v3889 = vmul.f32 0.5, %v3888
  %v3890 = vsub.f32 1.5, %v3889
  %v3891 = vmul.f32 %v3886, %v3890
  %vm3892 = vweird.f32 %v3762
  %vm3893 = vweird.f32 %v3886
  %vm3894 = vmor %vm3892, %vm3893
  %v3895 = vsel %vm3894, %v3886, %v3891
  %v3896 = vrsqrt.pop %v3763
  %v3897 = vmul.f32 %v3896, %v3763
  %v3898 = vmul.f32 %v3897, %v3896
  %v3899 = vmul.f32 0.5, %v3898
  %v3900 = vsub.f32 1.5, %v3899
  %v3901 = vmul.f32 %v3896, %v3900
  %vm3902 = vweird.f32 %v3763
  %vm3903 = vweird.f32 %v3896
  %vm3904 = vmor %vm3902, %vm3903
  %v3905 = vsel %vm3904, %v3896, %v3901
  %v3906 = vrsqrt.pop %v3764
  %v3907 = vmul.f32 %v3906, %v3764
  %v3908 = vmul.f32 %v3907, %v3906
  %v3909 = vmul.f32 0.5, %v3908
  %v3910 = vsub.f32 1.5, %v3909
  %v3911 = vmul.f32 %v3906, %v3910
  %vm3912 = vweird.f32 %v3764
  %vm3913 = vweird.f32 %v3906
  %vm3914 = vmor %vm3912, %vm3913
  %v3915 = vsel %vm3914, %v3906, %v3911
  %v3916 = vrsqrt.pop %v3765
  %v3917 = vmul.f32 %v3916, %v3765
  %v3918 = vmul.f32 %v3917, %v3916
  %v3919 = vmul.f32 0.5, %v3918
  %v3920 = vsub.f32 1.5, %v3919
  %v3921 = vmul.f32 %v3916, %v3920
  %vm3922 = vweird.f32 %v3765
  %vm3923 = vweird.f32 %v3916
  %vm3924 = vmor %vm3922, %vm3923
  %v3925 = vsel %vm3924, %v3916, %v3921
  %v3926 = vmul.f32 %v3654, %v3775
  %v3927 = vmul.f32 %v3655, %v3785
  %v3928 = vmul.f32 %v3656, %v3795
  %v3929 = vmul.f32 %v3657, %v3805
  %v3930 = vmul.f32 %v3658, %v3815
  %v3931 = vmul.f32 %v3659, %v3825
  %v3932 = vmul.f32 %v3660, %v3835
  %v3933 = vmul.f32 %v3661, %v3845
  %v3934 = vmul.f32 %v3662, %v3855
  %v3935 = vmul.f32 %v3663, %v3865
  %v3936 = vmul.f32 %v3664, %v3875
  %v3937 = vmul.f32 %v3665, %v3885
  %v3938 = vmul.f32 %v3666, %v3895
  %v3939 = vmul.f32 %v3667, %v3905
  %v3940 = vmul.f32 %v3668, %v3915
  %v3941 = vmul.f32 %v3669, %v3925
  %v3942 = vld [vmem:[%s14] sm:$0x1]
  %v3944 = vperm.slane %v3942, 0
  %v3946 = vmul.f32 %v3926, %v3944
  %v3947 = vmul.f32 %v3927, %v3944
  %v3948 = vmul.f32 %v3928, %v3944
  %v3949 = vmul.f32 %v3929, %v3944
  %v3950 = vmul.f32 %v3930, %v3944
  %v3951 = vmul.f32 %v3931, %v3944
  %v3952 = vmul.f32 %v3932, %v3944
  %v3953 = vmul.f32 %v3933, %v3944
  %v3954 = vmul.f32 %v3934, %v3944
  %v3955 = vmul.f32 %v3935, %v3944
  %v3956 = vmul.f32 %v3936, %v3944
  %v3957 = vmul.f32 %v3937, %v3944
  %v3958 = vmul.f32 %v3938, %v3944
  %v3959 = vmul.f32 %v3939, %v3944
  %v3960 = vmul.f32 %v3940, %v3944
  %v3961 = vmul.f32 %v3941, %v3944
  %v3962 = vld [vmem:[%s15] sm:$0x1]
  %v3964 = vperm.slane %v3962, 0
  %v3966 = vadd.f32 %v3946, %v3964
  %v3967 = vadd.f32 %v3947, %v3964
  %v3968 = vadd.f32 %v3948, %v3964
  %v3969 = vadd.f32 %v3949, %v3964
  %v3970 = vadd.f32 %v3950, %v3964
  %v3971 = vadd.f32 %v3951, %v3964
  %v3972 = vadd.f32 %v3952, %v3964
  %v3973 = vadd.f32 %v3953, %v3964
  %v3974 = vadd.f32 %v3954, %v3964
  %v3975 = vadd.f32 %v3955, %v3964
  %v3976 = vadd.f32 %v3956, %v3964
  %v3977 = vadd.f32 %v3957, %v3964
  %v3978 = vadd.f32 %v3958, %v3964
  %v3979 = vadd.f32 %v3959, %v3964
  %v3980 = vadd.f32 %v3960, %v3964
  %v3981 = vadd.f32 %v3961, %v3964
  %v3982 = vpack.c.bf16 %v3967, %v3966
  %v3983 = vpack.c.bf16 %v3969, %v3968
  %v3984 = vpack.c.bf16 %v3971, %v3970
  %v3985 = vpack.c.bf16 %v3973, %v3972
  %v3986 = vpack.c.bf16 %v3975, %v3974
  %v3987 = vpack.c.bf16 %v3977, %v3976
  %v3988 = vpack.c.bf16 %v3979, %v3978
  %v3989 = vpack.c.bf16 %v3981, %v3980
  %v3990 = vld [vmem:[%s16] sm:$0xf]
  %v3991 = vld [vmem:[%s16 + $0x4] sm:$0xf]
  %v3992 = vld [vmem:[%s16 + $0x8] sm:$0xf]
  %v3993 = vld [vmem:[%s16 + $0xc] sm:$0xf]
  %v3994 = vld [vmem:[%s17] sm:$0x1]
  %v3996 = vperm.slane %v3994, 0
  %v4002 = vunpack.c.l.b16 %v3990
  %v4003 = vunpack.c.l.b16 %v3991
  %v4004 = vunpack.c.l.b16 %v3992
  %v4005 = vunpack.c.l.b16 %v3993
  %v4006 = vpack.c.b16 %v4003, %v4002
  %v4007 = vpack.c.b16 %v4005, %v4004
  %v4011 = vsel %vm309, %v3982, 0
  %v4014 = vsel %vm309, %v3983, 0
  %v4017 = vsel %vm309, %v3984, 0
  %v4020 = vsel %vm309, %v3985, 0
  %v4023 = vsel %vm309, %v3986, 0
  %v4026 = vsel %vm309, %v3987, 0
  %v4029 = vsel %vm309, %v3988, 0
  %v4032 = vsel %vm309, %v3989, 0
  %4034 = vmatpush.bf16.msra.mxu0 0
  %4035 = vmatpush.bf16.msra.mxu0 0
  %4036 = vmatpush.bf16.msra.mxu0 0
  %4037 = vmatpush.bf16.msra.mxu0 0
  %4038 = vmatpush.bf16.msra.mxu0 0
  %4039 = vmatpush.bf16.msra.mxu0 0
  %4040 = vmatpush.bf16.msra.mxu0 %v4007
  %4041 = vmatpush.bf16.msra.mxu0 %v4006
  %4042 = vmatmul.bf16.gmra.mxu0 %v4011
  %v4043 = vpop.f32.mrf.mxu0
  %v4044 = vadd.f32 %v3996, %v4043
  %v4045 = vpop.f32.mrf.mxu0
  %v4046 = vadd.f32 %v3996, %v4045
  %4047 = vmatmul.bf16.gmra.mxu0 %v4014
  %v4048 = vpop.f32.mrf.mxu0
  %v4049 = vadd.f32 %v3996, %v4048
  %v4050 = vpop.f32.mrf.mxu0
  %v4051 = vadd.f32 %v3996, %v4050
  %4052 = vmatmul.bf16.gmra.mxu0 %v4017
  %v4053 = vpop.f32.mrf.mxu0
  %v4054 = vadd.f32 %v3996, %v4053
  %v4055 = vpop.f32.mrf.mxu0
  %v4056 = vadd.f32 %v3996, %v4055
  %4057 = vmatmul.bf16.gmra.mxu0 %v4020
  %v4058 = vpop.f32.mrf.mxu0
  %v4059 = vadd.f32 %v3996, %v4058
  %v4060 = vpop.f32.mrf.mxu0
  %v4061 = vadd.f32 %v3996, %v4060
  %4062 = vmatmul.bf16.gmra.mxu0 %v4023
  %v4063 = vpop.f32.mrf.mxu0
  %v4064 = vadd.f32 %v3996, %v4063
  %v4065 = vpop.f32.mrf.mxu0
  %v4066 = vadd.f32 %v3996, %v4065
  %4067 = vmatmul.bf16.gmra.mxu0 %v4026
  %v4068 = vpop.f32.mrf.mxu0
  %v4069 = vadd.f32 %v3996, %v4068
  %v4070 = vpop.f32.mrf.mxu0
  %v4071 = vadd.f32 %v3996, %v4070
  %4072 = vmatmul.bf16.gmra.mxu0 %v4029
  %v4073 = vpop.f32.mrf.mxu0
  %v4074 = vadd.f32 %v3996, %v4073
  %v4075 = vpop.f32.mrf.mxu0
  %v4076 = vadd.f32 %v3996, %v4075
  %4077 = vmatmul.bf16.gmra.mxu0 %v4032
  %v4078 = vpop.f32.mrf.mxu0
  %v4079 = vadd.f32 %v3996, %v4078
  %v4080 = vpop.f32.mrf.mxu0
  %v4081 = vadd.f32 %v3996, %v4080
  %4082 = vdwg.mxu0
  %vm4083 = vcmask 31744
  %v4084 = vsel %vm4083, %v4044, -inf
  %v4085 = vsel %vm4083, %v4046, -inf
  %v4086 = vsel %vm4083, %v4049, -inf
  %v4087 = vmax.f32 %v4084, %v4086
  %v4088 = vsel %vm4083, %v4051, -inf
  %v4089 = vmax.f32 %v4085, %v4088
  %v4090 = vsel %vm4083, %v4054, -inf
  %v4091 = vmax.f32 %v4087, %v4090
  %v4092 = vsel %vm4083, %v4056, -inf
  %v4093 = vmax.f32 %v4089, %v4092
  %v4094 = vsel %vm4083, %v4059, -inf
  %v4095 = vmax.f32 %v4091, %v4094
  %v4096 = vsel %vm4083, %v4061, -inf
  %v4097 = vmax.f32 %v4093, %v4096
  %v4098 = vmax.f32 %v4095, %v4097
  %v4099 = vrot.slane %v4098, 4
  %v4100 = vmax.f32 %v4098, %v4099
  %v4101 = vrot.slane %v4100, 2
  %v4102 = vmax.f32 %v4100, %v4101
  %v4103 = vrot.slane %v4102, 1
  %v4104 = vmax.f32 %v4102, %v4103
  %v4105 = vsel %vm4083, %v4064, -inf
  %v4106 = vsel %vm4083, %v4066, -inf
  %v4107 = vsel %vm4083, %v4069, -inf
  %v4108 = vmax.f32 %v4105, %v4107
  %v4109 = vsel %vm4083, %v4071, -inf
  %v4110 = vmax.f32 %v4106, %v4109
  %v4111 = vsel %vm4083, %v4074, -inf
  %v4112 = vmax.f32 %v4108, %v4111
  %v4113 = vsel %vm4083, %v4076, -inf
  %v4114 = vmax.f32 %v4110, %v4113
  %v4115 = vsel %vm4083, %v4079, -inf
  %v4116 = vmax.f32 %v4112, %v4115
  %v4117 = vsel %vm4083, %v4081, -inf
  %v4118 = vmax.f32 %v4114, %v4117
  %v4119 = vmax.f32 %v4116, %v4118
  %v4120 = vrot.slane %v4119, 4
  %v4121 = vmax.f32 %v4119, %v4120
  %v4122 = vrot.slane %v4121, 2
  %v4123 = vmax.f32 %v4121, %v4122
  %v4124 = vrot.slane %v4123, 1
  %v4125 = vmax.f32 %v4123, %v4124
  %v4126 = vsub.f32 %v4044, %v4104
  %v4127 = vsub.f32 %v4046, %v4104
  %v4128 = vsub.f32 %v4049, %v4104
  %v4129 = vsub.f32 %v4051, %v4104
  %v4130 = vsub.f32 %v4054, %v4104
  %v4131 = vsub.f32 %v4056, %v4104
  %v4132 = vsub.f32 %v4059, %v4104
  %v4133 = vsub.f32 %v4061, %v4104
  %v4134 = vsub.f32 %v4064, %v4125
  %v4135 = vsub.f32 %v4066, %v4125
  %v4136 = vsub.f32 %v4069, %v4125
  %v4137 = vsub.f32 %v4071, %v4125
  %v4138 = vsub.f32 %v4074, %v4125
  %v4139 = vsub.f32 %v4076, %v4125
  %v4140 = vsub.f32 %v4079, %v4125
  %v4141 = vsub.f32 %v4081, %v4125
  %v4142 = vmul.f32 %v4126, 1.442695
  %v4143 = vpow.pop %v4142
  %v4144 = vmul.f32 %v4127, 1.442695
  %v4145 = vpow.pop %v4144
  %v4146 = vmul.f32 %v4128, 1.442695
  %v4147 = vpow.pop %v4146
  %v4148 = vmul.f32 %v4129, 1.442695
  %v4149 = vpow.pop %v4148
  %v4150 = vmul.f32 %v4130, 1.442695
  %v4151 = vpow.pop %v4150
  %v4152 = vmul.f32 %v4131, 1.442695
  %v4153 = vpow.pop %v4152
  %v4154 = vmul.f32 %v4132, 1.442695
  %v4155 = vpow.pop %v4154
  %v4156 = vmul.f32 %v4133, 1.442695
  %v4157 = vpow.pop %v4156
  %v4158 = vmul.f32 %v4134, 1.442695
  %v4159 = vpow.pop %v4158
  %v4160 = vmul.f32 %v4135, 1.442695
  %v4161 = vpow.pop %v4160
  %v4162 = vmul.f32 %v4136, 1.442695
  %v4163 = vpow.pop %v4162
  %v4164 = vmul.f32 %v4137, 1.442695
  %v4165 = vpow.pop %v4164
  %v4166 = vmul.f32 %v4138, 1.442695
  %v4167 = vpow.pop %v4166
  %v4168 = vmul.f32 %v4139, 1.442695
  %v4169 = vpow.pop %v4168
  %v4170 = vmul.f32 %v4140, 1.442695
  %v4171 = vpow.pop %v4170
  %v4172 = vmul.f32 %v4141, 1.442695
  %v4173 = vpow.pop %v4172
  %v4174 = vsel %vm4083, %v4143, 0.0
  %v4175 = vsel %vm4083, %v4145, 0.0
  %v4176 = vadd.f32 %v4174, %v4175
  %v4177 = vsel %vm4083, %v4147, 0.0
  %v4178 = vadd.f32 %v4176, %v4177
  %v4179 = vsel %vm4083, %v4149, 0.0
  %v4180 = vadd.f32 %v4178, %v4179
  %v4181 = vsel %vm4083, %v4151, 0.0
  %v4182 = vadd.f32 %v4180, %v4181
  %v4183 = vsel %vm4083, %v4153, 0.0
  %v4184 = vadd.f32 %v4182, %v4183
  %v4185 = vsel %vm4083, %v4155, 0.0
  %v4186 = vadd.f32 %v4184, %v4185
  %v4187 = vsel %vm4083, %v4157, 0.0
  %v4188 = vadd.f32 %v4186, %v4187
  %v4189 = vrot.slane %v4188, 4
  %v4190 = vadd.f32 %v4188, %v4189
  %v4191 = vrot.slane %v4190, 2
  %v4192 = vadd.f32 %v4190, %v4191
  %v4193 = vrot.slane %v4192, 1
  %v4194 = vadd.f32 %v4192, %v4193
  %v4195 = vsel %vm4083, %v4159, 0.0
  %v4196 = vsel %vm4083, %v4161, 0.0
  %v4197 = vadd.f32 %v4195, %v4196
  %v4198 = vsel %vm4083, %v4163, 0.0
  %v4199 = vadd.f32 %v4197, %v4198
  %v4200 = vsel %vm4083, %v4165, 0.0
  %v4201 = vadd.f32 %v4199, %v4200
  %v4202 = vsel %vm4083, %v4167, 0.0
  %v4203 = vadd.f32 %v4201, %v4202
  %v4204 = vsel %vm4083, %v4169, 0.0
  %v4205 = vadd.f32 %v4203, %v4204
  %v4206 = vsel %vm4083, %v4171, 0.0
  %v4207 = vadd.f32 %v4205, %v4206
  %v4208 = vsel %vm4083, %v4173, 0.0
  %v4209 = vadd.f32 %v4207, %v4208
  %v4210 = vrot.slane %v4209, 4
  %v4211 = vadd.f32 %v4209, %v4210
  %v4212 = vrot.slane %v4211, 2
  %v4213 = vadd.f32 %v4211, %v4212
  %v4214 = vrot.slane %v4213, 1
  %v4215 = vadd.f32 %v4213, %v4214
  %v4216 = vrcp.pop %v4194
  %v4217 = vmul.f32 %v4194, %v4216
  %v4218 = vsub.f32 1.0, %v4217
  %v4219 = vmul.f32 %v4216, %v4218
  %v4220 = vadd.f32 %v4216, %v4219
  %vm4221 = vweird.f32 %v4194
  %vm4222 = vweird.f32 %v4216
  %vm4223 = vmor %vm4221, %vm4222
  %v4224 = vsel %vm4223, %v4216, %v4220
  %v4225 = vand.u32 2147483647, %v4194
  %vm4226 = vcmp.eq.f32.partialorder %v4225, 8.507059e+37
  %v4227 = vand.u32 %v4194, 2147483648
  %v4228 = vor.u32 1.1754944e-38, %v4227
  %v4229 = vsel %vm4226, %v4228, %v4224
  %v4230 = vrcp.pop %v4215
  %v4231 = vmul.f32 %v4215, %v4230
  %v4232 = vsub.f32 1.0, %v4231
  %v4233 = vmul.f32 %v4230, %v4232
  %v4234 = vadd.f32 %v4230, %v4233
  %vm4235 = vweird.f32 %v4215
  %vm4236 = vweird.f32 %v4230
  %vm4237 = vmor %vm4235, %vm4236
  %v4238 = vsel %vm4237, %v4230, %v4234
  %v4239 = vand.u32 2147483647, %v4215
  %vm4240 = vcmp.eq.f32.partialorder %v4239, 8.507059e+37
  %v4241 = vand.u32 %v4215, 2147483648
  %v4242 = vor.u32 1.1754944e-38, %v4241
  %v4243 = vsel %vm4240, %v4242, %v4238
  %v4244 = vmul.f32 %v4143, %v4229
  %v4245 = vmul.f32 %v4145, %v4229
  %v4246 = vmul.f32 %v4147, %v4229
  %v4247 = vmul.f32 %v4149, %v4229
  %v4248 = vmul.f32 %v4151, %v4229
  %v4249 = vmul.f32 %v4153, %v4229
  %v4250 = vmul.f32 %v4155, %v4229
  %v4251 = vmul.f32 %v4157, %v4229
  %v4252 = vmul.f32 %v4159, %v4243
  %v4253 = vmul.f32 %v4161, %v4243
  %v4254 = vmul.f32 %v4163, %v4243
  %v4255 = vmul.f32 %v4165, %v4243
  %v4256 = vmul.f32 %v4167, %v4243
  %v4257 = vmul.f32 %v4169, %v4243
  %v4258 = vmul.f32 %v4171, %v4243
  %v4259 = vmul.f32 %v4173, %v4243
  %4260 = vst.msk [vmem:[%s18] sm:$0xff] %vm4083, %v4244
  %4261 = vst.msk [vmem:[%s18 + $0x8] sm:$0xff] %vm4083, %v4245
  %4262 = vst.msk [vmem:[%s18 + $0x10] sm:$0xff] %vm4083, %v4246
  %4263 = vst.msk [vmem:[%s18 + $0x18] sm:$0xff] %vm4083, %v4247
  %4264 = vst.msk [vmem:[%s18 + $0x20] sm:$0xff] %vm4083, %v4248
  %4265 = vst.msk [vmem:[%s18 + $0x28] sm:$0xff] %vm4083, %v4249
  %4266 = vst.msk [vmem:[%s18 + $0x30] sm:$0xff] %vm4083, %v4250
  %4267 = vst.msk [vmem:[%s18 + $0x38] sm:$0xff] %vm4083, %v4251
  %4268 = vst.msk [vmem:[%s18 + $0x40] sm:$0xff] %vm4083, %v4252
  %4269 = vst.msk [vmem:[%s18 + $0x48] sm:$0xff] %vm4083, %v4253
  %4270 = vst.msk [vmem:[%s18 + $0x50] sm:$0xff] %vm4083, %v4254
  %4271 = vst.msk [vmem:[%s18 + $0x58] sm:$0xff] %vm4083, %v4255
  %4272 = vst.msk [vmem:[%s18 + $0x60] sm:$0xff] %vm4083, %v4256
  %4273 = vst.msk [vmem:[%s18 + $0x68] sm:$0xff] %vm4083, %v4257
  %4274 = vst.msk [vmem:[%s18 + $0x70] sm:$0xff] %vm4083, %v4258
  %4275 = vst.msk [vmem:[%s18 + $0x78] sm:$0xff] %vm4083, %v4259
  // Predicated region
  $region74: #{model_forward.1} parent=0 // pred_check
    _
  $region75: #{model_forward.1} parent=0 // pred_check_branch
    %4277 = sbr.rel (0) target = $region77
  $region76: #{model_forward.1} parent=0 // pred_region
    _
  $region77: #{model_forward.1} parent=0 // pred_fallthru
    _
  // Predicated region
  $region78: #{model_forward.1} parent=0 // pred_check
    _
  $region79: #{model_forward.1} parent=0 // pred_check_branch
    %4279 = sbr.rel (0) target = $region81
  $region80: #{model_forward.1} parent=0 // pred_region
    _
  $region81: #{model_forward.1} parent=0 // pred_fallthru
    _

</llo_original>
